<compile_context>
chip_gen: v7x
topology: tpu7x:2x2x1
jax: 0.10.0
libtpu: 0.0.40
codegen_flags: <defaults>
</compile_context>

<pallas_src>
import functools

import jax
import jax.numpy as jnp
from jax import lax
from jax.experimental import pallas as pl
from jax.experimental.pallas import tpu as pltpu

BN_EPS = 1e-5      # nn.BatchNorm1d default
NORM_EPS = 1e-12   # F.normalize default


# ---------------- in-kernel helpers (traced inside the Pallas body) ----------------

def _eye(n, dtype=jnp.float32):
    r = lax.broadcasted_iota(jnp.int32, (n, n), 0)
    c = lax.broadcasted_iota(jnp.int32, (n, n), 1)
    return (r == c).astype(dtype)


def _bn_train(h):
    """BatchNorm1d, training mode, default affine (gamma=1, beta=0); two-pass variance."""
    mean = jnp.mean(h, axis=0, keepdims=True)
    d = h - mean
    var = jnp.mean(d * d, axis=0, keepdims=True)
    return d * lax.rsqrt(var + BN_EPS)


def _l2_normalize(h):
    """F.normalize(h, dim=1) == h / max(||h||_2, eps), via a single EUP rsqrt."""
    ss = jnp.sum(h * h, axis=1, keepdims=True)
    return h * lax.rsqrt(jnp.maximum(ss, NORM_EPS * NORM_EPS))


def _mlog_batched(Qs, I_n, order):
    """Order-`order` Taylor log(Q) around I (MEC) for a stacked (b, n, n) operand."""
    mult = Qs - I_n                       # broadcast over the batch dim
    summand = mult
    series = jnp.zeros_like(Qs)
    for i in range(1, order + 1):
        coef = (1.0 / float(i)) if (i % 2 == 1) else (-1.0 / float(i))
        series = series + coef * summand
        if i < order:                     # last power is unused -> skip its matmul
            summand = jnp.einsum('bij,bjk->bik', summand, mult,
                                 preferred_element_type=jnp.float32)
    return series


# ---------------- fused kernel: K-tiled backbone GEMM + heads + MCE loss ----------------

def matrixssl_kernel(x1_ref, x2_ref, wbt_ref, bb_ref, wheads_ref, wpred_ext_ref,
                     loss_ref, acc1_ref, acc2_ref,
                     *, K, tk, emb, gamma, lamda=1.0, mu=1.0, order=4):
    k = pl.program_id(0)

    @pl.when(k == 0)
    def _init():
        acc1_ref[...] = jnp.zeros_like(acc1_ref)
        acc2_ref[...] = jnp.zeros_like(acc2_ref)

    # ---- streamed backbone GEMM: x tiles read as f32, cast to bf16 here; wbT is a
    #      lane-dense (emb, tk) bf16 tile contracted over its last dim (no transpose). ----
    x1 = x1_ref[...]
    x2 = x2_ref[...]
    if K % tk != 0:
        # Ragged last K tile: zero the out-of-range x columns (the matching wbT columns
        # were zero-padded in the wrapper, so those products contribute nothing).
        col = k * tk + lax.broadcasted_iota(jnp.int32, x1.shape, 1)
        valid = col < K
        x1 = jnp.where(valid, x1, 0.0)
        x2 = jnp.where(valid, x2, 0.0)
    wbt = wbt_ref[...]                                     # (emb, tk) bf16
    dn = (((1,), (1,)), ((), ()))                          # contract the K-tile axis of both
    acc1_ref[...] += lax.dot_general(x1.astype(jnp.bfloat16), wbt, dn,
                                     preferred_element_type=jnp.float32)
    acc2_ref[...] += lax.dot_general(x2.astype(jnp.bfloat16), wbt, dn,
                                     preferred_element_type=jnp.float32)

    # ---- epilogue: heads (f32) + MCE loss, entirely in VMEM/vregs; z/p never hit HBM ----
    @pl.when(k == pl.num_programs(0) - 1)
    def _epilogue():
        bb = bb_ref[...]                  # (1, emb)     backbone bias
        wheads = wheads_ref[...]          # (emb, 2*emb) = [wtp | wop]
        wpred_ext = wpred_ext_ref[...]    # (2*emb, emb) = [0 ; wpred]

        def heads(e):
            # One MXU call for both projectors; joint BN == per-head BN (per-feature stats).
            h = _bn_train(jnp.dot(e, wheads, preferred_element_type=jnp.float32))  # (B, 2*emb)
            p = h[:, :emb]                                       # target:  BN(e @ wtp)
            # predictor consumes the online half via the zero-extended weight (no lane-offset slice)
            z = _bn_train(jnp.dot(h, wpred_ext, preferred_element_type=jnp.float32))
            return z, p

        z1, p1 = heads(acc1_ref[...] + bb)
        z2, p2 = heads(acc2_ref[...] + bb)

        m = z1.shape[0]
        inv_m = 1.0 / float(m)
        I_n = _eye(emb, jnp.float32)

        # L2-normalize each embedding exactly once.
        p1n = _l2_normalize(p1)
        p2n = _l2_normalize(p2)
        z1n = _l2_normalize(z1)
        z2n = _l2_normalize(z2)

        # Mean-center exactly once (J_m @ x == x - mean over the batch).
        p1c = p1n - jnp.mean(p1n, axis=0, keepdims=True)
        p2c = p2n - jnp.mean(p2n, axis=0, keepdims=True)
        z1c = z1n - jnp.mean(z1n, axis=0, keepdims=True)
        z2c = z2n - jnp.mean(z2n, axis=0, keepdims=True)

        # Transpose each normalized tensor once; the six correlation products are plain NN matmuls.
        p1T = p1n.T
        p2T = p2n.T
        z1T = z1n.T
        z2T = z2n.T

        def corr(aT, bc):                 # (1/m) * a^T J_m b
            return jnp.dot(aT, bc, preferred_element_type=jnp.float32) * inv_m

        Q_a = corr(p2T, z1c) + mu * I_n   # mce(p2, z1, correlation=True)
        Q_b = corr(p1T, z2c) + mu * I_n   # mce(p1, z2, correlation=True)
        P_a = corr(p2T, p2c) + mu * I_n   # mce(p2, z1, correlation=False): P
        Q_c = corr(z1T, z1c) + mu * I_n   #                                 Q
        P_b = corr(p1T, p1c) + mu * I_n   # mce(p1, z2, correlation=False): P
        Q_d = corr(z2T, z2c) + mu * I_n   #                                 Q

        # Four independent Taylor series -> one batched series (hides MXU drain latency).
        logs = _mlog_batched(jnp.stack([Q_a, Q_b, Q_c, Q_d]), I_n, order)

        # correlation=True:  P = lamda*I          -> trace(-P log Q) = -lamda * trace(log Q)
        corr_terms = -lamda * (jnp.sum(logs[0] * I_n) + jnp.sum(logs[1] * I_n))
        # correlation=False: P, log(Q) symmetric  -> trace(-P log Q) = -sum(P * log Q)
        auto_terms = -(jnp.sum(P_a * logs[2]) + jnp.sum(P_b * logs[3]))

        loss_ref[0] = (corr_terms + gamma * auto_terms) * 0.5


# ---------------- wrapper ----------------

def _vmem_budget_bytes():
    """Per-generation scoped-VMEM budget: ~3/4 of physical, capped at 96 MiB.
    -> ~48 MiB on v7x (64 MiB physical), 96 MiB on v5e/v6e (128 MiB physical)."""
    try:
        phys = int(pltpu.get_tpu_info().vmem_capacity_bytes)
    except Exception:
        phys = 64 * 1024 * 1024   # conservative fallback (v7x-sized)
    return min(96 * 1024 * 1024, (phys * 3) // 4)


def matrixssl_forward(x1, x2, params, gamma=1.0):
    """x1, x2: (B, C, H, W).  Returns {'loss': scalar, 'd_dict': []}."""
    B = x1.shape[0]
    x1f = x1.reshape(B, -1).astype(jnp.float32)    # nn.Flatten; stays f32, no extra HBM pass
    x2f = x2.reshape(B, -1).astype(jnp.float32)
    K = x1f.shape[1]
    emb = params["wop"].shape[0]

    vmem_budget = _vmem_budget_bytes()

    # K-tile width from the VMEM budget: double-buffered x1 + x2 (f32) + wbT (bf16)
    # per K column, plus a fixed reserve for accumulators / head weights / scratch.
    reserve = 4 * 1024 * 1024
    per_col_bytes = 2 * (2 * B * 4 + emb * 2)
    tk_cap = max(128, ((vmem_budget - reserve) // per_col_bytes) // 128 * 128)
    kpad128 = ((K + 127) // 128) * 128
    tk = min(tk_cap, kpad128)
    num_k = -(-K // tk)                   # ceil
    kpad = num_k * tk

    # One-time (small) weight prep:
    #   * backbone weight streamed TRANSPOSED as (emb, Kpad) bf16 -> lane-dense DMA tiles
    #   * [wtp | wop] concatenated so the epilogue does one MXU call per view
    #   * wpred zero-extended to (2*emb, emb) so the predictor picks the online half
    wbt = jnp.transpose(params["wb"]).astype(jnp.bfloat16)              # (emb, K)
    if kpad != K:
        wbt = jnp.pad(wbt, ((0, 0), (0, kpad - K)))                     # zero cols -> no effect
    bb = params["bb"].astype(jnp.float32)                               # (1, emb)
    wheads = jnp.concatenate([params["wtp"], params["wop"]], axis=1).astype(jnp.float32)
    wpred_ext = jnp.concatenate(
        [jnp.zeros((emb, emb), jnp.float32), params["wpred"].astype(jnp.float32)], axis=0)

    kernel = functools.partial(matrixssl_kernel, K=K, tk=tk, emb=emb, gamma=gamma)

    loss = pl.pallas_call(
        kernel,
        out_shape=jax.ShapeDtypeStruct((1,), jnp.float32),
        grid_spec=pltpu.PrefetchScalarGridSpec(
            num_scalar_prefetch=0,
            grid=(num_k,),
            in_specs=[
                pl.BlockSpec((B, tk), lambda k: (0, k)),          # x1 K-tile (f32)
                pl.BlockSpec((B, tk), lambda k: (0, k)),          # x2 K-tile (f32)
                pl.BlockSpec((emb, tk), lambda k: (0, k)),        # wbT K-tile (bf16, lane-dense)
                pl.BlockSpec((1, emb), lambda k: (0, 0)),         # bb
                pl.BlockSpec((emb, 2 * emb), lambda k: (0, 0)),   # [wtp | wop]
                pl.BlockSpec((2 * emb, emb), lambda k: (0, 0)),   # [0 ; wpred]
            ],
            out_specs=pl.BlockSpec(memory_space=pltpu.MemorySpace.SMEM),
            scratch_shapes=[pltpu.VMEM((B, emb), jnp.float32),    # view-1 f32 accumulator
                            pltpu.VMEM((B, emb), jnp.float32)],   # view-2 f32 accumulator
        ),
        compiler_params=pltpu.CompilerParams(
            dimension_semantics=("arbitrary",),
            vmem_limit_bytes=vmem_budget,
        ),
    )(x1f, x2f, wbt, bb, wheads, wpred_ext)

    return {"loss": loss[0], "d_dict": []}


def init_params(key, in_features, emb_dim):
    """Deterministic synthetic parameters (weights stored as (in, out))."""
    k = jax.random.split(key, 5)
    s_in = 1.0 / jnp.sqrt(in_features)
    s_e = 1.0 / jnp.sqrt(emb_dim)
    return {
        "wb":    jax.random.uniform(k[0], (in_features, emb_dim), jnp.float32, -s_in, s_in),
        "bb":    jax.random.uniform(k[1], (1, emb_dim), jnp.float32, -s_in, s_in),
        "wop":   jax.random.uniform(k[2], (emb_dim, emb_dim), jnp.float32, -s_e, s_e),
        "wpred": jax.random.uniform(k[3], (emb_dim, emb_dim), jnp.float32, -s_e, s_e),
        "wtp":   jax.random.uniform(k[4], (emb_dim, emb_dim), jnp.float32, -s_e, s_e),
    }


if __name__ == "__main__":
    # TODO(synk): target-network EMA (momentum) update and the unused
    # mean_norm_diff / norm_mean_diff / uniformity loss branches are training-time /
    # dead-code paths for this forward and are not implemented.
    B, C, H, W = 8, 4, 16, 16      # flatten -> K = 1024
    emb_dim = 32

    key = jax.random.PRNGKey(0)
    kx1, kx2, kp = jax.random.split(key, 3)
    x1 = jax.random.normal(kx1, (B, C, H, W), jnp.float32)
    x2 = jax.random.normal(kx2, (B, C, H, W), jnp.float32)
    params = init_params(kp, C * H * W, emb_dim)

    out = matrixssl_forward(x1, x2, params, gamma=1.0)
    loss = jax.block_until_ready(out["loss"])
    assert jnp.isfinite(loss), f"non-finite loss: {loss}"
    print("KERNEL_OK")
</pallas_src>

<mosaic_0001>
module attributes {stable_mosaic.version = 11 : i64} {
  func.func @matrixssl_kernel(%arg0: i32, %arg1: memref<8x1024xf32, #tpu.memory_space<vmem>>, %arg2: memref<8x1024xf32, #tpu.memory_space<vmem>>, %arg3: memref<32x1024xbf16, #tpu.memory_space<vmem>>, %arg4: memref<1x32xf32, #tpu.memory_space<vmem>>, %arg5: memref<32x64xf32, #tpu.memory_space<vmem>>, %arg6: memref<64x32xf32, #tpu.memory_space<vmem>>, %arg7: memref<1xf32, #tpu.memory_space<smem>>, %arg8: memref<8x32xf32, #tpu.memory_space<vmem>>, %arg9: memref<8x32xf32, #tpu.memory_space<vmem>>) attributes {dimension_semantics = [#tpu.dimension_semantics<arbitrary>], iteration_bounds = array<i64: 1>, scalar_prefetch = 0 : i64, scratch_operands = 2 : i64, tpu.core_type = #tpu.core_type<tc>, window_params = [{transform_indices = @transform_0, window_bounds = array<i64: 8, 1024>}, {transform_indices = @transform_1, window_bounds = array<i64: 8, 1024>}, {transform_indices = @transform_2, window_bounds = array<i64: 32, 1024>}, {pipeline_mode = #tpu.pipeline_mode<synchronous>, transform_indices = @transform_3, window_bounds = array<i64: 1, 32>}, {pipeline_mode = #tpu.pipeline_mode<synchronous>, transform_indices = @transform_4, window_bounds = array<i64: 32, 64>}, {pipeline_mode = #tpu.pipeline_mode<synchronous>, transform_indices = @transform_5, window_bounds = array<i64: 64, 32>}, {transform_indices = @transform_6, window_bounds = array<i64: 1>}]} {
    %c0_i32 = arith.constant 0 : i32
    %0 = arith.cmpi eq, %arg0, %c0_i32 : i32
    %1 = arith.extui %0 : i1 to i32
    %c0_i32_0 = arith.constant 0 : i32
    %2 = arith.cmpi ne, %1, %c0_i32_0 : i32
    scf.if %2 {
      %cst_17 = arith.constant 0.000000e+00 : f32
      %19 = vector.broadcast %cst_17 : f32 to vector<8x32xf32>
      %c0_18 = arith.constant 0 : index
      %c0_19 = arith.constant 0 : index
      %20 = vector.load %arg8[%c0_18, %c0_19] : memref<8x32xf32, #tpu.memory_space<vmem>>, vector<8x32xf32>
      tpu.vector_store %arg8[%c0_18, %c0_19], %19 {strides = array<i32>} : memref<8x32xf32, #tpu.memory_space<vmem>>, vector<8x32xf32>,
      %cst_20 = arith.constant 0.000000e+00 : f32
      %21 = vector.broadcast %cst_20 : f32 to vector<8x32xf32>
      %c0_21 = arith.constant 0 : index
      %c0_22 = arith.constant 0 : index
      %22 = vector.load %arg9[%c0_21, %c0_22] : memref<8x32xf32, #tpu.memory_space<vmem>>, vector<8x32xf32>
      tpu.vector_store %arg9[%c0_21, %c0_22], %21 {strides = array<i32>} : memref<8x32xf32, #tpu.memory_space<vmem>>, vector<8x32xf32>,
    } else {
    }
    %c0 = arith.constant 0 : index
    %c0_1 = arith.constant 0 : index
    %3 = vector.load %arg1[%c0, %c0_1] : memref<8x1024xf32, #tpu.memory_space<vmem>>, vector<8x1024xf32>
    %c0_2 = arith.constant 0 : index
    %c0_3 = arith.constant 0 : index
    %4 = vector.load %arg2[%c0_2, %c0_3] : memref<8x1024xf32, #tpu.memory_space<vmem>>, vector<8x1024xf32>
    %c0_4 = arith.constant 0 : index
    %c0_5 = arith.constant 0 : index
    %5 = vector.load %arg3[%c0_4, %c0_5] : memref<32x1024xbf16, #tpu.memory_space<vmem>>, vector<32x1024xbf16>
    %c0_6 = arith.constant 0 : index
    %c0_7 = arith.constant 0 : index
    %6 = vector.load %arg8[%c0_6, %c0_7] : memref<8x32xf32, #tpu.memory_space<vmem>>, vector<8x32xf32>
    %7 = arith.truncf %3 : vector<8x1024xf32> to vector<8x1024xbf16>
    %cst = arith.constant dense<0.000000e+00> : vector<8x32xf32>
    %8 = tpu.matmul %7, %5, %cst {dimension_numbers = #tpu.dot_dimension_numbers<[1], [1], [0], [0], [0, 0, 1, 0], [], []>} : vector<8x1024xbf16>, vector<32x1024xbf16>, vector<8x32xf32> -> vector<8x32xf32>
    %9 = arith.addf %6, %8 : vector<8x32xf32>
    %c0_8 = arith.constant 0 : index
    %c0_9 = arith.constant 0 : index
    %10 = vector.load %arg8[%c0_8, %c0_9] : memref<8x32xf32, #tpu.memory_space<vmem>>, vector<8x32xf32>
    tpu.vector_store %arg8[%c0_8, %c0_9], %9 {strides = array<i32>} : memref<8x32xf32, #tpu.memory_space<vmem>>, vector<8x32xf32>,
    %c0_10 = arith.constant 0 : index
    %c0_11 = arith.constant 0 : index
    %11 = vector.load %arg9[%c0_10, %c0_11] : memref<8x32xf32, #tpu.memory_space<vmem>>, vector<8x32xf32>
    %12 = arith.truncf %4 : vector<8x1024xf32> to vector<8x1024xbf16>
    %cst_12 = arith.constant dense<0.000000e+00> : vector<8x32xf32>
    %13 = tpu.matmul %12, %5, %cst_12 {dimension_numbers = #tpu.dot_dimension_numbers<[1], [1], [0], [0], [0, 0, 1, 0], [], []>} : vector<8x1024xbf16>, vector<32x1024xbf16>, vector<8x32xf32> -> vector<8x32xf32>
    %14 = arith.addf %11, %13 : vector<8x32xf32>
    %c0_13 = arith.constant 0 : index
    %c0_14 = arith.constant 0 : index
    %15 = vector.load %arg9[%c0_13, %c0_14] : memref<8x32xf32, #tpu.memory_space<vmem>>, vector<8x32xf32>
    tpu.vector_store %arg9[%c0_13, %c0_14], %14 {strides = array<i32>} : memref<8x32xf32, #tpu.memory_space<vmem>>, vector<8x32xf32>,
    %c0_i32_15 = arith.constant 0 : i32
    %16 = arith.cmpi eq, %arg0, %c0_i32_15 : i32
    %17 = arith.extui %16 : i1 to i32
    %c0_i32_16 = arith.constant 0 : i32
    %18 = arith.cmpi ne, %17, %c0_i32_16 : i32
    scf.if %18 {
      %c0_17 = arith.constant 0 : index
      %c0_18 = arith.constant 0 : index
      %19 = vector.load %arg4[%c0_17, %c0_18] : memref<1x32xf32, #tpu.memory_space<vmem>>, vector<1x32xf32>
      %c0_19 = arith.constant 0 : index
      %c0_20 = arith.constant 0 : index
      %20 = vector.load %arg5[%c0_19, %c0_20] : memref<32x64xf32, #tpu.memory_space<vmem>>, vector<32x64xf32>
      %c0_21 = arith.constant 0 : index
      %c0_22 = arith.constant 0 : index
      %21 = vector.load %arg6[%c0_21, %c0_22] : memref<64x32xf32, #tpu.memory_space<vmem>>, vector<64x32xf32>
      %c0_23 = arith.constant 0 : index
      %c0_24 = arith.constant 0 : index
      %22 = vector.load %arg8[%c0_23, %c0_24] : memref<8x32xf32, #tpu.memory_space<vmem>>, vector<8x32xf32>
      %23 = vector.broadcast %19 : vector<1x32xf32> to vector<8x32xf32>
      %24 = arith.addf %22, %23 : vector<8x32xf32>
      %cst_25 = arith.constant dense<0.000000e+00> : vector<8x64xf32>
      %25 = tpu.matmul %24, %20, %cst_25 {dimension_numbers = #tpu.dot_dimension_numbers<[1], [0], [0], [1], [0, 0, 1, 1], [], []>} : vector<8x32xf32>, vector<32x64xf32>, vector<8x64xf32> -> vector<8x64xf32>
      %cst_26 = arith.constant dense<0.000000e+00> : vector<64xf32>
      %26 = vector.multi_reduction <add>, %25, %cst_26 [0] : vector<8x64xf32> to vector<64xf32>
      %27 = vector.shape_cast %26 : vector<64xf32> to vector<1x64xf32>
      %cst_27 = arith.constant 8.000000e+00 : f32
      %28 = vector.broadcast %cst_27 : f32 to vector<1x64xf32>
      %29 = arith.divf %27, %28 : vector<1x64xf32>
      %30 = vector.broadcast %29 : vector<1x64xf32> to vector<8x64xf32>
      %31 = arith.subf %25, %30 : vector<8x64xf32>
      %32 = arith.mulf %31, %31 : vector<8x64xf32>
      %cst_28 = arith.constant dense<0.000000e+00> : vector<64xf32>
      %33 = vector.multi_reduction <add>, %32, %cst_28 [0] : vector<8x64xf32> to vector<64xf32>
      %34 = vector.shape_cast %33 : vector<64xf32> to vector<1x64xf32>
      %cst_29 = arith.constant 8.000000e+00 : f32
      %35 = vector.broadcast %cst_29 : f32 to vector<1x64xf32>
      %36 = arith.divf %34, %35 : vector<1x64xf32>
      %cst_30 = arith.constant 9.99999974E-6 : f32
      %37 = vector.broadcast %cst_30 : f32 to vector<1x64xf32>
      %38 = arith.addf %36, %37 : vector<1x64xf32>
      %39 = math.rsqrt %38 : vector<1x64xf32>
      %40 = vector.broadcast %39 : vector<1x64xf32> to vector<8x64xf32>
      %41 = arith.mulf %31, %40 : vector<8x64xf32>
      %42 = vector.extract_strided_slice %41 {offsets = [0, 0], sizes = [8, 32], strides = [1, 1]} : vector<8x64xf32> to vector<8x32xf32>
      %cst_31 = arith.constant dense<0.000000e+00> : vector<8x32xf32>
      %43 = tpu.matmul %41, %21, %cst_31 {dimension_numbers = #tpu.dot_dimension_numbers<[1], [0], [0], [1], [0, 0, 1, 1], [], []>} : vector<8x64xf32>, vector<64x32xf32>, vector<8x32xf32> -> vector<8x32xf32>
      %cst_32 = arith.constant dense<0.000000e+00> : vector<32xf32>
      %44 = vector.multi_reduction <add>, %43, %cst_32 [0] : vector<8x32xf32> to vector<32xf32>
      %45 = vector.shape_cast %44 : vector<32xf32> to vector<1x32xf32>
      %cst_33 = arith.constant 8.000000e+00 : f32
      %46 = vector.broadcast %cst_33 : f32 to vector<1x32xf32>
      %47 = arith.divf %45, %46 : vector<1x32xf32>
      %48 = vector.broadcast %47 : vector<1x32xf32> to vector<8x32xf32>
      %49 = arith.subf %43, %48 : vector<8x32xf32>
      %50 = arith.mulf %49, %49 : vector<8x32xf32>
      %cst_34 = arith.constant dense<0.000000e+00> : vector<32xf32>
      %51 = vector.multi_reduction <add>, %50, %cst_34 [0] : vector<8x32xf32> to vector<32xf32>
      %52 = vector.shape_cast %51 : vector<32xf32> to vector<1x32xf32>
      %cst_35 = arith.constant 8.000000e+00 : f32
      %53 = vector.broadcast %cst_35 : f32 to vector<1x32xf32>
      %54 = arith.divf %52, %53 : vector<1x32xf32>
      %cst_36 = arith.constant 9.99999974E-6 : f32
      %55 = vector.broadcast %cst_36 : f32 to vector<1x32xf32>
      %56 = arith.addf %54, %55 : vector<1x32xf32>
      %57 = math.rsqrt %56 : vector<1x32xf32>
      %58 = vector.broadcast %57 : vector<1x32xf32> to vector<8x32xf32>
      %59 = arith.mulf %49, %58 : vector<8x32xf32>
      %c0_37 = arith.constant 0 : index
      %c0_38 = arith.constant 0 : index
      %60 = vector.load %arg9[%c0_37, %c0_38] : memref<8x32xf32, #tpu.memory_space<vmem>>, vector<8x32xf32>
      %61 = vector.broadcast %19 : vector<1x32xf32> to vector<8x32xf32>
      %62 = arith.addf %60, %61 : vector<8x32xf32>
      %cst_39 = arith.constant dense<0.000000e+00> : vector<8x64xf32>
      %63 = tpu.matmul %62, %20, %cst_39 {dimension_numbers = #tpu.dot_dimension_numbers<[1], [0], [0], [1], [0, 0, 1, 1], [], []>} : vector<8x32xf32>, vector<32x64xf32>, vector<8x64xf32> -> vector<8x64xf32>
      %cst_40 = arith.constant dense<0.000000e+00> : vector<64xf32>
      %64 = vector.multi_reduction <add>, %63, %cst_40 [0] : vector<8x64xf32> to vector<64xf32>
      %65 = vector.shape_cast %64 : vector<64xf32> to vector<1x64xf32>
      %cst_41 = arith.constant 8.000000e+00 : f32
      %66 = vector.broadcast %cst_41 : f32 to vector<1x64xf32>
      %67 = arith.divf %65, %66 : vector<1x64xf32>
      %68 = vector.broadcast %67 : vector<1x64xf32> to vector<8x64xf32>
      %69 = arith.subf %63, %68 : vector<8x64xf32>
      %70 = arith.mulf %69, %69 : vector<8x64xf32>
      %cst_42 = arith.constant dense<0.000000e+00> : vector<64xf32>
      %71 = vector.multi_reduction <add>, %70, %cst_42 [0] : vector<8x64xf32> to vector<64xf32>
      %72 = vector.shape_cast %71 : vector<64xf32> to vector<1x64xf32>
      %cst_43 = arith.constant 8.000000e+00 : f32
      %73 = vector.broadcast %cst_43 : f32 to vector<1x64xf32>
      %74 = arith.divf %72, %73 : vector<1x64xf32>
      %cst_44 = arith.constant 9.99999974E-6 : f32
      %75 = vector.broadcast %cst_44 : f32 to vector<1x64xf32>
      %76 = arith.addf %74, %75 : vector<1x64xf32>
      %77 = math.rsqrt %76 : vector<1x64xf32>
      %78 = vector.broadcast %77 : vector<1x64xf32> to vector<8x64xf32>
      %79 = arith.mulf %69, %78 : vector<8x64xf32>
      %80 = vector.extract_strided_slice %79 {offsets = [0, 0], sizes = [8, 32], strides = [1, 1]} : vector<8x64xf32> to vector<8x32xf32>
      %cst_45 = arith.constant dense<0.000000e+00> : vector<8x32xf32>
      %81 = tpu.matmul %79, %21, %cst_45 {dimension_numbers = #tpu.dot_dimension_numbers<[1], [0], [0], [1], [0, 0, 1, 1], [], []>} : vector<8x64xf32>, vector<64x32xf32>, vector<8x32xf32> -> vector<8x32xf32>
      %cst_46 = arith.constant dense<0.000000e+00> : vector<32xf32>
      %82 = vector.multi_reduction <add>, %81, %cst_46 [0] : vector<8x32xf32> to vector<32xf32>
      %83 = vector.shape_cast %82 : vector<32xf32> to vector<1x32xf32>
      %cst_47 = arith.constant 8.000000e+00 : f32
      %84 = vector.broadcast %cst_47 : f32 to vector<1x32xf32>
      %85 = arith.divf %83, %84 : vector<1x32xf32>
      %86 = vector.broadcast %85 : vector<1x32xf32> to vector<8x32xf32>
      %87 = arith.subf %81, %86 : vector<8x32xf32>
      %88 = arith.mulf %87, %87 : vector<8x32xf32>
      %cst_48 = arith.constant dense<0.000000e+00> : vector<32xf32>
      %89 = vector.multi_reduction <add>, %88, %cst_48 [0] : vector<8x32xf32> to vector<32xf32>
      %90 = vector.shape_cast %89 : vector<32xf32> to vector<1x32xf32>
      %cst_49 = arith.constant 8.000000e+00 : f32
      %91 = vector.broadcast %cst_49 : f32 to vector<1x32xf32>
      %92 = arith.divf %90, %91 : vector<1x32xf32>
      %cst_50 = arith.constant 9.99999974E-6 : f32
      %93 = vector.broadcast %cst_50 : f32 to vector<1x32xf32>
      %94 = arith.addf %92, %93 : vector<1x32xf32>
      %95 = math.rsqrt %94 : vector<1x32xf32>
      %96 = vector.broadcast %95 : vector<1x32xf32> to vector<8x32xf32>
      %97 = arith.mulf %87, %96 : vector<8x32xf32>
      %98 = tpu.iota {dimensions = array<i32: 0>} : vector<32x32xi32>
      %99 = tpu.iota {dimensions = array<i32: 1>} : vector<32x32xi32>
      %100 = arith.cmpi eq, %98, %99 : vector<32x32xi32>
      %101 = arith.extui %100 : vector<32x32xi1> to vector<32x32xi32>
      %102 = arith.sitofp %101 : vector<32x32xi32> to vector<32x32xf32>
      %103 = arith.mulf %42, %42 : vector<8x32xf32>
      %cst_51 = arith.constant dense<0.000000e+00> : vector<8xf32>
      %104 = vector.multi_reduction <add>, %103, %cst_51 [1] : vector<8x32xf32> to vector<8xf32>
      %105 = vector.shape_cast %104 : vector<8xf32> to vector<8x1xf32>
      %cst_52 = arith.constant 1.000000e-24 : f32
      %106 = vector.broadcast %cst_52 : f32 to vector<8x1xf32>
      %107 = arith.maximumf %105, %106 : vector<8x1xf32>
      %108 = math.rsqrt %107 : vector<8x1xf32>
      %109 = vector.broadcast %108 : vector<8x1xf32> to vector<8x32xf32>
      %110 = arith.mulf %42, %109 : vector<8x32xf32>
      %111 = arith.mulf %80, %80 : vector<8x32xf32>
      %cst_53 = arith.constant dense<0.000000e+00> : vector<8xf32>
      %112 = vector.multi_reduction <add>, %111, %cst_53 [1] : vector<8x32xf32> to vector<8xf32>
      %113 = vector.shape_cast %112 : vector<8xf32> to vector<8x1xf32>
      %cst_54 = arith.constant 1.000000e-24 : f32
      %114 = vector.broadcast %cst_54 : f32 to vector<8x1xf32>
      %115 = arith.maximumf %113, %114 : vector<8x1xf32>
      %116 = math.rsqrt %115 : vector<8x1xf32>
      %117 = vector.broadcast %116 : vector<8x1xf32> to vector<8x32xf32>
      %118 = arith.mulf %80, %117 : vector<8x32xf32>
      %119 = arith.mulf %59, %59 : vector<8x32xf32>
      %cst_55 = arith.constant dense<0.000000e+00> : vector<8xf32>
      %120 = vector.multi_reduction <add>, %119, %cst_55 [1] : vector<8x32xf32> to vector<8xf32>
      %121 = vector.shape_cast %120 : vector<8xf32> to vector<8x1xf32>
      %cst_56 = arith.constant 1.000000e-24 : f32
      %122 = vector.broadcast %cst_56 : f32 to vector<8x1xf32>
      %123 = arith.maximumf %121, %122 : vector<8x1xf32>
      %124 = math.rsqrt %123 : vector<8x1xf32>
      %125 = vector.broadcast %124 : vector<8x1xf32> to vector<8x32xf32>
      %126 = arith.mulf %59, %125 : vector<8x32xf32>
      %127 = arith.mulf %97, %97 : vector<8x32xf32>
      %cst_57 = arith.constant dense<0.000000e+00> : vector<8xf32>
      %128 = vector.multi_reduction <add>, %127, %cst_57 [1] : vector<8x32xf32> to vector<8xf32>
      %129 = vector.shape_cast %128 : vector<8xf32> to vector<8x1xf32>
      %cst_58 = arith.constant 1.000000e-24 : f32
      %130 = vector.broadcast %cst_58 : f32 to vector<8x1xf32>
      %131 = arith.maximumf %129, %130 : vector<8x1xf32>
      %132 = math.rsqrt %131 : vector<8x1xf32>
      %133 = vector.broadcast %132 : vector<8x1xf32> to vector<8x32xf32>
      %134 = arith.mulf %97, %133 : vector<8x32xf32>
      %cst_59 = arith.constant dense<0.000000e+00> : vector<32xf32>
      %135 = vector.multi_reduction <add>, %110, %cst_59 [0] : vector<8x32xf32> to vector<32xf32>
      %136 = vector.shape_cast %135 : vector<32xf32> to vector<1x32xf32>
      %cst_60 = arith.constant 8.000000e+00 : f32
      %137 = vector.broadcast %cst_60 : f32 to vector<1x32xf32>
      %138 = arith.divf %136, %137 : vector<1x32xf32>
      %139 = vector.broadcast %138 : vector<1x32xf32> to vector<8x32xf32>
      %140 = arith.subf %110, %139 : vector<8x32xf32>
      %cst_61 = arith.constant dense<0.000000e+00> : vector<32xf32>
      %141 = vector.multi_reduction <add>, %118, %cst_61 [0] : vector<8x32xf32> to vector<32xf32>
      %142 = vector.shape_cast %141 : vector<32xf32> to vector<1x32xf32>
      %cst_62 = arith.constant 8.000000e+00 : f32
      %143 = vector.broadcast %cst_62 : f32 to vector<1x32xf32>
      %144 = arith.divf %142, %143 : vector<1x32xf32>
      %145 = vector.broadcast %144 : vector<1x32xf32> to vector<8x32xf32>
      %146 = arith.subf %118, %145 : vector<8x32xf32>
      %cst_63 = arith.constant dense<0.000000e+00> : vector<32xf32>
      %147 = vector.multi_reduction <add>, %126, %cst_63 [0] : vector<8x32xf32> to vector<32xf32>
      %148 = vector.shape_cast %147 : vector<32xf32> to vector<1x32xf32>
      %cst_64 = arith.constant 8.000000e+00 : f32
      %149 = vector.broadcast %cst_64 : f32 to vector<1x32xf32>
      %150 = arith.divf %148, %149 : vector<1x32xf32>
      %151 = vector.broadcast %150 : vector<1x32xf32> to vector<8x32xf32>
      %152 = arith.subf %126, %151 : vector<8x32xf32>
      %cst_65 = arith.constant dense<0.000000e+00> : vector<32xf32>
      %153 = vector.multi_reduction <add>, %134, %cst_65 [0] : vector<8x32xf32> to vector<32xf32>
      %154 = vector.shape_cast %153 : vector<32xf32> to vector<1x32xf32>
      %cst_66 = arith.constant 8.000000e+00 : f32
      %155 = vector.broadcast %cst_66 : f32 to vector<1x32xf32>
      %156 = arith.divf %154, %155 : vector<1x32xf32>
      %157 = vector.broadcast %156 : vector<1x32xf32> to vector<8x32xf32>
      %158 = arith.subf %134, %157 : vector<8x32xf32>
      %159 = tpu.transpose %110, [1, 0] : vector<8x32xf32> -> vector<32x8xf32>
      %160 = tpu.transpose %118, [1, 0] : vector<8x32xf32> -> vector<32x8xf32>
      %161 = tpu.transpose %126, [1, 0] : vector<8x32xf32> -> vector<32x8xf32>
      %162 = tpu.transpose %134, [1, 0] : vector<8x32xf32> -> vector<32x8xf32>
      %cst_67 = arith.constant dense<0.000000e+00> : vector<32x32xf32>
      %163 = tpu.matmul %160, %152, %cst_67 {dimension_numbers = #tpu.dot_dimension_numbers<[1], [0], [0], [1], [0, 0, 1, 1], [], []>} : vector<32x8xf32>, vector<8x32xf32>, vector<32x32xf32> -> vector<32x32xf32>
      %cst_68 = arith.constant 1.250000e-01 : f32
      %164 = vector.broadcast %cst_68 : f32 to vector<32x32xf32>
      %165 = arith.mulf %163, %164 : vector<32x32xf32>
      %cst_69 = arith.constant 1.000000e+00 : f32
      %166 = vector.broadcast %cst_69 : f32 to vector<32x32xf32>
      %167 = arith.mulf %166, %102 : vector<32x32xf32>
      %168 = arith.addf %165, %167 : vector<32x32xf32>
      %cst_70 = arith.constant dense<0.000000e+00> : vector<32x32xf32>
      %169 = tpu.matmul %159, %158, %cst_70 {dimension_numbers = #tpu.dot_dimension_numbers<[1], [0], [0], [1], [0, 0, 1, 1], [], []>} : vector<32x8xf32>, vector<8x32xf32>, vector<32x32xf32> -> vector<32x32xf32>
      %cst_71 = arith.constant 1.250000e-01 : f32
      %170 = vector.broadcast %cst_71 : f32 to vector<32x32xf32>
      %171 = arith.mulf %169, %170 : vector<32x32xf32>
      %cst_72 = arith.constant 1.000000e+00 : f32
      %172 = vector.broadcast %cst_72 : f32 to vector<32x32xf32>
      %173 = arith.mulf %172, %102 : vector<32x32xf32>
      %174 = arith.addf %171, %173 : vector<32x32xf32>
      %cst_73 = arith.constant dense<0.000000e+00> : vector<32x32xf32>
      %175 = tpu.matmul %160, %146, %cst_73 {dimension_numbers = #tpu.dot_dimension_numbers<[1], [0], [0], [1], [0, 0, 1, 1], [], []>} : vector<32x8xf32>, vector<8x32xf32>, vector<32x32xf32> -> vector<32x32xf32>
      %cst_74 = arith.constant 1.250000e-01 : f32
      %176 = vector.broadcast %cst_74 : f32 to vector<32x32xf32>
      %177 = arith.mulf %175, %176 : vector<32x32xf32>
      %cst_75 = arith.constant 1.000000e+00 : f32
      %178 = vector.broadcast %cst_75 : f32 to vector<32x32xf32>
      %179 = arith.mulf %178, %102 : vector<32x32xf32>
      %180 = arith.addf %177, %179 : vector<32x32xf32>
      %cst_76 = arith.constant dense<0.000000e+00> : vector<32x32xf32>
      %181 = tpu.matmul %161, %152, %cst_76 {dimension_numbers = #tpu.dot_dimension_numbers<[1], [0], [0], [1], [0, 0, 1, 1], [], []>} : vector<32x8xf32>, vector<8x32xf32>, vector<32x32xf32> -> vector<32x32xf32>
      %cst_77 = arith.constant 1.250000e-01 : f32
      %182 = vector.broadcast %cst_77 : f32 to vector<32x32xf32>
      %183 = arith.mulf %181, %182 : vector<32x32xf32>
      %cst_78 = arith.constant 1.000000e+00 : f32
      %184 = vector.broadcast %cst_78 : f32 to vector<32x32xf32>
      %185 = arith.mulf %184, %102 : vector<32x32xf32>
      %186 = arith.addf %183, %185 : vector<32x32xf32>
      %cst_79 = arith.constant dense<0.000000e+00> : vector<32x32xf32>
      %187 = tpu.matmul %159, %140, %cst_79 {dimension_numbers = #tpu.dot_dimension_numbers<[1], [0], [0], [1], [0, 0, 1, 1], [], []>} : vector<32x8xf32>, vector<8x32xf32>, vector<32x32xf32> -> vector<32x32xf32>
      %cst_80 = arith.constant 1.250000e-01 : f32
      %188 = vector.broadcast %cst_80 : f32 to vector<32x32xf32>
      %189 = arith.mulf %187, %188 : vector<32x32xf32>
      %cst_81 = arith.constant 1.000000e+00 : f32
      %190 = vector.broadcast %cst_81 : f32 to vector<32x32xf32>
      %191 = arith.mulf %190, %102 : vector<32x32xf32>
      %192 = arith.addf %189, %191 : vector<32x32xf32>
      %cst_82 = arith.constant dense<0.000000e+00> : vector<32x32xf32>
      %193 = tpu.matmul %162, %158, %cst_82 {dimension_numbers = #tpu.dot_dimension_numbers<[1], [0], [0], [1], [0, 0, 1, 1], [], []>} : vector<32x8xf32>, vector<8x32xf32>, vector<32x32xf32> -> vector<32x32xf32>
      %cst_83 = arith.constant 1.250000e-01 : f32
      %194 = vector.broadcast %cst_83 : f32 to vector<32x32xf32>
      %195 = arith.mulf %193, %194 : vector<32x32xf32>
      %cst_84 = arith.constant 1.000000e+00 : f32
      %196 = vector.broadcast %cst_84 : f32 to vector<32x32xf32>
      %197 = arith.mulf %196, %102 : vector<32x32xf32>
      %198 = arith.addf %195, %197 : vector<32x32xf32>
      %199 = vector.shape_cast %168 : vector<32x32xf32> to vector<1x32x32xf32>
      %200 = vector.shape_cast %174 : vector<32x32xf32> to vector<1x32x32xf32>
      %201 = vector.shape_cast %186 : vector<32x32xf32> to vector<1x32x32xf32>
      %202 = vector.shape_cast %198 : vector<32x32xf32> to vector<1x32x32xf32>
      %203 = tpu.concatenate %199, %200, %201, %202 in 0 : vector<1x32x32xf32>, vector<1x32x32xf32>, vector<1x32x32xf32>, vector<1x32x32xf32> -> vector<4x32x32xf32>
      %204 = vector.shape_cast %102 : vector<32x32xf32> to vector<1x32x32xf32>
      %205 = vector.broadcast %204 : vector<1x32x32xf32> to vector<4x32x32xf32>
      %206 = arith.subf %203, %205 : vector<4x32x32xf32>
      %cst_85 = arith.constant 0.000000e+00 : f32
      %207 = vector.broadcast %cst_85 : f32 to vector<4x32x32xf32>
      %cst_86 = arith.constant 1.000000e+00 : f32
      %208 = vector.broadcast %cst_86 : f32 to vector<4x32x32xf32>
      %209 = arith.mulf %208, %206 : vector<4x32x32xf32>
      %210 = arith.addf %207, %209 : vector<4x32x32xf32>
      "tpu.trace_start"() <{level = 10 : i32, message = "bij,bjk->bik"}> : () -> ()
      %cst_87 = arith.constant dense<0.000000e+00> : vector<4x32x32xf32>
      %211 = tpu.matmul %206, %206, %cst_87 {dimension_numbers = #tpu.dot_dimension_numbers<[2], [1], [1], [2], [0, 0, 0, 1, 1, 2], [0], [0]>} : vector<4x32x32xf32>, vector<4x32x32xf32>, vector<4x32x32xf32> -> vector<4x32x32xf32>
      "tpu.trace_stop"() : () -> ()
      %cst_88 = arith.constant -5.000000e-01 : f32
      %212 = vector.broadcast %cst_88 : f32 to vector<4x32x32xf32>
      %213 = arith.mulf %212, %211 : vector<4x32x32xf32>
      %214 = arith.addf %210, %213 : vector<4x32x32xf32>
      "tpu.trace_start"() <{level = 10 : i32, message = "bij,bjk->bik"}> : () -> ()
      %cst_89 = arith.constant dense<0.000000e+00> : vector<4x32x32xf32>
      %215 = tpu.matmul %211, %206, %cst_89 {dimension_numbers = #tpu.dot_dimension_numbers<[2], [1], [1], [2], [0, 0, 0, 1, 1, 2], [0], [0]>} : vector<4x32x32xf32>, vector<4x32x32xf32>, vector<4x32x32xf32> -> vector<4x32x32xf32>
      "tpu.trace_stop"() : () -> ()
      %cst_90 = arith.constant 0.333333343 : f32
      %216 = vector.broadcast %cst_90 : f32 to vector<4x32x32xf32>
      %217 = arith.mulf %216, %215 : vector<4x32x32xf32>
      %218 = arith.addf %214, %217 : vector<4x32x32xf32>
      "tpu.trace_start"() <{level = 10 : i32, message = "bij,bjk->bik"}> : () -> ()
      %cst_91 = arith.constant dense<0.000000e+00> : vector<4x32x32xf32>
      %219 = tpu.matmul %215, %206, %cst_91 {dimension_numbers = #tpu.dot_dimension_numbers<[2], [1], [1], [2], [0, 0, 0, 1, 1, 2], [0], [0]>} : vector<4x32x32xf32>, vector<4x32x32xf32>, vector<4x32x32xf32> -> vector<4x32x32xf32>
      "tpu.trace_stop"() : () -> ()
      %cst_92 = arith.constant -2.500000e-01 : f32
      %220 = vector.broadcast %cst_92 : f32 to vector<4x32x32xf32>
      %221 = arith.mulf %220, %219 : vector<4x32x32xf32>
      %222 = arith.addf %218, %221 : vector<4x32x32xf32>
      %223 = vector.extract_strided_slice %222 {offsets = [0, 0, 0], sizes = [1, 32, 32], strides = [1, 1, 1]} : vector<4x32x32xf32> to vector<1x32x32xf32>
      %224 = vector.shape_cast %223 : vector<1x32x32xf32> to vector<32x32xf32>
      %225 = arith.mulf %224, %102 : vector<32x32xf32>
      %226 = vector.shape_cast %225 : vector<32x32xf32> to vector<1x32x32xf32>
      %cst_93 = arith.constant dense<0.000000e+00> : vector<1xf32>
      %227 = vector.multi_reduction <add>, %226, %cst_93 [1, 2] : vector<1x32x32xf32> to vector<1xf32>
      %228 = vector.shape_cast %227 : vector<1xf32> to vector<1x1x1xf32>
      %229 = vector.extract %228[0, 0, 0] : f32 from vector<1x1x1xf32>
      %230 = vector.extract_strided_slice %222 {offsets = [1, 0, 0], sizes = [1, 32, 32], strides = [1, 1, 1]} : vector<4x32x32xf32> to vector<1x32x32xf32>
      %231 = vector.shape_cast %230 : vector<1x32x32xf32> to vector<32x32xf32>
      %232 = arith.mulf %231, %102 : vector<32x32xf32>
      %233 = vector.shape_cast %232 : vector<32x32xf32> to vector<1x32x32xf32>
      %cst_94 = arith.constant dense<0.000000e+00> : vector<1xf32>
      %234 = vector.multi_reduction <add>, %233, %cst_94 [1, 2] : vector<1x32x32xf32> to vector<1xf32>
      %235 = vector.shape_cast %234 : vector<1xf32> to vector<1x1x1xf32>
      %236 = vector.extract %235[0, 0, 0] : f32 from vector<1x1x1xf32>
      %237 = arith.addf %229, %236 : f32
      %cst_95 = arith.constant -1.000000e+00 : f32
      %238 = arith.mulf %cst_95, %237 : f32
      %239 = vector.extract_strided_slice %222 {offsets = [2, 0, 0], sizes = [1, 32, 32], strides = [1, 1, 1]} : vector<4x32x32xf32> to vector<1x32x32xf32>
      %240 = vector.shape_cast %239 : vector<1x32x32xf32> to vector<32x32xf32>
      %241 = arith.mulf %180, %240 : vector<32x32xf32>
      %242 = vector.shape_cast %241 : vector<32x32xf32> to vector<1x32x32xf32>
      %cst_96 = arith.constant dense<0.000000e+00> : vector<1xf32>
      %243 = vector.multi_reduction <add>, %242, %cst_96 [1, 2] : vector<1x32x32xf32> to vector<1xf32>
      %244 = vector.shape_cast %243 : vector<1xf32> to vector<1x1x1xf32>
      %245 = vector.extract %244[0, 0, 0] : f32 from vector<1x1x1xf32>
      %246 = vector.extract_strided_slice %222 {offsets = [3, 0, 0], sizes = [1, 32, 32], strides = [1, 1, 1]} : vector<4x32x32xf32> to vector<1x32x32xf32>
      %247 = vector.shape_cast %246 : vector<1x32x32xf32> to vector<32x32xf32>
      %248 = arith.mulf %192, %247 : vector<32x32xf32>
      %249 = vector.shape_cast %248 : vector<32x32xf32> to vector<1x32x32xf32>
      %cst_97 = arith.constant dense<0.000000e+00> : vector<1xf32>
      %250 = vector.multi_reduction <add>, %249, %cst_97 [1, 2] : vector<1x32x32xf32> to vector<1xf32>
      %251 = vector.shape_cast %250 : vector<1xf32> to vector<1x1x1xf32>
      %252 = vector.extract %251[0, 0, 0] : f32 from vector<1x1x1xf32>
      %253 = arith.addf %245, %252 : f32
      %cst_98 = arith.constant 0.000000e+00 : f32
      %254 = arith.subf %cst_98, %253 : f32
      %cst_99 = arith.constant 1.000000e+00 : f32
      %255 = arith.mulf %cst_99, %254 : f32
      %256 = arith.addf %238, %255 : f32
      %cst_100 = arith.constant 5.000000e-01 : f32
      %257 = arith.mulf %256, %cst_100 : f32
      %c0_101 = arith.constant 0 : index
      %258 = memref.load %arg7[%c0_101] : memref<1xf32, #tpu.memory_space<smem>>
      memref.store %257, %arg7[%c0_101] : memref<1xf32, #tpu.memory_space<smem>>
    } else {
    }
    return
  }
  func.func @transform_0(%arg0: i32) -> (i32, i32) {
    %c0_i32 = arith.constant 0 : i32
    %c0_i32_0 = arith.constant 0 : i32
    return %c0_i32, %arg0 : i32, i32
  }
  func.func @transform_1(%arg0: i32) -> (i32, i32) {
    %c0_i32 = arith.constant 0 : i32
    %c0_i32_0 = arith.constant 0 : i32
    return %c0_i32, %arg0 : i32, i32
  }
  func.func @transform_2(%arg0: i32) -> (i32, i32) {
    %c0_i32 = arith.constant 0 : i32
    %c0_i32_0 = arith.constant 0 : i32
    return %c0_i32, %arg0 : i32, i32
  }
  func.func @transform_3(%arg0: i32) -> (i32, i32) {
    %c0_i32 = arith.constant 0 : i32
    %c0_i32_0 = arith.constant 0 : i32
    %c0_i32_1 = arith.constant 0 : i32
    return %c0_i32, %c0_i32_0 : i32, i32
  }
  func.func @transform_4(%arg0: i32) -> (i32, i32) {
    %c0_i32 = arith.constant 0 : i32
    %c0_i32_0 = arith.constant 0 : i32
    %c0_i32_1 = arith.constant 0 : i32
    return %c0_i32, %c0_i32_0 : i32, i32
  }
  func.func @transform_5(%arg0: i32) -> (i32, i32) {
    %c0_i32 = arith.constant 0 : i32
    %c0_i32_0 = arith.constant 0 : i32
    %c0_i32_1 = arith.constant 0 : i32
    return %c0_i32, %c0_i32_0 : i32, i32
  }
  func.func @transform_6(%arg0: i32) -> i32 {
    %c0_i32 = arith.constant 0 : i32
    %c0_i32_0 = arith.constant 0 : i32
    return %c0_i32 : i32
  }
}

</mosaic_0001>

<llo_original>
// kernel: tpu_custom_call.1
$region0: #{tpu_custom_call.1}
  #allocation0 [shape = 'u32[]', space=smem, size = 0x4, offset = 0x4, fixed_abs, tag = 'smem constant byte address 0x4 - core index']
  #allocation1 [shape = 'u32[144,128]{1,0:T(1,128)}', space=vmem, size = 0x12000, scoped, tag = 'internal scratch']
  #allocation2 [shape = 'f32[8,32]{1,0:T(8,128)}', space=vmem, size = 0x1000, scoped, tag = 'scratch operand']
  #allocation3 [shape = 'f32[8,32]{1,0:T(8,128)}', space=vmem, size = 0x1000, scoped, tag = 'scratch operand']
  %s0 = inlined_call_operand.vmem [shape: f32[8,1024], index: 0, kind: input, shape index: {}]
  %s1 = inlined_call_operand.hbm [shape: f32[8,1024], index: 1, kind: input, shape index: {}]
  %s2 = inlined_call_operand.hbm [shape: bf16[32,1024], index: 2, kind: input, shape index: {}]
  %s3 = inlined_call_operand.vmem [shape: f32[1,32], index: 3, kind: input, shape index: {}]
  %s4 = inlined_call_operand.vmem [shape: f32[32,64], index: 4, kind: input, shape index: {}]
  %s5 = inlined_call_operand.vmem [shape: f32[64,32], index: 5, kind: input, shape index: {}]
  %s6 = inlined_call_operand.hbm [shape: f32[1], index: 6, kind: output, shape index: {}]
  %s7 = sld [smem:[#allocation0]]
  $region50: #{tpu_custom_call.1} parent=0
    _
  %s9 = ssub.s32 1, %s7
  %s10 = scalar_select 0, %s9, %s7
  $region1: #{tpu_custom_call.1} parent=0
    #allocation4 [shape = 'u8[32768]{0}', space=vmem, size = 0x8000, scoped, tag = 'input window, operand 1, single buffered']
    #allocation5 [shape = 's32[1]{0}', space=sflag, size = 0x4, scoped, tag = 'scoped memory for tpu_custom_call.1']
    #allocation6 [shape = 's32[1]{0}', space=sflag, size = 0x4, scoped, tag = 'scoped memory for tpu_custom_call.1']
    #allocation7 [shape = 'u8[65536]{0}', space=vmem, size = 0x10000, scoped, tag = 'input window, operand 2, single buffered']
    #allocation8 [shape = 's32[1]{0}', space=sflag, size = 0x4, scoped, tag = 'scoped memory for tpu_custom_call.1']
    #allocation9 [shape = 'u8[512]{0}', space=smem, size = 0x200, scoped, tag = 'output window, operand 0, single buffered']
    %11 = vsyncpa [#allocation5], 0
    %12 = vsyncpa [#allocation8], 0
    %13 = vsyncpa [#allocation6], 0
    // Predicated region
    $region2: #{tpu_custom_call.1} parent=1 // pred_check
      _
    $region3: #{tpu_custom_call.1} parent=1 // pred_check_branch
      %15 = sbr.rel (0) target = $region5
    $region4: #{tpu_custom_call.1} parent=1 // pred_region
      _
    $region5: #{tpu_custom_call.1} parent=1 // pred_fallthru
      _
    // Predicated region
    $region6: #{tpu_custom_call.1} parent=1 // pred_check
      _
    $region7: #{tpu_custom_call.1} parent=1 // pred_check_branch
      %17 = sbr.rel (0) target = $region9
    $region8: #{tpu_custom_call.1} parent=1 // pred_region
      %s19 = ssub.s32 1024, 1024
      %20 = vsyncadd [#allocation5], %s19
      %s22 = sshll.u32 [#allocation4], 4
      %s23 = int_to_ptr.vmem [resolvable:$true] %s22
      %25 = dma.hbm_to_vmem [thread:$0]  %s1, 1024, %s23, [#allocation5]
    $region9: #{tpu_custom_call.1} parent=1 // pred_fallthru
      _
    // Predicated region
    $region10: #{tpu_custom_call.1} parent=1 // pred_check
      _
    $region11: #{tpu_custom_call.1} parent=1 // pred_check_branch
      %27 = sbr.rel (0) target = $region13
    $region12: #{tpu_custom_call.1} parent=1 // pred_region
      %s29 = ssub.s32 2048, 2048
      %30 = vsyncadd [#allocation8], %s29
      %s31 = sshll.u32 [#allocation7], 4
      %s32 = int_to_ptr.vmem [resolvable:$true] %s31
      %37 = dma.hbm_to_vmem [thread:$0]  %s2, 2048, %s32, [#allocation8], 512, 512, 32
    $region13: #{tpu_custom_call.1} parent=1 // pred_fallthru
      _
    // Predicated region
    $region14: #{tpu_custom_call.1} parent=1 // pred_check
      _
    $region15: #{tpu_custom_call.1} parent=1 // pred_check_branch
      %39 = sbr.rel (0) target = $region17
    $region16: #{tpu_custom_call.1} parent=1 // pred_region
      _
    $region17: #{tpu_custom_call.1} parent=1 // pred_fallthru
      _
    // Predicated region
    $region18: #{tpu_custom_call.1} parent=1 // pred_check
      _
    $region19: #{tpu_custom_call.1} parent=1 // pred_check_branch
      %41 = sbr.rel (0) target = $region21
    $region20: #{tpu_custom_call.1} parent=1 // pred_region
      _
    $region21: #{tpu_custom_call.1} parent=1 // pred_fallthru
      _
    // Predicated region
    $region22: #{tpu_custom_call.1} parent=1 // pred_check
      _
    $region23: #{tpu_custom_call.1} parent=1 // pred_check_branch
      %43 = sbr.rel (0) target = $region25
    $region24: #{tpu_custom_call.1} parent=1 // pred_region
      _
    $region25: #{tpu_custom_call.1} parent=1 // pred_fallthru
      _
    // Predicated region
    $region26: #{tpu_custom_call.1} parent=1 // pred_check
      _
    $region27: #{tpu_custom_call.1} parent=1 // pred_check_branch
      %45 = sbr.rel (0) target = $region29
    $region28: #{tpu_custom_call.1} parent=1 // pred_region
      %46 = dma.done [#allocation5], 1024
    $region29: #{tpu_custom_call.1} parent=1 // pred_fallthru
      _
    // Predicated region
    $region30: #{tpu_custom_call.1} parent=1 // pred_check
      _
    $region31: #{tpu_custom_call.1} parent=1 // pred_check_branch
      %48 = sbr.rel (0) target = $region33
    $region32: #{tpu_custom_call.1} parent=1 // pred_region
      %49 = dma.done [#allocation8], 2048
    $region33: #{tpu_custom_call.1} parent=1 // pred_fallthru
      _
    %p51 = scmp.eq.s32.totalorder 0, 0
    // Predicated region
    $region34: #{tpu_custom_call.1} parent=1 // pred_check
      %p52 = pneg %p51
    $region35: #{tpu_custom_call.1} parent=1 // pred_check_branch
      %54 = sbr.rel (%p52) target = $region37
    $region36: #{tpu_custom_call.1} parent=1 // pred_region
      %vm55 = vcmask 261120
      %56 = vst.msk [vmem:[#allocation2] sm:$0xff] %vm55, 0.0
      %57 = vst.msk [vmem:[#allocation3] sm:$0xff] %vm55, 0.0
    $region37: #{tpu_custom_call.1} parent=1 // pred_fallthru
      _
    %v58 = vld [vmem:[%s0] sm:$0xff]
    %v59 = vld [vmem:[%s0 + $0x8] sm:$0xff]
    %v60 = vld [vmem:[%s0 + $0x10] sm:$0xff]
    %v61 = vld [vmem:[%s0 + $0x18] sm:$0xff]
    %v62 = vld [vmem:[%s0 + $0x20] sm:$0xff]
    %v63 = vld [vmem:[%s0 + $0x28] sm:$0xff]
    %v64 = vld [vmem:[%s0 + $0x30] sm:$0xff]
    %v65 = vld [vmem:[%s0 + $0x38] sm:$0xff]
    %v66 = vld [vmem:[#allocation4] sm:$0xff]
    %v67 = vld [vmem:[#allocation4 + $0x8] sm:$0xff]
    %v68 = vld [vmem:[#allocation4 + $0x10] sm:$0xff]
    %v69 = vld [vmem:[#allocation4 + $0x18] sm:$0xff]
    %v70 = vld [vmem:[#allocation4 + $0x20] sm:$0xff]
    %v71 = vld [vmem:[#allocation4 + $0x28] sm:$0xff]
    %v72 = vld [vmem:[#allocation4 + $0x30] sm:$0xff]
    %v73 = vld [vmem:[#allocation4 + $0x38] sm:$0xff]
    %v74 = vld [vmem:[#allocation7] sm:$0xff]
    %v75 = vld [vmem:[#allocation7 + $0x8] sm:$0xff]
    %v76 = vld [vmem:[#allocation7 + $0x10] sm:$0xff]
    %v77 = vld [vmem:[#allocation7 + $0x18] sm:$0xff]
    %v78 = vld [vmem:[#allocation7 + $0x20] sm:$0xff]
    %v79 = vld [vmem:[#allocation7 + $0x28] sm:$0xff]
    %v80 = vld [vmem:[#allocation7 + $0x30] sm:$0xff]
    %v81 = vld [vmem:[#allocation7 + $0x38] sm:$0xff]
    %v82 = vld [vmem:[#allocation7 + $0x40] sm:$0xff]
    %v83 = vld [vmem:[#allocation7 + $0x48] sm:$0xff]
    %v84 = vld [vmem:[#allocation7 + $0x50] sm:$0xff]
    %v85 = vld [vmem:[#allocation7 + $0x58] sm:$0xff]
    %v86 = vld [vmem:[#allocation7 + $0x60] sm:$0xff]
    %v87 = vld [vmem:[#allocation7 + $0x68] sm:$0xff]
    %v88 = vld [vmem:[#allocation7 + $0x70] sm:$0xff]
    %v89 = vld [vmem:[#allocation7 + $0x78] sm:$0xff]
    %v90 = vld [vmem:[#allocation2] sm:$0xff]
    %v91 = vpack.c.bf16 %v58, %v58
    %v92 = vpack.c.bf16 %v59, %v59
    %v93 = vpack.c.bf16 %v60, %v60
    %v94 = vpack.c.bf16 %v61, %v61
    %v95 = vpack.c.bf16 %v62, %v62
    %v96 = vpack.c.bf16 %v63, %v63
    %v97 = vpack.c.bf16 %v64, %v64
    %v98 = vpack.c.bf16 %v65, %v65
    %v115 = vunpack.c.l.b16 %v74
    %v116 = vunpack.c.h.b16 %v74
    %v117 = vunpack.c.l.b16 %v75
    %v118 = vunpack.c.h.b16 %v75
    %v119 = vunpack.c.l.b16 %v76
    %v120 = vunpack.c.h.b16 %v76
    %v121 = vunpack.c.l.b16 %v77
    %v122 = vunpack.c.h.b16 %v77
    %v123 = vunpack.c.l.b16 %v78
    %v124 = vunpack.c.h.b16 %v78
    %v125 = vunpack.c.l.b16 %v79
    %v126 = vunpack.c.h.b16 %v79
    %v127 = vunpack.c.l.b16 %v80
    %v128 = vunpack.c.h.b16 %v80
    %v129 = vunpack.c.l.b16 %v81
    %v130 = vunpack.c.h.b16 %v81
    %v131 = vunpack.c.l.b16 %v82
    %v132 = vunpack.c.h.b16 %v82
    %v133 = vunpack.c.l.b16 %v83
    %v134 = vunpack.c.h.b16 %v83
    %v135 = vunpack.c.l.b16 %v84
    %v136 = vunpack.c.h.b16 %v84
    %v137 = vunpack.c.l.b16 %v85
    %v138 = vunpack.c.h.b16 %v85
    %v139 = vunpack.c.l.b16 %v86
    %v140 = vunpack.c.h.b16 %v86
    %v141 = vunpack.c.l.b16 %v87
    %v142 = vunpack.c.h.b16 %v87
    %v143 = vunpack.c.l.b16 %v88
    %v144 = vunpack.c.h.b16 %v88
    %v145 = vunpack.c.l.b16 %v89
    %v146 = vunpack.c.h.b16 %v89
    %v147 = vpack.c.b16 %v123, %v115
    %v148 = vpack.c.b16 %v124, %v116
    %v149 = vpack.c.b16 %v125, %v117
    %v150 = vpack.c.b16 %v126, %v118
    %v151 = vpack.c.b16 %v127, %v119
    %v152 = vpack.c.b16 %v128, %v120
    %v153 = vpack.c.b16 %v129, %v121
    %v154 = vpack.c.b16 %v130, %v122
    %v155 = vpack.c.b16 %v139, %v131
    %v156 = vpack.c.b16 %v140, %v132
    %v157 = vpack.c.b16 %v141, %v133
    %v158 = vpack.c.b16 %v142, %v134
    %v159 = vpack.c.b16 %v143, %v135
    %v160 = vpack.c.b16 %v144, %v136
    %v161 = vpack.c.b16 %v145, %v137
    %v162 = vpack.c.b16 %v146, %v138
    %179 = vmatprep.subr.bf16.mxu0 %v148
    %180 = vmatpush1.bf16.xpose.msra.mxu0 %v147
    %181 = vmatprep.subr.bf16.mxu0 %v156
    %182 = vmatpush1.bf16.xpose.msra.mxu0 %v155
    %183 = vmatprep.subr.bf16.mxu0 0
    %184 = vmatpush1.bf16.xpose.msra.mxu0 0
    %185 = vmatprep.subr.bf16.mxu0 0
    %186 = vmatpush1.bf16.xpose.msra.mxu0 0
    %187 = vmatprep.subr.bf16.mxu0 0
    %188 = vmatpush1.bf16.xpose.msra.mxu0 0
    %189 = vmatprep.subr.bf16.mxu0 0
    %190 = vmatpush1.bf16.xpose.msra.mxu0 0
    %191 = vmatprep.subr.bf16.mxu0 0
    %192 = vmatpush1.bf16.xpose.msra.mxu0 0
    %193 = vmatprep.subr.bf16.mxu0 0
    %194 = vmatpush1.bf16.xpose.msra.mxu0 0
    %195 = vmatprep.subr.bf16.mxu0 0
    %196 = vmatpush1.bf16.xpose.msra.mxu0 0
    %197 = vmatprep.subr.bf16.mxu0 0
    %198 = vmatpush1.bf16.xpose.msra.mxu0 0
    %199 = vmatprep.subr.bf16.mxu0 0
    %200 = vmatpush1.bf16.xpose.msra.mxu0 0
    %201 = vmatprep.subr.bf16.mxu0 0
    %202 = vmatpush1.bf16.xpose.msra.mxu0 0
    %203 = vmatprep.subr.bf16.mxu0 0
    %204 = vmatpush1.bf16.xpose.msra.mxu0 0
    %205 = vmatprep.subr.bf16.mxu0 0
    %206 = vmatpush1.bf16.xpose.msra.mxu0 0
    %207 = vmatprep.subr.bf16.mxu0 0
    %208 = vmatpush1.bf16.xpose.msra.mxu0 0
    %209 = vmatprep.subr.bf16.mxu0 0
    %210 = vmatpush1.bf16.xpose.msra.mxu0 0
    %211 = vmatprep.mubr.bf16.mxu0 %v92
    %212 = vmatmul.mubr.bf16.gmra.mrb[0].mxu0 %v91
    %v213 = vpop.f32.mrb[0].mxu0
    %v214 = vadd.f32 0.0, %v213
    %v215 = vpop.f32.mrb[0].mxu0
    %v216 = vpop.f32.mrb[0].mxu0
    %v217 = vpop.f32.mrb[0].mxu0
    %218 = vdwg.mxu0
    %219 = vmatprep.subr.bf16.mxu0 %v150
    %220 = vmatpush1.bf16.xpose.msra.mxu0 %v149
    %221 = vmatprep.subr.bf16.mxu0 %v158
    %222 = vmatpush1.bf16.xpose.msra.mxu0 %v157
    %223 = vmatprep.subr.bf16.mxu0 0
    %224 = vmatpush1.bf16.xpose.msra.mxu0 0
    %225 = vmatprep.subr.bf16.mxu0 0
    %226 = vmatpush1.bf16.xpose.msra.mxu0 0
    %227 = vmatprep.subr.bf16.mxu0 0
    %228 = vmatpush1.bf16.xpose.msra.mxu0 0
    %229 = vmatprep.subr.bf16.mxu0 0
    %230 = vmatpush1.bf16.xpose.msra.mxu0 0
    %231 = vmatprep.subr.bf16.mxu0 0
    %232 = vmatpush1.bf16.xpose.msra.mxu0 0
    %233 = vmatprep.subr.bf16.mxu0 0
    %234 = vmatpush1.bf16.xpose.msra.mxu0 0
    %235 = vmatprep.subr.bf16.mxu0 0
    %236 = vmatpush1.bf16.xpose.msra.mxu0 0
    %237 = vmatprep.subr.bf16.mxu0 0
    %238 = vmatpush1.bf16.xpose.msra.mxu0 0
    %239 = vmatprep.subr.bf16.mxu0 0
    %240 = vmatpush1.bf16.xpose.msra.mxu0 0
    %241 = vmatprep.subr.bf16.mxu0 0
    %242 = vmatpush1.bf16.xpose.msra.mxu0 0
    %243 = vmatprep.subr.bf16.mxu0 0
    %244 = vmatpush1.bf16.xpose.msra.mxu0 0
    %245 = vmatprep.subr.bf16.mxu0 0
    %246 = vmatpush1.bf16.xpose.msra.mxu0 0
    %247 = vmatprep.subr.bf16.mxu0 0
    %248 = vmatpush1.bf16.xpose.msra.mxu0 0
    %249 = vmatprep.subr.bf16.mxu0 0
    %250 = vmatpush1.bf16.xpose.msra.mxu0 0
    %251 = vmatprep.mubr.bf16.mxu0 %v94
    %252 = vmatmul.mubr.bf16.gmra.mrb[0].mxu0 %v93
    %v253 = vpop.f32.mrb[0].mxu0
    %v254 = vadd.f32 %v214, %v253
    %v255 = vpop.f32.mrb[0].mxu0
    %v256 = vpop.f32.mrb[0].mxu0
    %v257 = vpop.f32.mrb[0].mxu0
    %258 = vdwg.mxu0
    %259 = vmatprep.subr.bf16.mxu0 %v152
    %260 = vmatpush1.bf16.xpose.msra.mxu0 %v151
    %261 = vmatprep.subr.bf16.mxu0 %v160
    %262 = vmatpush1.bf16.xpose.msra.mxu0 %v159
    %263 = vmatprep.subr.bf16.mxu0 0
    %264 = vmatpush1.bf16.xpose.msra.mxu0 0
    %265 = vmatprep.subr.bf16.mxu0 0
    %266 = vmatpush1.bf16.xpose.msra.mxu0 0
    %267 = vmatprep.subr.bf16.mxu0 0
    %268 = vmatpush1.bf16.xpose.msra.mxu0 0
    %269 = vmatprep.subr.bf16.mxu0 0
    %270 = vmatpush1.bf16.xpose.msra.mxu0 0
    %271 = vmatprep.subr.bf16.mxu0 0
    %272 = vmatpush1.bf16.xpose.msra.mxu0 0
    %273 = vmatprep.subr.bf16.mxu0 0
    %274 = vmatpush1.bf16.xpose.msra.mxu0 0
    %275 = vmatprep.subr.bf16.mxu0 0
    %276 = vmatpush1.bf16.xpose.msra.mxu0 0
    %277 = vmatprep.subr.bf16.mxu0 0
    %278 = vmatpush1.bf16.xpose.msra.mxu0 0
    %279 = vmatprep.subr.bf16.mxu0 0
    %280 = vmatpush1.bf16.xpose.msra.mxu0 0
    %281 = vmatprep.subr.bf16.mxu0 0
    %282 = vmatpush1.bf16.xpose.msra.mxu0 0
    %283 = vmatprep.subr.bf16.mxu0 0
    %284 = vmatpush1.bf16.xpose.msra.mxu0 0
    %285 = vmatprep.subr.bf16.mxu0 0
    %286 = vmatpush1.bf16.xpose.msra.mxu0 0
    %287 = vmatprep.subr.bf16.mxu0 0
    %288 = vmatpush1.bf16.xpose.msra.mxu0 0
    %289 = vmatprep.subr.bf16.mxu0 0
    %290 = vmatpush1.bf16.xpose.msra.mxu0 0
    %291 = vmatprep.mubr.bf16.mxu0 %v96
    %292 = vmatmul.mubr.bf16.gmra.mrb[0].mxu0 %v95
    %v293 = vpop.f32.mrb[0].mxu0
    %v294 = vadd.f32 %v254, %v293
    %v295 = vpop.f32.mrb[0].mxu0
    %v296 = vpop.f32.mrb[0].mxu0
    %v297 = vpop.f32.mrb[0].mxu0
    %298 = vdwg.mxu0
    %299 = vmatprep.subr.bf16.mxu0 %v154
    %300 = vmatpush1.bf16.xpose.msra.mxu0 %v153
    %301 = vmatprep.subr.bf16.mxu0 %v162
    %302 = vmatpush1.bf16.xpose.msra.mxu0 %v161
    %303 = vmatprep.subr.bf16.mxu0 0
    %304 = vmatpush1.bf16.xpose.msra.mxu0 0
    %305 = vmatprep.subr.bf16.mxu0 0
    %306 = vmatpush1.bf16.xpose.msra.mxu0 0
    %307 = vmatprep.subr.bf16.mxu0 0
    %308 = vmatpush1.bf16.xpose.msra.mxu0 0
    %309 = vmatprep.subr.bf16.mxu0 0
    %310 = vmatpush1.bf16.xpose.msra.mxu0 0
    %311 = vmatprep.subr.bf16.mxu0 0
    %312 = vmatpush1.bf16.xpose.msra.mxu0 0
    %313 = vmatprep.subr.bf16.mxu0 0
    %314 = vmatpush1.bf16.xpose.msra.mxu0 0
    %315 = vmatprep.subr.bf16.mxu0 0
    %316 = vmatpush1.bf16.xpose.msra.mxu0 0
    %317 = vmatprep.subr.bf16.mxu0 0
    %318 = vmatpush1.bf16.xpose.msra.mxu0 0
    %319 = vmatprep.subr.bf16.mxu0 0
    %320 = vmatpush1.bf16.xpose.msra.mxu0 0
    %321 = vmatprep.subr.bf16.mxu0 0
    %322 = vmatpush1.bf16.xpose.msra.mxu0 0
    %323 = vmatprep.subr.bf16.mxu0 0
    %324 = vmatpush1.bf16.xpose.msra.mxu0 0
    %325 = vmatprep.subr.bf16.mxu0 0
    %326 = vmatpush1.bf16.xpose.msra.mxu0 0
    %327 = vmatprep.subr.bf16.mxu0 0
    %328 = vmatpush1.bf16.xpose.msra.mxu0 0
    %329 = vmatprep.subr.bf16.mxu0 0
    %330 = vmatpush1.bf16.xpose.msra.mxu0 0
    %331 = vmatprep.mubr.bf16.mxu0 %v98
    %332 = vmatmul.mubr.bf16.gmra.mrb[0].mxu0 %v97
    %v333 = vpop.f32.mrb[0].mxu0
    %v334 = vadd.f32 %v294, %v333
    %v335 = vpop.f32.mrb[0].mxu0
    %v336 = vpop.f32.mrb[0].mxu0
    %v337 = vpop.f32.mrb[0].mxu0
    %338 = vdwg.mxu0
    %v339 = vadd.f32 %v90, %v334
    %vm340 = vcmask 261120
    %341 = vst.msk [vmem:[#allocation2] sm:$0xff] %vm340, %v339
    %v342 = vld [vmem:[#allocation3] sm:$0xff]
    %v343 = vpack.c.bf16 %v66, %v66
    %v344 = vpack.c.bf16 %v67, %v67
    %v345 = vpack.c.bf16 %v68, %v68
    %v346 = vpack.c.bf16 %v69, %v69
    %v347 = vpack.c.bf16 %v70, %v70
    %v348 = vpack.c.bf16 %v71, %v71
    %v349 = vpack.c.bf16 %v72, %v72
    %v350 = vpack.c.bf16 %v73, %v73
    %351 = vmatprep.subr.bf16.mxu0 %v148
    %352 = vmatpush1.bf16.xpose.msra.mxu0 %v147
    %353 = vmatprep.subr.bf16.mxu0 %v156
    %354 = vmatpush1.bf16.xpose.msra.mxu0 %v155
    %355 = vmatprep.subr.bf16.mxu0 0
    %356 = vmatpush1.bf16.xpose.msra.mxu0 0
    %357 = vmatprep.subr.bf16.mxu0 0
    %358 = vmatpush1.bf16.xpose.msra.mxu0 0
    %359 = vmatprep.subr.bf16.mxu0 0
    %360 = vmatpush1.bf16.xpose.msra.mxu0 0
    %361 = vmatprep.subr.bf16.mxu0 0
    %362 = vmatpush1.bf16.xpose.msra.mxu0 0
    %363 = vmatprep.subr.bf16.mxu0 0
    %364 = vmatpush1.bf16.xpose.msra.mxu0 0
    %365 = vmatprep.subr.bf16.mxu0 0
    %366 = vmatpush1.bf16.xpose.msra.mxu0 0
    %367 = vmatprep.subr.bf16.mxu0 0
    %368 = vmatpush1.bf16.xpose.msra.mxu0 0
    %369 = vmatprep.subr.bf16.mxu0 0
    %370 = vmatpush1.bf16.xpose.msra.mxu0 0
    %371 = vmatprep.subr.bf16.mxu0 0
    %372 = vmatpush1.bf16.xpose.msra.mxu0 0
    %373 = vmatprep.subr.bf16.mxu0 0
    %374 = vmatpush1.bf16.xpose.msra.mxu0 0
    %375 = vmatprep.subr.bf16.mxu0 0
    %376 = vmatpush1.bf16.xpose.msra.mxu0 0
    %377 = vmatprep.subr.bf16.mxu0 0
    %378 = vmatpush1.bf16.xpose.msra.mxu0 0
    %379 = vmatprep.subr.bf16.mxu0 0
    %380 = vmatpush1.bf16.xpose.msra.mxu0 0
    %381 = vmatprep.subr.bf16.mxu0 0
    %382 = vmatpush1.bf16.xpose.msra.mxu0 0
    %383 = vmatprep.mubr.bf16.mxu0 %v344
    %384 = vmatmul.mubr.bf16.gmra.mrb[0].mxu0 %v343
    %v385 = vpop.f32.mrb[0].mxu0
    %v386 = vadd.f32 0.0, %v385
    %v387 = vpop.f32.mrb[0].mxu0
    %v388 = vpop.f32.mrb[0].mxu0
    %v389 = vpop.f32.mrb[0].mxu0
    %390 = vdwg.mxu0
    %391 = vmatprep.subr.bf16.mxu0 %v150
    %392 = vmatpush1.bf16.xpose.msra.mxu0 %v149
    %393 = vmatprep.subr.bf16.mxu0 %v158
    %394 = vmatpush1.bf16.xpose.msra.mxu0 %v157
    %395 = vmatprep.subr.bf16.mxu0 0
    %396 = vmatpush1.bf16.xpose.msra.mxu0 0
    %397 = vmatprep.subr.bf16.mxu0 0
    %398 = vmatpush1.bf16.xpose.msra.mxu0 0
    %399 = vmatprep.subr.bf16.mxu0 0
    %400 = vmatpush1.bf16.xpose.msra.mxu0 0
    %401 = vmatprep.subr.bf16.mxu0 0
    %402 = vmatpush1.bf16.xpose.msra.mxu0 0
    %403 = vmatprep.subr.bf16.mxu0 0
    %404 = vmatpush1.bf16.xpose.msra.mxu0 0
    %405 = vmatprep.subr.bf16.mxu0 0
    %406 = vmatpush1.bf16.xpose.msra.mxu0 0
    %407 = vmatprep.subr.bf16.mxu0 0
    %408 = vmatpush1.bf16.xpose.msra.mxu0 0
    %409 = vmatprep.subr.bf16.mxu0 0
    %410 = vmatpush1.bf16.xpose.msra.mxu0 0
    %411 = vmatprep.subr.bf16.mxu0 0
    %412 = vmatpush1.bf16.xpose.msra.mxu0 0
    %413 = vmatprep.subr.bf16.mxu0 0
    %414 = vmatpush1.bf16.xpose.msra.mxu0 0
    %415 = vmatprep.subr.bf16.mxu0 0
    %416 = vmatpush1.bf16.xpose.msra.mxu0 0
    %417 = vmatprep.subr.bf16.mxu0 0
    %418 = vmatpush1.bf16.xpose.msra.mxu0 0
    %419 = vmatprep.subr.bf16.mxu0 0
    %420 = vmatpush1.bf16.xpose.msra.mxu0 0
    %421 = vmatprep.subr.bf16.mxu0 0
    %422 = vmatpush1.bf16.xpose.msra.mxu0 0
    %423 = vmatprep.mubr.bf16.mxu0 %v346
    %424 = vmatmul.mubr.bf16.gmra.mrb[0].mxu0 %v345
    %v425 = vpop.f32.mrb[0].mxu0
    %v426 = vadd.f32 %v386, %v425
    %v427 = vpop.f32.mrb[0].mxu0
    %v428 = vpop.f32.mrb[0].mxu0
    %v429 = vpop.f32.mrb[0].mxu0
    %430 = vdwg.mxu0
    %431 = vmatprep.subr.bf16.mxu0 %v152
    %432 = vmatpush1.bf16.xpose.msra.mxu0 %v151
    %433 = vmatprep.subr.bf16.mxu0 %v160
    %434 = vmatpush1.bf16.xpose.msra.mxu0 %v159
    %435 = vmatprep.subr.bf16.mxu0 0
    %436 = vmatpush1.bf16.xpose.msra.mxu0 0
    %437 = vmatprep.subr.bf16.mxu0 0
    %438 = vmatpush1.bf16.xpose.msra.mxu0 0
    %439 = vmatprep.subr.bf16.mxu0 0
    %440 = vmatpush1.bf16.xpose.msra.mxu0 0
    %441 = vmatprep.subr.bf16.mxu0 0
    %442 = vmatpush1.bf16.xpose.msra.mxu0 0
    %443 = vmatprep.subr.bf16.mxu0 0
    %444 = vmatpush1.bf16.xpose.msra.mxu0 0
    %445 = vmatprep.subr.bf16.mxu0 0
    %446 = vmatpush1.bf16.xpose.msra.mxu0 0
    %447 = vmatprep.subr.bf16.mxu0 0
    %448 = vmatpush1.bf16.xpose.msra.mxu0 0
    %449 = vmatprep.subr.bf16.mxu0 0
    %450 = vmatpush1.bf16.xpose.msra.mxu0 0
    %451 = vmatprep.subr.bf16.mxu0 0
    %452 = vmatpush1.bf16.xpose.msra.mxu0 0
    %453 = vmatprep.subr.bf16.mxu0 0
    %454 = vmatpush1.bf16.xpose.msra.mxu0 0
    %455 = vmatprep.subr.bf16.mxu0 0
    %456 = vmatpush1.bf16.xpose.msra.mxu0 0
    %457 = vmatprep.subr.bf16.mxu0 0
    %458 = vmatpush1.bf16.xpose.msra.mxu0 0
    %459 = vmatprep.subr.bf16.mxu0 0
    %460 = vmatpush1.bf16.xpose.msra.mxu0 0
    %461 = vmatprep.subr.bf16.mxu0 0
    %462 = vmatpush1.bf16.xpose.msra.mxu0 0
    %463 = vmatprep.mubr.bf16.mxu0 %v348
    %464 = vmatmul.mubr.bf16.gmra.mrb[0].mxu0 %v347
    %v465 = vpop.f32.mrb[0].mxu0
    %v466 = vadd.f32 %v426, %v465
    %v467 = vpop.f32.mrb[0].mxu0
    %v468 = vpop.f32.mrb[0].mxu0
    %v469 = vpop.f32.mrb[0].mxu0
    %470 = vdwg.mxu0
    %471 = vmatprep.subr.bf16.mxu0 %v154
    %472 = vmatpush1.bf16.xpose.msra.mxu0 %v153
    %473 = vmatprep.subr.bf16.mxu0 %v162
    %474 = vmatpush1.bf16.xpose.msra.mxu0 %v161
    %475 = vmatprep.subr.bf16.mxu0 0
    %476 = vmatpush1.bf16.xpose.msra.mxu0 0
    %477 = vmatprep.subr.bf16.mxu0 0
    %478 = vmatpush1.bf16.xpose.msra.mxu0 0
    %479 = vmatprep.subr.bf16.mxu0 0
    %480 = vmatpush1.bf16.xpose.msra.mxu0 0
    %481 = vmatprep.subr.bf16.mxu0 0
    %482 = vmatpush1.bf16.xpose.msra.mxu0 0
    %483 = vmatprep.subr.bf16.mxu0 0
    %484 = vmatpush1.bf16.xpose.msra.mxu0 0
    %485 = vmatprep.subr.bf16.mxu0 0
    %486 = vmatpush1.bf16.xpose.msra.mxu0 0
    %487 = vmatprep.subr.bf16.mxu0 0
    %488 = vmatpush1.bf16.xpose.msra.mxu0 0
    %489 = vmatprep.subr.bf16.mxu0 0
    %490 = vmatpush1.bf16.xpose.msra.mxu0 0
    %491 = vmatprep.subr.bf16.mxu0 0
    %492 = vmatpush1.bf16.xpose.msra.mxu0 0
    %493 = vmatprep.subr.bf16.mxu0 0
    %494 = vmatpush1.bf16.xpose.msra.mxu0 0
    %495 = vmatprep.subr.bf16.mxu0 0
    %496 = vmatpush1.bf16.xpose.msra.mxu0 0
    %497 = vmatprep.subr.bf16.mxu0 0
    %498 = vmatpush1.bf16.xpose.msra.mxu0 0
    %499 = vmatprep.subr.bf16.mxu0 0
    %500 = vmatpush1.bf16.xpose.msra.mxu0 0
    %501 = vmatprep.subr.bf16.mxu0 0
    %502 = vmatpush1.bf16.xpose.msra.mxu0 0
    %503 = vmatprep.mubr.bf16.mxu0 %v350
    %504 = vmatmul.mubr.bf16.gmra.mrb[0].mxu0 %v349
    %v505 = vpop.f32.mrb[0].mxu0
    %v506 = vadd.f32 %v466, %v505
    %v507 = vpop.f32.mrb[0].mxu0
    %v508 = vpop.f32.mrb[0].mxu0
    %v509 = vpop.f32.mrb[0].mxu0
    %510 = vdwg.mxu0
    %v511 = vadd.f32 %v342, %v506
    %512 = vst.msk [vmem:[#allocation3] sm:$0xff] %vm340, %v511
    // Predicated region
    $region38: #{tpu_custom_call.1} parent=1 // pred_check
      %p513 = pneg %p51
    $region39: #{tpu_custom_call.1} parent=1 // pred_check_branch
      %515 = sbr.rel (%p513) target = $region41
    $region40: #{tpu_custom_call.1} parent=1 // pred_region
      %v516 = vld [vmem:[%s3] sm:$0x1]
      %v517 = vld [vmem:[%s4] sm:$0xff]
      %v518 = vld [vmem:[%s4 + $0x8] sm:$0xff]
      %v519 = vld [vmem:[%s4 + $0x10] sm:$0xff]
      %v520 = vld [vmem:[%s4 + $0x18] sm:$0xff]
      %v521 = vld [vmem:[%s5] sm:$0xff]
      %v522 = vld [vmem:[%s5 + $0x8] sm:$0xff]
      %v523 = vld [vmem:[%s5 + $0x10] sm:$0xff]
      %v524 = vld [vmem:[%s5 + $0x18] sm:$0xff]
      %v525 = vld [vmem:[%s5 + $0x20] sm:$0xff]
      %v526 = vld [vmem:[%s5 + $0x28] sm:$0xff]
      %v527 = vld [vmem:[%s5 + $0x30] sm:$0xff]
      %v528 = vld [vmem:[%s5 + $0x38] sm:$0xff]
      %v529 = vld [vmem:[#allocation2] sm:$0xff]
      %v531 = vlaneseq
      %v532 = vshrl.u32 %v531, 7
      %v533 = vsub.s32 0, %v532
      %v534 = vrot.slane %v516, %v533
      %v536 = vadd.f32 %v529, %v534
      %v538 = vsel %vm340, %v536, 0
      %540 = vmatprep.subr.mxu0 0.0
      %541 = vmatpush1.msra.mxu0 %v517
      %542 = vmatprep.subr.mxu0 0.0
      %543 = vmatpush1.msra.mxu0 %v518
      %544 = vmatprep.subr.mxu0 0.0
      %545 = vmatpush1.msra.mxu0 %v519
      %546 = vmatprep.subr.mxu0 0.0
      %547 = vmatpush1.msra.mxu0 %v520
      %548 = vmatprep.subr.mxu0 0.0
      %549 = vmatpush1.msra.mxu0 0.0
      %550 = vmatprep.subr.mxu0 0.0
      %551 = vmatpush1.msra.mxu0 0.0
      %552 = vmatprep.subr.mxu0 0.0
      %553 = vmatpush1.msra.mxu0 0.0
      %554 = vmatprep.subr.mxu0 0.0
      %555 = vmatpush1.msra.mxu0 0.0
      %556 = vmatprep.subr.mxu0 0.0
      %557 = vmatpush1.msra.mxu0 0.0
      %558 = vmatprep.subr.mxu0 0.0
      %559 = vmatpush1.msra.mxu0 0.0
      %560 = vmatprep.subr.mxu0 0.0
      %561 = vmatpush1.msra.mxu0 0.0
      %562 = vmatprep.subr.mxu0 0.0
      %563 = vmatpush1.msra.mxu0 0.0
      %564 = vmatprep.subr.mxu0 0.0
      %565 = vmatpush1.msra.mxu0 0.0
      %566 = vmatprep.subr.mxu0 0.0
      %567 = vmatpush1.msra.mxu0 0.0
      %568 = vmatprep.subr.mxu0 0.0
      %569 = vmatpush1.msra.mxu0 0.0
      %570 = vmatprep.subr.mxu0 0.0
      %571 = vmatpush1.msra.mxu0 0.0
      %572 = vmatprep.subr.mxu0 0.0
      %573 = vmatpush1.msra.mxu0 0.0
      %574 = vmatprep.subr.mxu0 0.0
      %575 = vmatpush1.msra.mxu0 0.0
      %576 = vmatprep.subr.mxu0 0.0
      %577 = vmatpush1.msra.mxu0 0.0
      %578 = vmatprep.subr.mxu0 0.0
      %579 = vmatpush1.msra.mxu0 0.0
      %580 = vmatprep.subr.mxu0 0.0
      %581 = vmatpush1.msra.mxu0 0.0
      %582 = vmatprep.subr.mxu0 0.0
      %583 = vmatpush1.msra.mxu0 0.0
      %584 = vmatprep.subr.mxu0 0.0
      %585 = vmatpush1.msra.mxu0 0.0
      %586 = vmatprep.subr.mxu0 0.0
      %587 = vmatpush1.msra.mxu0 0.0
      %588 = vmatprep.subr.mxu0 0.0
      %589 = vmatpush1.msra.mxu0 0.0
      %590 = vmatprep.subr.mxu0 0.0
      %591 = vmatpush1.msra.mxu0 0.0
      %592 = vmatprep.subr.mxu0 0.0
      %593 = vmatpush1.msra.mxu0 0.0
      %594 = vmatprep.subr.mxu0 0.0
      %595 = vmatpush1.msra.mxu0 0.0
      %596 = vmatprep.subr.mxu0 0.0
      %597 = vmatpush1.msra.mxu0 0.0
      %598 = vmatprep.subr.mxu0 0.0
      %599 = vmatpush1.msra.mxu0 0.0
      %600 = vmatprep.subr.mxu0 0.0
      %601 = vmatpush1.msra.mxu0 0.0
      %602 = vmatprep.subr.mxu0 0.0
      %603 = vmatpush1.msra.mxu0 0.0
      %604 = vmatprep.mubr.f32.mxu0 0.0
      %605 = vmatmul.mubr.f32.gmra.mrb[0].mxu0 %v538
      %v606 = vpop.f32.mrb[0].mxu0
      %v607 = vadd.f32 0.0, %v606
      %v608 = vpop.f32.mrb[0].mxu0
      %609 = vdwg.mxu0
      %vm610 = vcmask 523264
      %v611 = vsel %vm610, %v607, 0.0
      %v612 = vrot.slane %v611, 4
      %v613 = vadd.f32 %v611, %v612
      %v614 = vrot.slane %v613, 2
      %v615 = vadd.f32 %v613, %v614
      %v616 = vrot.slane %v615, 1
      %v617 = vadd.f32 %v615, %v616
      %v618 = vrcp.pop 8.0
      %v619 = vmul.f32 %v617, %v618
      %v620 = vsub.f32 %v607, %v619
      %v621 = vmul.f32 %v620, %v620
      %v622 = vsel %vm610, %v621, 0.0
      %v623 = vrot.slane %v622, 4
      %v624 = vadd.f32 %v622, %v623
      %v625 = vrot.slane %v624, 2
      %v626 = vadd.f32 %v624, %v625
      %v627 = vrot.slane %v626, 1
      %v628 = vadd.f32 %v626, %v627
      %v629 = vmul.f32 %v628, %v618
      %v630 = vadd.f32 %v629, 1e-05
      %v631 = vrsqrt.pop %v630
      %v632 = vmul.f32 %v620, %v631
      %v634 = vsel %vm610, %v632, 0
      %636 = vmatprep.subr.mxu0 0.0
      %637 = vmatpush1.msra.mxu0 %v521
      %638 = vmatprep.subr.mxu0 0.0
      %639 = vmatpush1.msra.mxu0 %v522
      %640 = vmatprep.subr.mxu0 0.0
      %641 = vmatpush1.msra.mxu0 %v523
      %642 = vmatprep.subr.mxu0 0.0
      %643 = vmatpush1.msra.mxu0 %v524
      %644 = vmatprep.subr.mxu0 0.0
      %645 = vmatpush1.msra.mxu0 %v525
      %646 = vmatprep.subr.mxu0 0.0
      %647 = vmatpush1.msra.mxu0 %v526
      %648 = vmatprep.subr.mxu0 0.0
      %649 = vmatpush1.msra.mxu0 %v527
      %650 = vmatprep.subr.mxu0 0.0
      %651 = vmatpush1.msra.mxu0 %v528
      %652 = vmatprep.subr.mxu0 0.0
      %653 = vmatpush1.msra.mxu0 0.0
      %654 = vmatprep.subr.mxu0 0.0
      %655 = vmatpush1.msra.mxu0 0.0
      %656 = vmatprep.subr.mxu0 0.0
      %657 = vmatpush1.msra.mxu0 0.0
      %658 = vmatprep.subr.mxu0 0.0
      %659 = vmatpush1.msra.mxu0 0.0
      %660 = vmatprep.subr.mxu0 0.0
      %661 = vmatpush1.msra.mxu0 0.0
      %662 = vmatprep.subr.mxu0 0.0
      %663 = vmatpush1.msra.mxu0 0.0
      %664 = vmatprep.subr.mxu0 0.0
      %665 = vmatpush1.msra.mxu0 0.0
      %666 = vmatprep.subr.mxu0 0.0
      %667 = vmatpush1.msra.mxu0 0.0
      %668 = vmatprep.subr.mxu0 0.0
      %669 = vmatpush1.msra.mxu0 0.0
      %670 = vmatprep.subr.mxu0 0.0
      %671 = vmatpush1.msra.mxu0 0.0
      %672 = vmatprep.subr.mxu0 0.0
      %673 = vmatpush1.msra.mxu0 0.0
      %674 = vmatprep.subr.mxu0 0.0
      %675 = vmatpush1.msra.mxu0 0.0
      %676 = vmatprep.subr.mxu0 0.0
      %677 = vmatpush1.msra.mxu0 0.0
      %678 = vmatprep.subr.mxu0 0.0
      %679 = vmatpush1.msra.mxu0 0.0
      %680 = vmatprep.subr.mxu0 0.0
      %681 = vmatpush1.msra.mxu0 0.0
      %682 = vmatprep.subr.mxu0 0.0
      %683 = vmatpush1.msra.mxu0 0.0
      %684 = vmatprep.subr.mxu0 0.0
      %685 = vmatpush1.msra.mxu0 0.0
      %686 = vmatprep.subr.mxu0 0.0
      %687 = vmatpush1.msra.mxu0 0.0
      %688 = vmatprep.subr.mxu0 0.0
      %689 = vmatpush1.msra.mxu0 0.0
      %690 = vmatprep.subr.mxu0 0.0
      %691 = vmatpush1.msra.mxu0 0.0
      %692 = vmatprep.subr.mxu0 0.0
      %693 = vmatpush1.msra.mxu0 0.0
      %694 = vmatprep.subr.mxu0 0.0
      %695 = vmatpush1.msra.mxu0 0.0
      %696 = vmatprep.subr.mxu0 0.0
      %697 = vmatpush1.msra.mxu0 0.0
      %698 = vmatprep.subr.mxu0 0.0
      %699 = vmatpush1.msra.mxu0 0.0
      %700 = vmatprep.mubr.f32.mxu0 0.0
      %701 = vmatmul.mubr.f32.gmra.mrb[0].mxu0 %v634
      %v702 = vpop.f32.mrb[0].mxu0
      %v703 = vadd.f32 0.0, %v702
      %v704 = vpop.f32.mrb[0].mxu0
      %705 = vdwg.mxu0
      %v706 = vsel %vm340, %v703, 0.0
      %v707 = vrot.slane %v706, 4
      %v708 = vadd.f32 %v706, %v707
      %v709 = vrot.slane %v708, 2
      %v710 = vadd.f32 %v708, %v709
      %v711 = vrot.slane %v710, 1
      %v712 = vadd.f32 %v710, %v711
      %v713 = vmul.f32 %v712, %v618
      %v714 = vsub.f32 %v703, %v713
      %v715 = vmul.f32 %v714, %v714
      %v716 = vsel %vm340, %v715, 0.0
      %v717 = vrot.slane %v716, 4
      %v718 = vadd.f32 %v716, %v717
      %v719 = vrot.slane %v718, 2
      %v720 = vadd.f32 %v718, %v719
      %v721 = vrot.slane %v720, 1
      %v722 = vadd.f32 %v720, %v721
      %v723 = vmul.f32 %v722, %v618
      %v724 = vadd.f32 %v723, 1e-05
      %v725 = vrsqrt.pop %v724
      %v726 = vmul.f32 %v714, %v725
      %v727 = vld [vmem:[#allocation3] sm:$0xff]
      %v728 = vadd.f32 %v727, %v534
      %v730 = vsel %vm340, %v728, 0
      %732 = vmatprep.subr.mxu0 0.0
      %733 = vmatpush1.msra.mxu0 %v517
      %734 = vmatprep.subr.mxu0 0.0
      %735 = vmatpush1.msra.mxu0 %v518
      %736 = vmatprep.subr.mxu0 0.0
      %737 = vmatpush1.msra.mxu0 %v519
      %738 = vmatprep.subr.mxu0 0.0
      %739 = vmatpush1.msra.mxu0 %v520
      %740 = vmatprep.subr.mxu0 0.0
      %741 = vmatpush1.msra.mxu0 0.0
      %742 = vmatprep.subr.mxu0 0.0
      %743 = vmatpush1.msra.mxu0 0.0
      %744 = vmatprep.subr.mxu0 0.0
      %745 = vmatpush1.msra.mxu0 0.0
      %746 = vmatprep.subr.mxu0 0.0
      %747 = vmatpush1.msra.mxu0 0.0
      %748 = vmatprep.subr.mxu0 0.0
      %749 = vmatpush1.msra.mxu0 0.0
      %750 = vmatprep.subr.mxu0 0.0
      %751 = vmatpush1.msra.mxu0 0.0
      %752 = vmatprep.subr.mxu0 0.0
      %753 = vmatpush1.msra.mxu0 0.0
      %754 = vmatprep.subr.mxu0 0.0
      %755 = vmatpush1.msra.mxu0 0.0
      %756 = vmatprep.subr.mxu0 0.0
      %757 = vmatpush1.msra.mxu0 0.0
      %758 = vmatprep.subr.mxu0 0.0
      %759 = vmatpush1.msra.mxu0 0.0
      %760 = vmatprep.subr.mxu0 0.0
      %761 = vmatpush1.msra.mxu0 0.0
      %762 = vmatprep.subr.mxu0 0.0
      %763 = vmatpush1.msra.mxu0 0.0
      %764 = vmatprep.subr.mxu0 0.0
      %765 = vmatpush1.msra.mxu0 0.0
      %766 = vmatprep.subr.mxu0 0.0
      %767 = vmatpush1.msra.mxu0 0.0
      %768 = vmatprep.subr.mxu0 0.0
      %769 = vmatpush1.msra.mxu0 0.0
      %770 = vmatprep.subr.mxu0 0.0
      %771 = vmatpush1.msra.mxu0 0.0
      %772 = vmatprep.subr.mxu0 0.0
      %773 = vmatpush1.msra.mxu0 0.0
      %774 = vmatprep.subr.mxu0 0.0
      %775 = vmatpush1.msra.mxu0 0.0
      %776 = vmatprep.subr.mxu0 0.0
      %777 = vmatpush1.msra.mxu0 0.0
      %778 = vmatprep.subr.mxu0 0.0
      %779 = vmatpush1.msra.mxu0 0.0
      %780 = vmatprep.subr.mxu0 0.0
      %781 = vmatpush1.msra.mxu0 0.0
      %782 = vmatprep.subr.mxu0 0.0
      %783 = vmatpush1.msra.mxu0 0.0
      %784 = vmatprep.subr.mxu0 0.0
      %785 = vmatpush1.msra.mxu0 0.0
      %786 = vmatprep.subr.mxu0 0.0
      %787 = vmatpush1.msra.mxu0 0.0
      %788 = vmatprep.subr.mxu0 0.0
      %789 = vmatpush1.msra.mxu0 0.0
      %790 = vmatprep.subr.mxu0 0.0
      %791 = vmatpush1.msra.mxu0 0.0
      %792 = vmatprep.subr.mxu0 0.0
      %793 = vmatpush1.msra.mxu0 0.0
      %794 = vmatprep.subr.mxu0 0.0
      %795 = vmatpush1.msra.mxu0 0.0
      %796 = vmatprep.mubr.f32.mxu0 0.0
      %797 = vmatmul.mubr.f32.gmra.mrb[0].mxu0 %v730
      %v798 = vpop.f32.mrb[0].mxu0
      %v799 = vadd.f32 0.0, %v798
      %v800 = vpop.f32.mrb[0].mxu0
      %801 = vdwg.mxu0
      %v802 = vsel %vm610, %v799, 0.0
      %v803 = vrot.slane %v802, 4
      %v804 = vadd.f32 %v802, %v803
      %v805 = vrot.slane %v804, 2
      %v806 = vadd.f32 %v804, %v805
      %v807 = vrot.slane %v806, 1
      %v808 = vadd.f32 %v806, %v807
      %v809 = vmul.f32 %v808, %v618
      %v810 = vsub.f32 %v799, %v809
      %v811 = vmul.f32 %v810, %v810
      %v812 = vsel %vm610, %v811, 0.0
      %v813 = vrot.slane %v812, 4
      %v814 = vadd.f32 %v812, %v813
      %v815 = vrot.slane %v814, 2
      %v816 = vadd.f32 %v814, %v815
      %v817 = vrot.slane %v816, 1
      %v818 = vadd.f32 %v816, %v817
      %v819 = vmul.f32 %v818, %v618
      %v820 = vadd.f32 %v819, 1e-05
      %v821 = vrsqrt.pop %v820
      %v822 = vmul.f32 %v810, %v821
      %v824 = vsel %vm610, %v822, 0
      %826 = vmatprep.subr.mxu0 0.0
      %827 = vmatpush1.msra.mxu0 %v521
      %828 = vmatprep.subr.mxu0 0.0
      %829 = vmatpush1.msra.mxu0 %v522
      %830 = vmatprep.subr.mxu0 0.0
      %831 = vmatpush1.msra.mxu0 %v523
      %832 = vmatprep.subr.mxu0 0.0
      %833 = vmatpush1.msra.mxu0 %v524
      %834 = vmatprep.subr.mxu0 0.0
      %835 = vmatpush1.msra.mxu0 %v525
      %836 = vmatprep.subr.mxu0 0.0
      %837 = vmatpush1.msra.mxu0 %v526
      %838 = vmatprep.subr.mxu0 0.0
      %839 = vmatpush1.msra.mxu0 %v527
      %840 = vmatprep.subr.mxu0 0.0
      %841 = vmatpush1.msra.mxu0 %v528
      %842 = vmatprep.subr.mxu0 0.0
      %843 = vmatpush1.msra.mxu0 0.0
      %844 = vmatprep.subr.mxu0 0.0
      %845 = vmatpush1.msra.mxu0 0.0
      %846 = vmatprep.subr.mxu0 0.0
      %847 = vmatpush1.msra.mxu0 0.0
      %848 = vmatprep.subr.mxu0 0.0
      %849 = vmatpush1.msra.mxu0 0.0
      %850 = vmatprep.subr.mxu0 0.0
      %851 = vmatpush1.msra.mxu0 0.0
      %852 = vmatprep.subr.mxu0 0.0
      %853 = vmatpush1.msra.mxu0 0.0
      %854 = vmatprep.subr.mxu0 0.0
      %855 = vmatpush1.msra.mxu0 0.0
      %856 = vmatprep.subr.mxu0 0.0
      %857 = vmatpush1.msra.mxu0 0.0
      %858 = vmatprep.subr.mxu0 0.0
      %859 = vmatpush1.msra.mxu0 0.0
      %860 = vmatprep.subr.mxu0 0.0
      %861 = vmatpush1.msra.mxu0 0.0
      %862 = vmatprep.subr.mxu0 0.0
      %863 = vmatpush1.msra.mxu0 0.0
      %864 = vmatprep.subr.mxu0 0.0
      %865 = vmatpush1.msra.mxu0 0.0
      %866 = vmatprep.subr.mxu0 0.0
      %867 = vmatpush1.msra.mxu0 0.0
      %868 = vmatprep.subr.mxu0 0.0
      %869 = vmatpush1.msra.mxu0 0.0
      %870 = vmatprep.subr.mxu0 0.0
      %871 = vmatpush1.msra.mxu0 0.0
      %872 = vmatprep.subr.mxu0 0.0
      %873 = vmatpush1.msra.mxu0 0.0
      %874 = vmatprep.subr.mxu0 0.0
      %875 = vmatpush1.msra.mxu0 0.0
      %876 = vmatprep.subr.mxu0 0.0
      %877 = vmatpush1.msra.mxu0 0.0
      %878 = vmatprep.subr.mxu0 0.0
      %879 = vmatpush1.msra.mxu0 0.0
      %880 = vmatprep.subr.mxu0 0.0
      %881 = vmatpush1.msra.mxu0 0.0
      %882 = vmatprep.subr.mxu0 0.0
      %883 = vmatpush1.msra.mxu0 0.0
      %884 = vmatprep.subr.mxu0 0.0
      %885 = vmatpush1.msra.mxu0 0.0
      %886 = vmatprep.subr.mxu0 0.0
      %887 = vmatpush1.msra.mxu0 0.0
      %888 = vmatprep.subr.mxu0 0.0
      %889 = vmatpush1.msra.mxu0 0.0
      %890 = vmatprep.mubr.f32.mxu0 0.0
      %891 = vmatmul.mubr.f32.gmra.mrb[0].mxu0 %v824
      %v892 = vpop.f32.mrb[0].mxu0
      %v893 = vadd.f32 0.0, %v892
      %v894 = vpop.f32.mrb[0].mxu0
      %895 = vdwg.mxu0
      %v896 = vsel %vm340, %v893, 0.0
      %v897 = vrot.slane %v896, 4
      %v898 = vadd.f32 %v896, %v897
      %v899 = vrot.slane %v898, 2
      %v900 = vadd.f32 %v898, %v899
      %v901 = vrot.slane %v900, 1
      %v902 = vadd.f32 %v900, %v901
      %v903 = vmul.f32 %v902, %v618
      %v904 = vsub.f32 %v893, %v903
      %v905 = vmul.f32 %v904, %v904
      %v906 = vsel %vm340, %v905, 0.0
      %v907 = vrot.slane %v906, 4
      %v908 = vadd.f32 %v906, %v907
      %v909 = vrot.slane %v908, 2
      %v910 = vadd.f32 %v908, %v909
      %v911 = vrot.slane %v910, 1
      %v912 = vadd.f32 %v910, %v911
      %v913 = vmul.f32 %v912, %v618
      %v914 = vadd.f32 %v913, 1e-05
      %v915 = vrsqrt.pop %v914
      %v916 = vmul.f32 %v904, %v915
      %v917 = vlaneseq
      %v918 = vshrl.u32 %v917, 7
      %v919 = vadd.s32 %v918, 8
      %v920 = vadd.s32 %v918, 16
      %v921 = vadd.s32 %v918, 24
      %v922 = vlaneseq
      %v923 = vand.u32 %v922, 127
      %vm924 = vcmp.eq.s32.totalorder %v918, %v923
      %vm925 = vcmp.eq.s32.totalorder %v919, %v923
      %vm926 = vcmp.eq.s32.totalorder %v920, %v923
      %vm927 = vcmp.eq.s32.totalorder %v921, %v923
      %v928 = vsel %vm924, 1, 0
      %v929 = vsel %vm925, 1, 0
      %v930 = vsel %vm926, 1, 0
      %v931 = vsel %vm927, 1, 0
      %v932 = vcvt.s32.f32 %v928
      %v933 = vcvt.s32.f32 %v929
      %v934 = vcvt.s32.f32 %v930
      %v935 = vcvt.s32.f32 %v931
      %v936 = vmul.f32 %v632, %v632
      %v937 = vsel %vm340, %v936, 0.0
      %938 = vadd.xlane.f32.xlu0 %v937
      %v939 = vpop.xlane.xlu0 %938
      %v940 = vmax.f32 %v939, 1e-24
      %v941 = vrsqrt.pop %v940
      %v942 = vmul.f32 %v632, %v941
      %v943 = vmul.f32 %v822, %v822
      %v944 = vsel %vm340, %v943, 0.0
      %945 = vadd.xlane.f32.xlu0 %v944
      %v946 = vpop.xlane.xlu0 %945
      %v947 = vmax.f32 %v946, 1e-24
      %v948 = vrsqrt.pop %v947
      %v949 = vmul.f32 %v822, %v948
      %v950 = vmul.f32 %v726, %v726
      %v951 = vsel %vm340, %v950, 0.0
      %952 = vadd.xlane.f32.xlu0 %v951
      %v953 = vpop.xlane.xlu0 %952
      %v954 = vmax.f32 %v953, 1e-24
      %v955 = vrsqrt.pop %v954
      %v956 = vmul.f32 %v726, %v955
      %v957 = vmul.f32 %v916, %v916
      %v958 = vsel %vm340, %v957, 0.0
      %959 = vadd.xlane.f32.xlu0 %v958
      %v960 = vpop.xlane.xlu0 %959
      %v961 = vmax.f32 %v960, 1e-24
      %v962 = vrsqrt.pop %v961
      %v963 = vmul.f32 %v916, %v962
      %v964 = vsel %vm340, %v942, 0.0
      %v965 = vrot.slane %v964, 4
      %v966 = vadd.f32 %v964, %v965
      %v967 = vrot.slane %v966, 2
      %v968 = vadd.f32 %v966, %v967
      %v969 = vrot.slane %v968, 1
      %v970 = vadd.f32 %v968, %v969
      %v971 = vmul.f32 %v970, %v618
      %v972 = vsub.f32 %v942, %v971
      %v973 = vsel %vm340, %v949, 0.0
      %v974 = vrot.slane %v973, 4
      %v975 = vadd.f32 %v973, %v974
      %v976 = vrot.slane %v975, 2
      %v977 = vadd.f32 %v975, %v976
      %v978 = vrot.slane %v977, 1
      %v979 = vadd.f32 %v977, %v978
      %v980 = vmul.f32 %v979, %v618
      %v981 = vsub.f32 %v949, %v980
      %v982 = vsel %vm340, %v956, 0.0
      %v983 = vrot.slane %v982, 4
      %v984 = vadd.f32 %v982, %v983
      %v985 = vrot.slane %v984, 2
      %v986 = vadd.f32 %v984, %v985
      %v987 = vrot.slane %v986, 1
      %v988 = vadd.f32 %v986, %v987
      %v989 = vmul.f32 %v988, %v618
      %v990 = vsub.f32 %v956, %v989
      %v991 = vsel %vm340, %v963, 0.0
      %v992 = vrot.slane %v991, 4
      %v993 = vadd.f32 %v991, %v992
      %v994 = vrot.slane %v993, 2
      %v995 = vadd.f32 %v993, %v994
      %v996 = vrot.slane %v995, 1
      %v997 = vadd.f32 %v995, %v996
      %v998 = vmul.f32 %v997, %v618
      %v999 = vsub.f32 %v963, %v998
      %1000 = vxpose.xlu0.b32.start [1/16] %v942, 128
      %1001 = vxpose.xlu0.b32.cont [2/16] 0.0, 128
      %1002 = vxpose.xlu0.b32.cont [3/16] 0.0, 128
      %1003 = vxpose.xlu0.b32.cont [4/16] 0.0, 128
      %1004 = vxpose.xlu0.b32.cont [5/16] 0.0, 128
      %1005 = vxpose.xlu0.b32.cont [6/16] 0.0, 128
      %1006 = vxpose.xlu0.b32.cont [7/16] 0.0, 128
      %1007 = vxpose.xlu0.b32.cont [8/16] 0.0, 128
      %1008 = vxpose.xlu0.b32.cont [9/16] 0.0, 128
      %1009 = vxpose.xlu0.b32.cont [10/16] 0.0, 128
      %1010 = vxpose.xlu0.b32.cont [11/16] 0.0, 128
      %1011 = vxpose.xlu0.b32.cont [12/16] 0.0, 128
      %1012 = vxpose.xlu0.b32.cont [13/16] 0.0, 128
      %1013 = vxpose.xlu0.b32.cont [14/16] 0.0, 128
      %1014 = vxpose.xlu0.b32.cont [15/16] 0.0, 128
      %1015 = vxpose.xlu0.b32.end [16/16] 0.0, 128
      %v1016 = vpop.trf.xlu0
      %v1017 = vpop.trf.xlu0
      %v1018 = vpop.trf.xlu0
      %v1019 = vpop.trf.xlu0
      %v1020 = vpop.trf.xlu0
      %v1021 = vpop.trf.xlu0
      %v1022 = vpop.trf.xlu0
      %v1023 = vpop.trf.xlu0
      %v1024 = vpop.trf.xlu0
      %v1025 = vpop.trf.xlu0
      %v1026 = vpop.trf.xlu0
      %v1027 = vpop.trf.xlu0
      %v1028 = vpop.trf.xlu0
      %v1029 = vpop.trf.xlu0
      %v1030 = vpop.trf.xlu0
      %v1031 = vpop.trf.xlu0
      %1032 = vxpose.xlu0.b32.start [1/16] %v949, 128
      %1033 = vxpose.xlu0.b32.cont [2/16] 0.0, 128
      %1034 = vxpose.xlu0.b32.cont [3/16] 0.0, 128
      %1035 = vxpose.xlu0.b32.cont [4/16] 0.0, 128
      %1036 = vxpose.xlu0.b32.cont [5/16] 0.0, 128
      %1037 = vxpose.xlu0.b32.cont [6/16] 0.0, 128
      %1038 = vxpose.xlu0.b32.cont [7/16] 0.0, 128
      %1039 = vxpose.xlu0.b32.cont [8/16] 0.0, 128
      %1040 = vxpose.xlu0.b32.cont [9/16] 0.0, 128
      %1041 = vxpose.xlu0.b32.cont [10/16] 0.0, 128
      %1042 = vxpose.xlu0.b32.cont [11/16] 0.0, 128
      %1043 = vxpose.xlu0.b32.cont [12/16] 0.0, 128
      %1044 = vxpose.xlu0.b32.cont [13/16] 0.0, 128
      %1045 = vxpose.xlu0.b32.cont [14/16] 0.0, 128
      %1046 = vxpose.xlu0.b32.cont [15/16] 0.0, 128
      %1047 = vxpose.xlu0.b32.end [16/16] 0.0, 128
      %v1048 = vpop.trf.xlu0
      %v1049 = vpop.trf.xlu0
      %v1050 = vpop.trf.xlu0
      %v1051 = vpop.trf.xlu0
      %v1052 = vpop.trf.xlu0
      %v1053 = vpop.trf.xlu0
      %v1054 = vpop.trf.xlu0
      %v1055 = vpop.trf.xlu0
      %v1056 = vpop.trf.xlu0
      %v1057 = vpop.trf.xlu0
      %v1058 = vpop.trf.xlu0
      %v1059 = vpop.trf.xlu0
      %v1060 = vpop.trf.xlu0
      %v1061 = vpop.trf.xlu0
      %v1062 = vpop.trf.xlu0
      %v1063 = vpop.trf.xlu0
      %1064 = vxpose.xlu0.b32.start [1/16] %v956, 128
      %1065 = vxpose.xlu0.b32.cont [2/16] 0.0, 128
      %1066 = vxpose.xlu0.b32.cont [3/16] 0.0, 128
      %1067 = vxpose.xlu0.b32.cont [4/16] 0.0, 128
      %1068 = vxpose.xlu0.b32.cont [5/16] 0.0, 128
      %1069 = vxpose.xlu0.b32.cont [6/16] 0.0, 128
      %1070 = vxpose.xlu0.b32.cont [7/16] 0.0, 128
      %1071 = vxpose.xlu0.b32.cont [8/16] 0.0, 128
      %1072 = vxpose.xlu0.b32.cont [9/16] 0.0, 128
      %1073 = vxpose.xlu0.b32.cont [10/16] 0.0, 128
      %1074 = vxpose.xlu0.b32.cont [11/16] 0.0, 128
      %1075 = vxpose.xlu0.b32.cont [12/16] 0.0, 128
      %1076 = vxpose.xlu0.b32.cont [13/16] 0.0, 128
      %1077 = vxpose.xlu0.b32.cont [14/16] 0.0, 128
      %1078 = vxpose.xlu0.b32.cont [15/16] 0.0, 128
      %1079 = vxpose.xlu0.b32.end [16/16] 0.0, 128
      %v1080 = vpop.trf.xlu0
      %v1081 = vpop.trf.xlu0
      %v1082 = vpop.trf.xlu0
      %v1083 = vpop.trf.xlu0
      %v1084 = vpop.trf.xlu0
      %v1085 = vpop.trf.xlu0
      %v1086 = vpop.trf.xlu0
      %v1087 = vpop.trf.xlu0
      %v1088 = vpop.trf.xlu0
      %v1089 = vpop.trf.xlu0
      %v1090 = vpop.trf.xlu0
      %v1091 = vpop.trf.xlu0
      %v1092 = vpop.trf.xlu0
      %v1093 = vpop.trf.xlu0
      %v1094 = vpop.trf.xlu0
      %v1095 = vpop.trf.xlu0
      %1096 = vxpose.xlu0.b32.start [1/16] %v963, 128
      %1097 = vxpose.xlu0.b32.cont [2/16] 0.0, 128
      %1098 = vxpose.xlu0.b32.cont [3/16] 0.0, 128
      %1099 = vxpose.xlu0.b32.cont [4/16] 0.0, 128
      %1100 = vxpose.xlu0.b32.cont [5/16] 0.0, 128
      %1101 = vxpose.xlu0.b32.cont [6/16] 0.0, 128
      %1102 = vxpose.xlu0.b32.cont [7/16] 0.0, 128
      %1103 = vxpose.xlu0.b32.cont [8/16] 0.0, 128
      %1104 = vxpose.xlu0.b32.cont [9/16] 0.0, 128
      %1105 = vxpose.xlu0.b32.cont [10/16] 0.0, 128
      %1106 = vxpose.xlu0.b32.cont [11/16] 0.0, 128
      %1107 = vxpose.xlu0.b32.cont [12/16] 0.0, 128
      %1108 = vxpose.xlu0.b32.cont [13/16] 0.0, 128
      %1109 = vxpose.xlu0.b32.cont [14/16] 0.0, 128
      %1110 = vxpose.xlu0.b32.cont [15/16] 0.0, 128
      %1111 = vxpose.xlu0.b32.end [16/16] 0.0, 128
      %v1112 = vpop.trf.xlu0
      %v1113 = vpop.trf.xlu0
      %v1114 = vpop.trf.xlu0
      %v1115 = vpop.trf.xlu0
      %v1116 = vpop.trf.xlu0
      %v1117 = vpop.trf.xlu0
      %v1118 = vpop.trf.xlu0
      %v1119 = vpop.trf.xlu0
      %v1120 = vpop.trf.xlu0
      %v1121 = vpop.trf.xlu0
      %v1122 = vpop.trf.xlu0
      %v1123 = vpop.trf.xlu0
      %v1124 = vpop.trf.xlu0
      %v1125 = vpop.trf.xlu0
      %v1126 = vpop.trf.xlu0
      %v1127 = vpop.trf.xlu0
      %vm1128 = vcmask 64512
      %v1130 = vsel %vm1128, %v1048, 0
      %v1133 = vsel %vm1128, %v1049, 0
      %v1136 = vsel %vm1128, %v1050, 0
      %v1139 = vsel %vm1128, %v1051, 0
      %1141 = vmatprep.subr.mxu0 0.0
      %1142 = vmatpush1.msra.mxu0 %v990
      %1143 = vmatprep.subr.mxu0 0.0
      %1144 = vmatpush1.msra.mxu0 0.0
      %1145 = vmatprep.subr.mxu0 0.0
      %1146 = vmatpush1.msra.mxu0 0.0
      %1147 = vmatprep.subr.mxu0 0.0
      %1148 = vmatpush1.msra.mxu0 0.0
      %1149 = vmatprep.subr.mxu0 0.0
      %1150 = vmatpush1.msra.mxu0 0.0
      %1151 = vmatprep.subr.mxu0 0.0
      %1152 = vmatpush1.msra.mxu0 0.0
      %1153 = vmatprep.subr.mxu0 0.0
      %1154 = vmatpush1.msra.mxu0 0.0
      %1155 = vmatprep.subr.mxu0 0.0
      %1156 = vmatpush1.msra.mxu0 0.0
      %1157 = vmatprep.subr.mxu0 0.0
      %1158 = vmatpush1.msra.mxu0 0.0
      %1159 = vmatprep.subr.mxu0 0.0
      %1160 = vmatpush1.msra.mxu0 0.0
      %1161 = vmatprep.subr.mxu0 0.0
      %1162 = vmatpush1.msra.mxu0 0.0
      %1163 = vmatprep.subr.mxu0 0.0
      %1164 = vmatpush1.msra.mxu0 0.0
      %1165 = vmatprep.subr.mxu0 0.0
      %1166 = vmatpush1.msra.mxu0 0.0
      %1167 = vmatprep.subr.mxu0 0.0
      %1168 = vmatpush1.msra.mxu0 0.0
      %1169 = vmatprep.subr.mxu0 0.0
      %1170 = vmatpush1.msra.mxu0 0.0
      %1171 = vmatprep.subr.mxu0 0.0
      %1172 = vmatpush1.msra.mxu0 0.0
      %1173 = vmatprep.subr.mxu0 0.0
      %1174 = vmatpush1.msra.mxu0 0.0
      %1175 = vmatprep.subr.mxu0 0.0
      %1176 = vmatpush1.msra.mxu0 0.0
      %1177 = vmatprep.subr.mxu0 0.0
      %1178 = vmatpush1.msra.mxu0 0.0
      %1179 = vmatprep.subr.mxu0 0.0
      %1180 = vmatpush1.msra.mxu0 0.0
      %1181 = vmatprep.subr.mxu0 0.0
      %1182 = vmatpush1.msra.mxu0 0.0
      %1183 = vmatprep.subr.mxu0 0.0
      %1184 = vmatpush1.msra.mxu0 0.0
      %1185 = vmatprep.subr.mxu0 0.0
      %1186 = vmatpush1.msra.mxu0 0.0
      %1187 = vmatprep.subr.mxu0 0.0
      %1188 = vmatpush1.msra.mxu0 0.0
      %1189 = vmatprep.subr.mxu0 0.0
      %1190 = vmatpush1.msra.mxu0 0.0
      %1191 = vmatprep.subr.mxu0 0.0
      %1192 = vmatpush1.msra.mxu0 0.0
      %1193 = vmatprep.subr.mxu0 0.0
      %1194 = vmatpush1.msra.mxu0 0.0
      %1195 = vmatprep.subr.mxu0 0.0
      %1196 = vmatpush1.msra.mxu0 0.0
      %1197 = vmatprep.subr.mxu0 0.0
      %1198 = vmatpush1.msra.mxu0 0.0
      %1199 = vmatprep.subr.mxu0 0.0
      %1200 = vmatpush1.msra.mxu0 0.0
      %1201 = vmatprep.subr.mxu0 0.0
      %1202 = vmatpush1.msra.mxu0 0.0
      %1203 = vmatprep.subr.mxu0 0.0
      %1204 = vmatpush1.msra.mxu0 0.0
      %1205 = vmatprep.mubr.f32.mxu0 0.0
      %1206 = vmatmul.mubr.f32.gmra.mrb[0].mxu0 %v1130
      %v1207 = vpop.f32.mrb[0].mxu0
      %v1208 = vadd.f32 0.0, %v1207
      %v1209 = vpop.f32.mrb[0].mxu0
      %1210 = vmatprep.mubr.f32.mxu0 0.0
      %1211 = vmatmul.mubr.f32.gmra.mrb[0].mxu0 %v1133
      %v1212 = vpop.f32.mrb[0].mxu0
      %v1213 = vadd.f32 0.0, %v1212
      %v1214 = vpop.f32.mrb[0].mxu0
      %1215 = vmatprep.mubr.f32.mxu0 0.0
      %1216 = vmatmul.mubr.f32.gmra.mrb[0].mxu0 %v1136
      %v1217 = vpop.f32.mrb[0].mxu0
      %v1218 = vadd.f32 0.0, %v1217
      %v1219 = vpop.f32.mrb[0].mxu0
      %1220 = vmatprep.mubr.f32.mxu0 0.0
      %1221 = vmatmul.mubr.f32.gmra.mrb[0].mxu0 %v1139
      %v1222 = vpop.f32.mrb[0].mxu0
      %v1223 = vadd.f32 0.0, %v1222
      %v1224 = vpop.f32.mrb[0].mxu0
      %1225 = vdwg.mxu0
      %v1226 = vmul.f32 %v1208, 0.125
      %v1227 = vmul.f32 %v1213, 0.125
      %v1228 = vmul.f32 %v1218, 0.125
      %v1229 = vmul.f32 %v1223, 0.125
      %v1230 = vadd.f32 %v1226, %v932
      %v1231 = vadd.f32 %v1227, %v933
      %v1232 = vadd.f32 %v1228, %v934
      %v1233 = vadd.f32 %v1229, %v935
      %v1235 = vsel %vm1128, %v1016, 0
      %v1238 = vsel %vm1128, %v1017, 0
      %v1241 = vsel %vm1128, %v1018, 0
      %v1244 = vsel %vm1128, %v1019, 0
      %1246 = vmatprep.subr.mxu0 0.0
      %1247 = vmatpush1.msra.mxu0 %v999
      %1248 = vmatprep.subr.mxu0 0.0
      %1249 = vmatpush1.msra.mxu0 0.0
      %1250 = vmatprep.subr.mxu0 0.0
      %1251 = vmatpush1.msra.mxu0 0.0
      %1252 = vmatprep.subr.mxu0 0.0
      %1253 = vmatpush1.msra.mxu0 0.0
      %1254 = vmatprep.subr.mxu0 0.0
      %1255 = vmatpush1.msra.mxu0 0.0
      %1256 = vmatprep.subr.mxu0 0.0
      %1257 = vmatpush1.msra.mxu0 0.0
      %1258 = vmatprep.subr.mxu0 0.0
      %1259 = vmatpush1.msra.mxu0 0.0
      %1260 = vmatprep.subr.mxu0 0.0
      %1261 = vmatpush1.msra.mxu0 0.0
      %1262 = vmatprep.subr.mxu0 0.0
      %1263 = vmatpush1.msra.mxu0 0.0
      %1264 = vmatprep.subr.mxu0 0.0
      %1265 = vmatpush1.msra.mxu0 0.0
      %1266 = vmatprep.subr.mxu0 0.0
      %1267 = vmatpush1.msra.mxu0 0.0
      %1268 = vmatprep.subr.mxu0 0.0
      %1269 = vmatpush1.msra.mxu0 0.0
      %1270 = vmatprep.subr.mxu0 0.0
      %1271 = vmatpush1.msra.mxu0 0.0
      %1272 = vmatprep.subr.mxu0 0.0
      %1273 = vmatpush1.msra.mxu0 0.0
      %1274 = vmatprep.subr.mxu0 0.0
      %1275 = vmatpush1.msra.mxu0 0.0
      %1276 = vmatprep.subr.mxu0 0.0
      %1277 = vmatpush1.msra.mxu0 0.0
      %1278 = vmatprep.subr.mxu0 0.0
      %1279 = vmatpush1.msra.mxu0 0.0
      %1280 = vmatprep.subr.mxu0 0.0
      %1281 = vmatpush1.msra.mxu0 0.0
      %1282 = vmatprep.subr.mxu0 0.0
      %1283 = vmatpush1.msra.mxu0 0.0
      %1284 = vmatprep.subr.mxu0 0.0
      %1285 = vmatpush1.msra.mxu0 0.0
      %1286 = vmatprep.subr.mxu0 0.0
      %1287 = vmatpush1.msra.mxu0 0.0
      %1288 = vmatprep.subr.mxu0 0.0
      %1289 = vmatpush1.msra.mxu0 0.0
      %1290 = vmatprep.subr.mxu0 0.0
      %1291 = vmatpush1.msra.mxu0 0.0
      %1292 = vmatprep.subr.mxu0 0.0
      %1293 = vmatpush1.msra.mxu0 0.0
      %1294 = vmatprep.subr.mxu0 0.0
      %1295 = vmatpush1.msra.mxu0 0.0
      %1296 = vmatprep.subr.mxu0 0.0
      %1297 = vmatpush1.msra.mxu0 0.0
      %1298 = vmatprep.subr.mxu0 0.0
      %1299 = vmatpush1.msra.mxu0 0.0
      %1300 = vmatprep.subr.mxu0 0.0
      %1301 = vmatpush1.msra.mxu0 0.0
      %1302 = vmatprep.subr.mxu0 0.0
      %1303 = vmatpush1.msra.mxu0 0.0
      %1304 = vmatprep.subr.mxu0 0.0
      %1305 = vmatpush1.msra.mxu0 0.0
      %1306 = vmatprep.subr.mxu0 0.0
      %1307 = vmatpush1.msra.mxu0 0.0
      %1308 = vmatprep.subr.mxu0 0.0
      %1309 = vmatpush1.msra.mxu0 0.0
      %1310 = vmatprep.mubr.f32.mxu0 0.0
      %1311 = vmatmul.mubr.f32.gmra.mrb[0].mxu0 %v1235
      %v1312 = vpop.f32.mrb[0].mxu0
      %v1313 = vadd.f32 0.0, %v1312
      %v1314 = vpop.f32.mrb[0].mxu0
      %1315 = vmatprep.mubr.f32.mxu0 0.0
      %1316 = vmatmul.mubr.f32.gmra.mrb[0].mxu0 %v1238
      %v1317 = vpop.f32.mrb[0].mxu0
      %v1318 = vadd.f32 0.0, %v1317
      %v1319 = vpop.f32.mrb[0].mxu0
      %1320 = vmatprep.mubr.f32.mxu0 0.0
      %1321 = vmatmul.mubr.f32.gmra.mrb[0].mxu0 %v1241
      %v1322 = vpop.f32.mrb[0].mxu0
      %v1323 = vadd.f32 0.0, %v1322
      %v1324 = vpop.f32.mrb[0].mxu0
      %1325 = vmatprep.mubr.f32.mxu0 0.0
      %1326 = vmatmul.mubr.f32.gmra.mrb[0].mxu0 %v1244
      %v1327 = vpop.f32.mrb[0].mxu0
      %v1328 = vadd.f32 0.0, %v1327
      %v1329 = vpop.f32.mrb[0].mxu0
      %1330 = vdwg.mxu0
      %v1331 = vmul.f32 %v1313, 0.125
      %v1332 = vmul.f32 %v1318, 0.125
      %v1333 = vmul.f32 %v1323, 0.125
      %v1334 = vmul.f32 %v1328, 0.125
      %v1335 = vadd.f32 %v1331, %v932
      %v1336 = vadd.f32 %v1332, %v933
      %v1337 = vadd.f32 %v1333, %v934
      %v1338 = vadd.f32 %v1334, %v935
      %1339 = vmatprep.subr.mxu0 0.0
      %1340 = vmatpush1.msra.mxu0 %v981
      %1341 = vmatprep.subr.mxu0 0.0
      %1342 = vmatpush1.msra.mxu0 0.0
      %1343 = vmatprep.subr.mxu0 0.0
      %1344 = vmatpush1.msra.mxu0 0.0
      %1345 = vmatprep.subr.mxu0 0.0
      %1346 = vmatpush1.msra.mxu0 0.0
      %1347 = vmatprep.subr.mxu0 0.0
      %1348 = vmatpush1.msra.mxu0 0.0
      %1349 = vmatprep.subr.mxu0 0.0
      %1350 = vmatpush1.msra.mxu0 0.0
      %1351 = vmatprep.subr.mxu0 0.0
      %1352 = vmatpush1.msra.mxu0 0.0
      %1353 = vmatprep.subr.mxu0 0.0
      %1354 = vmatpush1.msra.mxu0 0.0
      %1355 = vmatprep.subr.mxu0 0.0
      %1356 = vmatpush1.msra.mxu0 0.0
      %1357 = vmatprep.subr.mxu0 0.0
      %1358 = vmatpush1.msra.mxu0 0.0
      %1359 = vmatprep.subr.mxu0 0.0
      %1360 = vmatpush1.msra.mxu0 0.0
      %1361 = vmatprep.subr.mxu0 0.0
      %1362 = vmatpush1.msra.mxu0 0.0
      %1363 = vmatprep.subr.mxu0 0.0
      %1364 = vmatpush1.msra.mxu0 0.0
      %1365 = vmatprep.subr.mxu0 0.0
      %1366 = vmatpush1.msra.mxu0 0.0
      %1367 = vmatprep.subr.mxu0 0.0
      %1368 = vmatpush1.msra.mxu0 0.0
      %1369 = vmatprep.subr.mxu0 0.0
      %1370 = vmatpush1.msra.mxu0 0.0
      %1371 = vmatprep.subr.mxu0 0.0
      %1372 = vmatpush1.msra.mxu0 0.0
      %1373 = vmatprep.subr.mxu0 0.0
      %1374 = vmatpush1.msra.mxu0 0.0
      %1375 = vmatprep.subr.mxu0 0.0
      %1376 = vmatpush1.msra.mxu0 0.0
      %1377 = vmatprep.subr.mxu0 0.0
      %1378 = vmatpush1.msra.mxu0 0.0
      %1379 = vmatprep.subr.mxu0 0.0
      %1380 = vmatpush1.msra.mxu0 0.0
      %1381 = vmatprep.subr.mxu0 0.0
      %1382 = vmatpush1.msra.mxu0 0.0
      %1383 = vmatprep.subr.mxu0 0.0
      %1384 = vmatpush1.msra.mxu0 0.0
      %1385 = vmatprep.subr.mxu0 0.0
      %1386 = vmatpush1.msra.mxu0 0.0
      %1387 = vmatprep.subr.mxu0 0.0
      %1388 = vmatpush1.msra.mxu0 0.0
      %1389 = vmatprep.subr.mxu0 0.0
      %1390 = vmatpush1.msra.mxu0 0.0
      %1391 = vmatprep.subr.mxu0 0.0
      %1392 = vmatpush1.msra.mxu0 0.0
      %1393 = vmatprep.subr.mxu0 0.0
      %1394 = vmatpush1.msra.mxu0 0.0
      %1395 = vmatprep.subr.mxu0 0.0
      %1396 = vmatpush1.msra.mxu0 0.0
      %1397 = vmatprep.subr.mxu0 0.0
      %1398 = vmatpush1.msra.mxu0 0.0
      %1399 = vmatprep.subr.mxu0 0.0
      %1400 = vmatpush1.msra.mxu0 0.0
      %1401 = vmatprep.subr.mxu0 0.0
      %1402 = vmatpush1.msra.mxu0 0.0
      %1403 = vmatprep.mubr.f32.mxu0 0.0
      %1404 = vmatmul.mubr.f32.gmra.mrb[0].mxu0 %v1130
      %v1405 = vpop.f32.mrb[0].mxu0
      %v1406 = vadd.f32 0.0, %v1405
      %v1407 = vpop.f32.mrb[0].mxu0
      %1408 = vmatprep.mubr.f32.mxu0 0.0
      %1409 = vmatmul.mubr.f32.gmra.mrb[0].mxu0 %v1133
      %v1410 = vpop.f32.mrb[0].mxu0
      %v1411 = vadd.f32 0.0, %v1410
      %v1412 = vpop.f32.mrb[0].mxu0
      %1413 = vmatprep.mubr.f32.mxu0 0.0
      %1414 = vmatmul.mubr.f32.gmra.mrb[0].mxu0 %v1136
      %v1415 = vpop.f32.mrb[0].mxu0
      %v1416 = vadd.f32 0.0, %v1415
      %v1417 = vpop.f32.mrb[0].mxu0
      %1418 = vmatprep.mubr.f32.mxu0 0.0
      %1419 = vmatmul.mubr.f32.gmra.mrb[0].mxu0 %v1139
      %v1420 = vpop.f32.mrb[0].mxu0
      %v1421 = vadd.f32 0.0, %v1420
      %v1422 = vpop.f32.mrb[0].mxu0
      %1423 = vdwg.mxu0
      %v1424 = vmul.f32 %v1406, 0.125
      %v1425 = vmul.f32 %v1411, 0.125
      %v1426 = vmul.f32 %v1416, 0.125
      %v1427 = vmul.f32 %v1421, 0.125
      %v1428 = vadd.f32 %v1424, %v932
      %v1429 = vadd.f32 %v1425, %v933
      %v1430 = vadd.f32 %v1426, %v934
      %v1431 = vadd.f32 %v1427, %v935
      %v1433 = vsel %vm1128, %v1080, 0
      %v1436 = vsel %vm1128, %v1081, 0
      %v1439 = vsel %vm1128, %v1082, 0
      %v1442 = vsel %vm1128, %v1083, 0
      %1444 = vmatprep.subr.mxu0 0.0
      %1445 = vmatpush1.msra.mxu0 %v990
      %1446 = vmatprep.subr.mxu0 0.0
      %1447 = vmatpush1.msra.mxu0 0.0
      %1448 = vmatprep.subr.mxu0 0.0
      %1449 = vmatpush1.msra.mxu0 0.0
      %1450 = vmatprep.subr.mxu0 0.0
      %1451 = vmatpush1.msra.mxu0 0.0
      %1452 = vmatprep.subr.mxu0 0.0
      %1453 = vmatpush1.msra.mxu0 0.0
      %1454 = vmatprep.subr.mxu0 0.0
      %1455 = vmatpush1.msra.mxu0 0.0
      %1456 = vmatprep.subr.mxu0 0.0
      %1457 = vmatpush1.msra.mxu0 0.0
      %1458 = vmatprep.subr.mxu0 0.0
      %1459 = vmatpush1.msra.mxu0 0.0
      %1460 = vmatprep.subr.mxu0 0.0
      %1461 = vmatpush1.msra.mxu0 0.0
      %1462 = vmatprep.subr.mxu0 0.0
      %1463 = vmatpush1.msra.mxu0 0.0
      %1464 = vmatprep.subr.mxu0 0.0
      %1465 = vmatpush1.msra.mxu0 0.0
      %1466 = vmatprep.subr.mxu0 0.0
      %1467 = vmatpush1.msra.mxu0 0.0
      %1468 = vmatprep.subr.mxu0 0.0
      %1469 = vmatpush1.msra.mxu0 0.0
      %1470 = vmatprep.subr.mxu0 0.0
      %1471 = vmatpush1.msra.mxu0 0.0
      %1472 = vmatprep.subr.mxu0 0.0
      %1473 = vmatpush1.msra.mxu0 0.0
      %1474 = vmatprep.subr.mxu0 0.0
      %1475 = vmatpush1.msra.mxu0 0.0
      %1476 = vmatprep.subr.mxu0 0.0
      %1477 = vmatpush1.msra.mxu0 0.0
      %1478 = vmatprep.subr.mxu0 0.0
      %1479 = vmatpush1.msra.mxu0 0.0
      %1480 = vmatprep.subr.mxu0 0.0
      %1481 = vmatpush1.msra.mxu0 0.0
      %1482 = vmatprep.subr.mxu0 0.0
      %1483 = vmatpush1.msra.mxu0 0.0
      %1484 = vmatprep.subr.mxu0 0.0
      %1485 = vmatpush1.msra.mxu0 0.0
      %1486 = vmatprep.subr.mxu0 0.0
      %1487 = vmatpush1.msra.mxu0 0.0
      %1488 = vmatprep.subr.mxu0 0.0
      %1489 = vmatpush1.msra.mxu0 0.0
      %1490 = vmatprep.subr.mxu0 0.0
      %1491 = vmatpush1.msra.mxu0 0.0
      %1492 = vmatprep.subr.mxu0 0.0
      %1493 = vmatpush1.msra.mxu0 0.0
      %1494 = vmatprep.subr.mxu0 0.0
      %1495 = vmatpush1.msra.mxu0 0.0
      %1496 = vmatprep.subr.mxu0 0.0
      %1497 = vmatpush1.msra.mxu0 0.0
      %1498 = vmatprep.subr.mxu0 0.0
      %1499 = vmatpush1.msra.mxu0 0.0
      %1500 = vmatprep.subr.mxu0 0.0
      %1501 = vmatpush1.msra.mxu0 0.0
      %1502 = vmatprep.subr.mxu0 0.0
      %1503 = vmatpush1.msra.mxu0 0.0
      %1504 = vmatprep.subr.mxu0 0.0
      %1505 = vmatpush1.msra.mxu0 0.0
      %1506 = vmatprep.subr.mxu0 0.0
      %1507 = vmatpush1.msra.mxu0 0.0
      %1508 = vmatprep.mubr.f32.mxu0 0.0
      %1509 = vmatmul.mubr.f32.gmra.mrb[0].mxu0 %v1433
      %v1510 = vpop.f32.mrb[0].mxu0
      %v1511 = vadd.f32 0.0, %v1510
      %v1512 = vpop.f32.mrb[0].mxu0
      %1513 = vmatprep.mubr.f32.mxu0 0.0
      %1514 = vmatmul.mubr.f32.gmra.mrb[0].mxu0 %v1436
      %v1515 = vpop.f32.mrb[0].mxu0
      %v1516 = vadd.f32 0.0, %v1515
      %v1517 = vpop.f32.mrb[0].mxu0
      %1518 = vmatprep.mubr.f32.mxu0 0.0
      %1519 = vmatmul.mubr.f32.gmra.mrb[0].mxu0 %v1439
      %v1520 = vpop.f32.mrb[0].mxu0
      %v1521 = vadd.f32 0.0, %v1520
      %v1522 = vpop.f32.mrb[0].mxu0
      %1523 = vmatprep.mubr.f32.mxu0 0.0
      %1524 = vmatmul.mubr.f32.gmra.mrb[0].mxu0 %v1442
      %v1525 = vpop.f32.mrb[0].mxu0
      %v1526 = vadd.f32 0.0, %v1525
      %v1527 = vpop.f32.mrb[0].mxu0
      %1528 = vdwg.mxu0
      %v1529 = vmul.f32 %v1511, 0.125
      %v1530 = vmul.f32 %v1516, 0.125
      %v1531 = vmul.f32 %v1521, 0.125
      %v1532 = vmul.f32 %v1526, 0.125
      %v1533 = vadd.f32 %v1529, %v932
      %v1534 = vadd.f32 %v1530, %v933
      %v1535 = vadd.f32 %v1531, %v934
      %v1536 = vadd.f32 %v1532, %v935
      %1537 = vmatprep.subr.mxu0 0.0
      %1538 = vmatpush1.msra.mxu0 %v972
      %1539 = vmatprep.subr.mxu0 0.0
      %1540 = vmatpush1.msra.mxu0 0.0
      %1541 = vmatprep.subr.mxu0 0.0
      %1542 = vmatpush1.msra.mxu0 0.0
      %1543 = vmatprep.subr.mxu0 0.0
      %1544 = vmatpush1.msra.mxu0 0.0
      %1545 = vmatprep.subr.mxu0 0.0
      %1546 = vmatpush1.msra.mxu0 0.0
      %1547 = vmatprep.subr.mxu0 0.0
      %1548 = vmatpush1.msra.mxu0 0.0
      %1549 = vmatprep.subr.mxu0 0.0
      %1550 = vmatpush1.msra.mxu0 0.0
      %1551 = vmatprep.subr.mxu0 0.0
      %1552 = vmatpush1.msra.mxu0 0.0
      %1553 = vmatprep.subr.mxu0 0.0
      %1554 = vmatpush1.msra.mxu0 0.0
      %1555 = vmatprep.subr.mxu0 0.0
      %1556 = vmatpush1.msra.mxu0 0.0
      %1557 = vmatprep.subr.mxu0 0.0
      %1558 = vmatpush1.msra.mxu0 0.0
      %1559 = vmatprep.subr.mxu0 0.0
      %1560 = vmatpush1.msra.mxu0 0.0
      %1561 = vmatprep.subr.mxu0 0.0
      %1562 = vmatpush1.msra.mxu0 0.0
      %1563 = vmatprep.subr.mxu0 0.0
      %1564 = vmatpush1.msra.mxu0 0.0
      %1565 = vmatprep.subr.mxu0 0.0
      %1566 = vmatpush1.msra.mxu0 0.0
      %1567 = vmatprep.subr.mxu0 0.0
      %1568 = vmatpush1.msra.mxu0 0.0
      %1569 = vmatprep.subr.mxu0 0.0
      %1570 = vmatpush1.msra.mxu0 0.0
      %1571 = vmatprep.subr.mxu0 0.0
      %1572 = vmatpush1.msra.mxu0 0.0
      %1573 = vmatprep.subr.mxu0 0.0
      %1574 = vmatpush1.msra.mxu0 0.0
      %1575 = vmatprep.subr.mxu0 0.0
      %1576 = vmatpush1.msra.mxu0 0.0
      %1577 = vmatprep.subr.mxu0 0.0
      %1578 = vmatpush1.msra.mxu0 0.0
      %1579 = vmatprep.subr.mxu0 0.0
      %1580 = vmatpush1.msra.mxu0 0.0
      %1581 = vmatprep.subr.mxu0 0.0
      %1582 = vmatpush1.msra.mxu0 0.0
      %1583 = vmatprep.subr.mxu0 0.0
      %1584 = vmatpush1.msra.mxu0 0.0
      %1585 = vmatprep.subr.mxu0 0.0
      %1586 = vmatpush1.msra.mxu0 0.0
      %1587 = vmatprep.subr.mxu0 0.0
      %1588 = vmatpush1.msra.mxu0 0.0
      %1589 = vmatprep.subr.mxu0 0.0
      %1590 = vmatpush1.msra.mxu0 0.0
      %1591 = vmatprep.subr.mxu0 0.0
      %1592 = vmatpush1.msra.mxu0 0.0
      %1593 = vmatprep.subr.mxu0 0.0
      %1594 = vmatpush1.msra.mxu0 0.0
      %1595 = vmatprep.subr.mxu0 0.0
      %1596 = vmatpush1.msra.mxu0 0.0
      %1597 = vmatprep.subr.mxu0 0.0
      %1598 = vmatpush1.msra.mxu0 0.0
      %1599 = vmatprep.subr.mxu0 0.0
      %1600 = vmatpush1.msra.mxu0 0.0
      %1601 = vmatprep.mubr.f32.mxu0 0.0
      %1602 = vmatmul.mubr.f32.gmra.mrb[0].mxu0 %v1235
      %v1603 = vpop.f32.mrb[0].mxu0
      %v1604 = vadd.f32 0.0, %v1603
      %v1605 = vpop.f32.mrb[0].mxu0
      %1606 = vmatprep.mubr.f32.mxu0 0.0
      %1607 = vmatmul.mubr.f32.gmra.mrb[0].mxu0 %v1238
      %v1608 = vpop.f32.mrb[0].mxu0
      %v1609 = vadd.f32 0.0, %v1608
      %v1610 = vpop.f32.mrb[0].mxu0
      %1611 = vmatprep.mubr.f32.mxu0 0.0
      %1612 = vmatmul.mubr.f32.gmra.mrb[0].mxu0 %v1241
      %v1613 = vpop.f32.mrb[0].mxu0
      %v1614 = vadd.f32 0.0, %v1613
      %v1615 = vpop.f32.mrb[0].mxu0
      %1616 = vmatprep.mubr.f32.mxu0 0.0
      %1617 = vmatmul.mubr.f32.gmra.mrb[0].mxu0 %v1244
      %v1618 = vpop.f32.mrb[0].mxu0
      %v1619 = vadd.f32 0.0, %v1618
      %v1620 = vpop.f32.mrb[0].mxu0
      %1621 = vdwg.mxu0
      %v1622 = vmul.f32 %v1604, 0.125
      %v1623 = vmul.f32 %v1609, 0.125
      %v1624 = vmul.f32 %v1614, 0.125
      %v1625 = vmul.f32 %v1619, 0.125
      %v1626 = vadd.f32 %v1622, %v932
      %v1627 = vadd.f32 %v1623, %v933
      %v1628 = vadd.f32 %v1624, %v934
      %v1629 = vadd.f32 %v1625, %v935
      %v1631 = vsel %vm1128, %v1112, 0
      %v1634 = vsel %vm1128, %v1113, 0
      %v1637 = vsel %vm1128, %v1114, 0
      %v1640 = vsel %vm1128, %v1115, 0
      %1642 = vmatprep.subr.mxu0 0.0
      %1643 = vmatpush1.msra.mxu0 %v999
      %1644 = vmatprep.subr.mxu0 0.0
      %1645 = vmatpush1.msra.mxu0 0.0
      %1646 = vmatprep.subr.mxu0 0.0
      %1647 = vmatpush1.msra.mxu0 0.0
      %1648 = vmatprep.subr.mxu0 0.0
      %1649 = vmatpush1.msra.mxu0 0.0
      %1650 = vmatprep.subr.mxu0 0.0
      %1651 = vmatpush1.msra.mxu0 0.0
      %1652 = vmatprep.subr.mxu0 0.0
      %1653 = vmatpush1.msra.mxu0 0.0
      %1654 = vmatprep.subr.mxu0 0.0
      %1655 = vmatpush1.msra.mxu0 0.0
      %1656 = vmatprep.subr.mxu0 0.0
      %1657 = vmatpush1.msra.mxu0 0.0
      %1658 = vmatprep.subr.mxu0 0.0
      %1659 = vmatpush1.msra.mxu0 0.0
      %1660 = vmatprep.subr.mxu0 0.0
      %1661 = vmatpush1.msra.mxu0 0.0
      %1662 = vmatprep.subr.mxu0 0.0
      %1663 = vmatpush1.msra.mxu0 0.0
      %1664 = vmatprep.subr.mxu0 0.0
      %1665 = vmatpush1.msra.mxu0 0.0
      %1666 = vmatprep.subr.mxu0 0.0
      %1667 = vmatpush1.msra.mxu0 0.0
      %1668 = vmatprep.subr.mxu0 0.0
      %1669 = vmatpush1.msra.mxu0 0.0
      %1670 = vmatprep.subr.mxu0 0.0
      %1671 = vmatpush1.msra.mxu0 0.0
      %1672 = vmatprep.subr.mxu0 0.0
      %1673 = vmatpush1.msra.mxu0 0.0
      %1674 = vmatprep.subr.mxu0 0.0
      %1675 = vmatpush1.msra.mxu0 0.0
      %1676 = vmatprep.subr.mxu0 0.0
      %1677 = vmatpush1.msra.mxu0 0.0
      %1678 = vmatprep.subr.mxu0 0.0
      %1679 = vmatpush1.msra.mxu0 0.0
      %1680 = vmatprep.subr.mxu0 0.0
      %1681 = vmatpush1.msra.mxu0 0.0
      %1682 = vmatprep.subr.mxu0 0.0
      %1683 = vmatpush1.msra.mxu0 0.0
      %1684 = vmatprep.subr.mxu0 0.0
      %1685 = vmatpush1.msra.mxu0 0.0
      %1686 = vmatprep.subr.mxu0 0.0
      %1687 = vmatpush1.msra.mxu0 0.0
      %1688 = vmatprep.subr.mxu0 0.0
      %1689 = vmatpush1.msra.mxu0 0.0
      %1690 = vmatprep.subr.mxu0 0.0
      %1691 = vmatpush1.msra.mxu0 0.0
      %1692 = vmatprep.subr.mxu0 0.0
      %1693 = vmatpush1.msra.mxu0 0.0
      %1694 = vmatprep.subr.mxu0 0.0
      %1695 = vmatpush1.msra.mxu0 0.0
      %1696 = vmatprep.subr.mxu0 0.0
      %1697 = vmatpush1.msra.mxu0 0.0
      %1698 = vmatprep.subr.mxu0 0.0
      %1699 = vmatpush1.msra.mxu0 0.0
      %1700 = vmatprep.subr.mxu0 0.0
      %1701 = vmatpush1.msra.mxu0 0.0
      %1702 = vmatprep.subr.mxu0 0.0
      %1703 = vmatpush1.msra.mxu0 0.0
      %1704 = vmatprep.subr.mxu0 0.0
      %1705 = vmatpush1.msra.mxu0 0.0
      %1706 = vmatprep.mubr.f32.mxu0 0.0
      %1707 = vmatmul.mubr.f32.gmra.mrb[0].mxu0 %v1631
      %v1708 = vpop.f32.mrb[0].mxu0
      %v1709 = vadd.f32 0.0, %v1708
      %v1710 = vpop.f32.mrb[0].mxu0
      %1711 = vmatprep.mubr.f32.mxu0 0.0
      %1712 = vmatmul.mubr.f32.gmra.mrb[0].mxu0 %v1634
      %v1713 = vpop.f32.mrb[0].mxu0
      %v1714 = vadd.f32 0.0, %v1713
      %v1715 = vpop.f32.mrb[0].mxu0
      %1716 = vmatprep.mubr.f32.mxu0 0.0
      %1717 = vmatmul.mubr.f32.gmra.mrb[0].mxu0 %v1637
      %v1718 = vpop.f32.mrb[0].mxu0
      %v1719 = vadd.f32 0.0, %v1718
      %v1720 = vpop.f32.mrb[0].mxu0
      %1721 = vmatprep.mubr.f32.mxu0 0.0
      %1722 = vmatmul.mubr.f32.gmra.mrb[0].mxu0 %v1640
      %v1723 = vpop.f32.mrb[0].mxu0
      %v1724 = vadd.f32 0.0, %v1723
      %v1725 = vpop.f32.mrb[0].mxu0
      %1726 = vdwg.mxu0
      %v1727 = vmul.f32 %v1709, 0.125
      %v1728 = vmul.f32 %v1714, 0.125
      %v1729 = vmul.f32 %v1719, 0.125
      %v1730 = vmul.f32 %v1724, 0.125
      %v1731 = vadd.f32 %v1727, %v932
      %v1732 = vadd.f32 %v1728, %v933
      %v1733 = vadd.f32 %v1729, %v934
      %v1734 = vadd.f32 %v1730, %v935
      %v1735 = vsub.f32 %v1230, %v932
      %v1736 = vsub.f32 %v1231, %v933
      %v1737 = vsub.f32 %v1232, %v934
      %v1738 = vsub.f32 %v1233, %v935
      %v1739 = vsub.f32 %v1335, %v932
      %v1740 = vsub.f32 %v1336, %v933
      %v1741 = vsub.f32 %v1337, %v934
      %v1742 = vsub.f32 %v1338, %v935
      %v1743 = vsub.f32 %v1533, %v932
      %v1744 = vsub.f32 %v1534, %v933
      %v1745 = vsub.f32 %v1535, %v934
      %v1746 = vsub.f32 %v1536, %v935
      %v1747 = vsub.f32 %v1731, %v932
      %v1748 = vsub.f32 %v1732, %v933
      %v1749 = vsub.f32 %v1733, %v934
      %v1750 = vsub.f32 %v1734, %v935
      %v1751 = vadd.f32 %v1735, 0.0
      %v1752 = vadd.f32 %v1736, 0.0
      %v1753 = vadd.f32 %v1737, 0.0
      %v1754 = vadd.f32 %v1738, 0.0
      %v1755 = vadd.f32 %v1739, 0.0
      %v1756 = vadd.f32 %v1740, 0.0
      %v1757 = vadd.f32 %v1741, 0.0
      %v1758 = vadd.f32 %v1742, 0.0
      %v1759 = vadd.f32 %v1743, 0.0
      %v1760 = vadd.f32 %v1744, 0.0
      %v1761 = vadd.f32 %v1745, 0.0
      %v1762 = vadd.f32 %v1746, 0.0
      %v1763 = vadd.f32 %v1747, 0.0
      %v1764 = vadd.f32 %v1748, 0.0
      %v1765 = vadd.f32 %v1749, 0.0
      %v1766 = vadd.f32 %v1750, 0.0
      %v1768 = vsel %vm340, %v1735, 0
      %v1771 = vsel %vm340, %v1736, 0
      %v1774 = vsel %vm340, %v1737, 0
      %v1777 = vsel %vm340, %v1738, 0
      %1779 = vmatprep.subr.mxu0 0.0
      %1780 = vmatpush1.msra.mxu0 %v1735
      %1781 = vmatprep.subr.mxu0 0.0
      %1782 = vmatpush1.msra.mxu0 %v1736
      %1783 = vmatprep.subr.mxu0 0.0
      %1784 = vmatpush1.msra.mxu0 %v1737
      %1785 = vmatprep.subr.mxu0 0.0
      %1786 = vmatpush1.msra.mxu0 %v1738
      %1787 = vmatprep.subr.mxu0 0.0
      %1788 = vmatpush1.msra.mxu0 0.0
      %1789 = vmatprep.subr.mxu0 0.0
      %1790 = vmatpush1.msra.mxu0 0.0
      %1791 = vmatprep.subr.mxu0 0.0
      %1792 = vmatpush1.msra.mxu0 0.0
      %1793 = vmatprep.subr.mxu0 0.0
      %1794 = vmatpush1.msra.mxu0 0.0
      %1795 = vmatprep.subr.mxu0 0.0
      %1796 = vmatpush1.msra.mxu0 0.0
      %1797 = vmatprep.subr.mxu0 0.0
      %1798 = vmatpush1.msra.mxu0 0.0
      %1799 = vmatprep.subr.mxu0 0.0
      %1800 = vmatpush1.msra.mxu0 0.0
      %1801 = vmatprep.subr.mxu0 0.0
      %1802 = vmatpush1.msra.mxu0 0.0
      %1803 = vmatprep.subr.mxu0 0.0
      %1804 = vmatpush1.msra.mxu0 0.0
      %1805 = vmatprep.subr.mxu0 0.0
      %1806 = vmatpush1.msra.mxu0 0.0
      %1807 = vmatprep.subr.mxu0 0.0
      %1808 = vmatpush1.msra.mxu0 0.0
      %1809 = vmatprep.subr.mxu0 0.0
      %1810 = vmatpush1.msra.mxu0 0.0
      %1811 = vmatprep.subr.mxu0 0.0
      %1812 = vmatpush1.msra.mxu0 0.0
      %1813 = vmatprep.subr.mxu0 0.0
      %1814 = vmatpush1.msra.mxu0 0.0
      %1815 = vmatprep.subr.mxu0 0.0
      %1816 = vmatpush1.msra.mxu0 0.0
      %1817 = vmatprep.subr.mxu0 0.0
      %1818 = vmatpush1.msra.mxu0 0.0
      %1819 = vmatprep.subr.mxu0 0.0
      %1820 = vmatpush1.msra.mxu0 0.0
      %1821 = vmatprep.subr.mxu0 0.0
      %1822 = vmatpush1.msra.mxu0 0.0
      %1823 = vmatprep.subr.mxu0 0.0
      %1824 = vmatpush1.msra.mxu0 0.0
      %1825 = vmatprep.subr.mxu0 0.0
      %1826 = vmatpush1.msra.mxu0 0.0
      %1827 = vmatprep.subr.mxu0 0.0
      %1828 = vmatpush1.msra.mxu0 0.0
      %1829 = vmatprep.subr.mxu0 0.0
      %1830 = vmatpush1.msra.mxu0 0.0
      %1831 = vmatprep.subr.mxu0 0.0
      %1832 = vmatpush1.msra.mxu0 0.0
      %1833 = vmatprep.subr.mxu0 0.0
      %1834 = vmatpush1.msra.mxu0 0.0
      %1835 = vmatprep.subr.mxu0 0.0
      %1836 = vmatpush1.msra.mxu0 0.0
      %1837 = vmatprep.subr.mxu0 0.0
      %1838 = vmatpush1.msra.mxu0 0.0
      %1839 = vmatprep.subr.mxu0 0.0
      %1840 = vmatpush1.msra.mxu0 0.0
      %1841 = vmatprep.subr.mxu0 0.0
      %1842 = vmatpush1.msra.mxu0 0.0
      %1843 = vmatprep.mubr.f32.mxu0 0.0
      %1844 = vmatmul.mubr.f32.gmra.mrb[0].mxu0 %v1768
      %v1845 = vpop.f32.mrb[0].mxu0
      %v1846 = vadd.f32 0.0, %v1845
      %v1847 = vpop.f32.mrb[0].mxu0
      %1848 = vmatprep.mubr.f32.mxu0 0.0
      %1849 = vmatmul.mubr.f32.gmra.mrb[0].mxu0 %v1771
      %v1850 = vpop.f32.mrb[0].mxu0
      %v1851 = vadd.f32 0.0, %v1850
      %v1852 = vpop.f32.mrb[0].mxu0
      %1853 = vmatprep.mubr.f32.mxu0 0.0
      %1854 = vmatmul.mubr.f32.gmra.mrb[0].mxu0 %v1774
      %v1855 = vpop.f32.mrb[0].mxu0
      %v1856 = vadd.f32 0.0, %v1855
      %v1857 = vpop.f32.mrb[0].mxu0
      %1858 = vmatprep.mubr.f32.mxu0 0.0
      %1859 = vmatmul.mubr.f32.gmra.mrb[0].mxu0 %v1777
      %v1860 = vpop.f32.mrb[0].mxu0
      %v1861 = vadd.f32 0.0, %v1860
      %v1862 = vpop.f32.mrb[0].mxu0
      %1863 = vdwg.mxu0
      %v1865 = vsel %vm340, %v1739, 0
      %v1868 = vsel %vm340, %v1740, 0
      %v1871 = vsel %vm340, %v1741, 0
      %v1874 = vsel %vm340, %v1742, 0
      %1876 = vmatprep.subr.mxu0 0.0
      %1877 = vmatpush1.msra.mxu0 %v1739
      %1878 = vmatprep.subr.mxu0 0.0
      %1879 = vmatpush1.msra.mxu0 %v1740
      %1880 = vmatprep.subr.mxu0 0.0
      %1881 = vmatpush1.msra.mxu0 %v1741
      %1882 = vmatprep.subr.mxu0 0.0
      %1883 = vmatpush1.msra.mxu0 %v1742
      %1884 = vmatprep.subr.mxu0 0.0
      %1885 = vmatpush1.msra.mxu0 0.0
      %1886 = vmatprep.subr.mxu0 0.0
      %1887 = vmatpush1.msra.mxu0 0.0
      %1888 = vmatprep.subr.mxu0 0.0
      %1889 = vmatpush1.msra.mxu0 0.0
      %1890 = vmatprep.subr.mxu0 0.0
      %1891 = vmatpush1.msra.mxu0 0.0
      %1892 = vmatprep.subr.mxu0 0.0
      %1893 = vmatpush1.msra.mxu0 0.0
      %1894 = vmatprep.subr.mxu0 0.0
      %1895 = vmatpush1.msra.mxu0 0.0
      %1896 = vmatprep.subr.mxu0 0.0
      %1897 = vmatpush1.msra.mxu0 0.0
      %1898 = vmatprep.subr.mxu0 0.0
      %1899 = vmatpush1.msra.mxu0 0.0
      %1900 = vmatprep.subr.mxu0 0.0
      %1901 = vmatpush1.msra.mxu0 0.0
      %1902 = vmatprep.subr.mxu0 0.0
      %1903 = vmatpush1.msra.mxu0 0.0
      %1904 = vmatprep.subr.mxu0 0.0
      %1905 = vmatpush1.msra.mxu0 0.0
      %1906 = vmatprep.subr.mxu0 0.0
      %1907 = vmatpush1.msra.mxu0 0.0
      %1908 = vmatprep.subr.mxu0 0.0
      %1909 = vmatpush1.msra.mxu0 0.0
      %1910 = vmatprep.subr.mxu0 0.0
      %1911 = vmatpush1.msra.mxu0 0.0
      %1912 = vmatprep.subr.mxu0 0.0
      %1913 = vmatpush1.msra.mxu0 0.0
      %1914 = vmatprep.subr.mxu0 0.0
      %1915 = vmatpush1.msra.mxu0 0.0
      %1916 = vmatprep.subr.mxu0 0.0
      %1917 = vmatpush1.msra.mxu0 0.0
      %1918 = vmatprep.subr.mxu0 0.0
      %1919 = vmatpush1.msra.mxu0 0.0
      %1920 = vmatprep.subr.mxu0 0.0
      %1921 = vmatpush1.msra.mxu0 0.0
      %1922 = vmatprep.subr.mxu0 0.0
      %1923 = vmatpush1.msra.mxu0 0.0
      %1924 = vmatprep.subr.mxu0 0.0
      %1925 = vmatpush1.msra.mxu0 0.0
      %1926 = vmatprep.subr.mxu0 0.0
      %1927 = vmatpush1.msra.mxu0 0.0
      %1928 = vmatprep.subr.mxu0 0.0
      %1929 = vmatpush1.msra.mxu0 0.0
      %1930 = vmatprep.subr.mxu0 0.0
      %1931 = vmatpush1.msra.mxu0 0.0
      %1932 = vmatprep.subr.mxu0 0.0
      %1933 = vmatpush1.msra.mxu0 0.0
      %1934 = vmatprep.subr.mxu0 0.0
      %1935 = vmatpush1.msra.mxu0 0.0
      %1936 = vmatprep.subr.mxu0 0.0
      %1937 = vmatpush1.msra.mxu0 0.0
      %1938 = vmatprep.subr.mxu0 0.0
      %1939 = vmatpush1.msra.mxu0 0.0
      %1940 = vmatprep.mubr.f32.mxu0 0.0
      %1941 = vmatmul.mubr.f32.gmra.mrb[0].mxu0 %v1865
      %v1942 = vpop.f32.mrb[0].mxu0
      %v1943 = vadd.f32 0.0, %v1942
      %v1944 = vpop.f32.mrb[0].mxu0
      %1945 = vmatprep.mubr.f32.mxu0 0.0
      %1946 = vmatmul.mubr.f32.gmra.mrb[0].mxu0 %v1868
      %v1947 = vpop.f32.mrb[0].mxu0
      %v1948 = vadd.f32 0.0, %v1947
      %v1949 = vpop.f32.mrb[0].mxu0
      %1950 = vmatprep.mubr.f32.mxu0 0.0
      %1951 = vmatmul.mubr.f32.gmra.mrb[0].mxu0 %v1871
      %v1952 = vpop.f32.mrb[0].mxu0
      %v1953 = vadd.f32 0.0, %v1952
      %v1954 = vpop.f32.mrb[0].mxu0
      %1955 = vmatprep.mubr.f32.mxu0 0.0
      %1956 = vmatmul.mubr.f32.gmra.mrb[0].mxu0 %v1874
      %v1957 = vpop.f32.mrb[0].mxu0
      %v1958 = vadd.f32 0.0, %v1957
      %v1959 = vpop.f32.mrb[0].mxu0
      %1960 = vdwg.mxu0
      %v1962 = vsel %vm340, %v1743, 0
      %v1965 = vsel %vm340, %v1744, 0
      %v1968 = vsel %vm340, %v1745, 0
      %v1971 = vsel %vm340, %v1746, 0
      %1973 = vmatprep.subr.mxu0 0.0
      %1974 = vmatpush1.msra.mxu0 %v1743
      %1975 = vmatprep.subr.mxu0 0.0
      %1976 = vmatpush1.msra.mxu0 %v1744
      %1977 = vmatprep.subr.mxu0 0.0
      %1978 = vmatpush1.msra.mxu0 %v1745
      %1979 = vmatprep.subr.mxu0 0.0
      %1980 = vmatpush1.msra.mxu0 %v1746
      %1981 = vmatprep.subr.mxu0 0.0
      %1982 = vmatpush1.msra.mxu0 0.0
      %1983 = vmatprep.subr.mxu0 0.0
      %1984 = vmatpush1.msra.mxu0 0.0
      %1985 = vmatprep.subr.mxu0 0.0
      %1986 = vmatpush1.msra.mxu0 0.0
      %1987 = vmatprep.subr.mxu0 0.0
      %1988 = vmatpush1.msra.mxu0 0.0
      %1989 = vmatprep.subr.mxu0 0.0
      %1990 = vmatpush1.msra.mxu0 0.0
      %1991 = vmatprep.subr.mxu0 0.0
      %1992 = vmatpush1.msra.mxu0 0.0
      %1993 = vmatprep.subr.mxu0 0.0
      %1994 = vmatpush1.msra.mxu0 0.0
      %1995 = vmatprep.subr.mxu0 0.0
      %1996 = vmatpush1.msra.mxu0 0.0
      %1997 = vmatprep.subr.mxu0 0.0
      %1998 = vmatpush1.msra.mxu0 0.0
      %1999 = vmatprep.subr.mxu0 0.0
      %2000 = vmatpush1.msra.mxu0 0.0
      %2001 = vmatprep.subr.mxu0 0.0
      %2002 = vmatpush1.msra.mxu0 0.0
      %2003 = vmatprep.subr.mxu0 0.0
      %2004 = vmatpush1.msra.mxu0 0.0
      %2005 = vmatprep.subr.mxu0 0.0
      %2006 = vmatpush1.msra.mxu0 0.0
      %2007 = vmatprep.subr.mxu0 0.0
      %2008 = vmatpush1.msra.mxu0 0.0
      %2009 = vmatprep.subr.mxu0 0.0
      %2010 = vmatpush1.msra.mxu0 0.0
      %2011 = vmatprep.subr.mxu0 0.0
      %2012 = vmatpush1.msra.mxu0 0.0
      %2013 = vmatprep.subr.mxu0 0.0
      %2014 = vmatpush1.msra.mxu0 0.0
      %2015 = vmatprep.subr.mxu0 0.0
      %2016 = vmatpush1.msra.mxu0 0.0
      %2017 = vmatprep.subr.mxu0 0.0
      %2018 = vmatpush1.msra.mxu0 0.0
      %2019 = vmatprep.subr.mxu0 0.0
      %2020 = vmatpush1.msra.mxu0 0.0
      %2021 = vmatprep.subr.mxu0 0.0
      %2022 = vmatpush1.msra.mxu0 0.0
      %2023 = vmatprep.subr.mxu0 0.0
      %2024 = vmatpush1.msra.mxu0 0.0
      %2025 = vmatprep.subr.mxu0 0.0
      %2026 = vmatpush1.msra.mxu0 0.0
      %2027 = vmatprep.subr.mxu0 0.0
      %2028 = vmatpush1.msra.mxu0 0.0
      %2029 = vmatprep.subr.mxu0 0.0
      %2030 = vmatpush1.msra.mxu0 0.0
      %2031 = vmatprep.subr.mxu0 0.0
      %2032 = vmatpush1.msra.mxu0 0.0
      %2033 = vmatprep.subr.mxu0 0.0
      %2034 = vmatpush1.msra.mxu0 0.0
      %2035 = vmatprep.subr.mxu0 0.0
      %2036 = vmatpush1.msra.mxu0 0.0
      %2037 = vmatprep.mubr.f32.mxu0 0.0
      %2038 = vmatmul.mubr.f32.gmra.mrb[0].mxu0 %v1962
      %v2039 = vpop.f32.mrb[0].mxu0
      %v2040 = vadd.f32 0.0, %v2039
      %v2041 = vpop.f32.mrb[0].mxu0
      %2042 = vmatprep.mubr.f32.mxu0 0.0
      %2043 = vmatmul.mubr.f32.gmra.mrb[0].mxu0 %v1965
      %v2044 = vpop.f32.mrb[0].mxu0
      %v2045 = vadd.f32 0.0, %v2044
      %v2046 = vpop.f32.mrb[0].mxu0
      %2047 = vmatprep.mubr.f32.mxu0 0.0
      %2048 = vmatmul.mubr.f32.gmra.mrb[0].mxu0 %v1968
      %v2049 = vpop.f32.mrb[0].mxu0
      %v2050 = vadd.f32 0.0, %v2049
      %v2051 = vpop.f32.mrb[0].mxu0
      %2052 = vmatprep.mubr.f32.mxu0 0.0
      %2053 = vmatmul.mubr.f32.gmra.mrb[0].mxu0 %v1971
      %v2054 = vpop.f32.mrb[0].mxu0
      %v2055 = vadd.f32 0.0, %v2054
      %v2056 = vpop.f32.mrb[0].mxu0
      %2057 = vdwg.mxu0
      %v2059 = vsel %vm340, %v1747, 0
      %v2062 = vsel %vm340, %v1748, 0
      %v2065 = vsel %vm340, %v1749, 0
      %v2068 = vsel %vm340, %v1750, 0
      %2070 = vmatprep.subr.mxu0 0.0
      %2071 = vmatpush1.msra.mxu0 %v1747
      %2072 = vmatprep.subr.mxu0 0.0
      %2073 = vmatpush1.msra.mxu0 %v1748
      %2074 = vmatprep.subr.mxu0 0.0
      %2075 = vmatpush1.msra.mxu0 %v1749
      %2076 = vmatprep.subr.mxu0 0.0
      %2077 = vmatpush1.msra.mxu0 %v1750
      %2078 = vmatprep.subr.mxu0 0.0
      %2079 = vmatpush1.msra.mxu0 0.0
      %2080 = vmatprep.subr.mxu0 0.0
      %2081 = vmatpush1.msra.mxu0 0.0
      %2082 = vmatprep.subr.mxu0 0.0
      %2083 = vmatpush1.msra.mxu0 0.0
      %2084 = vmatprep.subr.mxu0 0.0
      %2085 = vmatpush1.msra.mxu0 0.0
      %2086 = vmatprep.subr.mxu0 0.0
      %2087 = vmatpush1.msra.mxu0 0.0
      %2088 = vmatprep.subr.mxu0 0.0
      %2089 = vmatpush1.msra.mxu0 0.0
      %2090 = vmatprep.subr.mxu0 0.0
      %2091 = vmatpush1.msra.mxu0 0.0
      %2092 = vmatprep.subr.mxu0 0.0
      %2093 = vmatpush1.msra.mxu0 0.0
      %2094 = vmatprep.subr.mxu0 0.0
      %2095 = vmatpush1.msra.mxu0 0.0
      %2096 = vmatprep.subr.mxu0 0.0
      %2097 = vmatpush1.msra.mxu0 0.0
      %2098 = vmatprep.subr.mxu0 0.0
      %2099 = vmatpush1.msra.mxu0 0.0
      %2100 = vmatprep.subr.mxu0 0.0
      %2101 = vmatpush1.msra.mxu0 0.0
      %2102 = vmatprep.subr.mxu0 0.0
      %2103 = vmatpush1.msra.mxu0 0.0
      %2104 = vmatprep.subr.mxu0 0.0
      %2105 = vmatpush1.msra.mxu0 0.0
      %2106 = vmatprep.subr.mxu0 0.0
      %2107 = vmatpush1.msra.mxu0 0.0
      %2108 = vmatprep.subr.mxu0 0.0
      %2109 = vmatpush1.msra.mxu0 0.0
      %2110 = vmatprep.subr.mxu0 0.0
      %2111 = vmatpush1.msra.mxu0 0.0
      %2112 = vmatprep.subr.mxu0 0.0
      %2113 = vmatpush1.msra.mxu0 0.0
      %2114 = vmatprep.subr.mxu0 0.0
      %2115 = vmatpush1.msra.mxu0 0.0
      %2116 = vmatprep.subr.mxu0 0.0
      %2117 = vmatpush1.msra.mxu0 0.0
      %2118 = vmatprep.subr.mxu0 0.0
      %2119 = vmatpush1.msra.mxu0 0.0
      %2120 = vmatprep.subr.mxu0 0.0
      %2121 = vmatpush1.msra.mxu0 0.0
      %2122 = vmatprep.subr.mxu0 0.0
      %2123 = vmatpush1.msra.mxu0 0.0
      %2124 = vmatprep.subr.mxu0 0.0
      %2125 = vmatpush1.msra.mxu0 0.0
      %2126 = vmatprep.subr.mxu0 0.0
      %2127 = vmatpush1.msra.mxu0 0.0
      %2128 = vmatprep.subr.mxu0 0.0
      %2129 = vmatpush1.msra.mxu0 0.0
      %2130 = vmatprep.subr.mxu0 0.0
      %2131 = vmatpush1.msra.mxu0 0.0
      %2132 = vmatprep.subr.mxu0 0.0
      %2133 = vmatpush1.msra.mxu0 0.0
      %2134 = vmatprep.mubr.f32.mxu0 0.0
      %2135 = vmatmul.mubr.f32.gmra.mrb[0].mxu0 %v2059
      %v2136 = vpop.f32.mrb[0].mxu0
      %v2137 = vadd.f32 0.0, %v2136
      %v2138 = vpop.f32.mrb[0].mxu0
      %2139 = vmatprep.mubr.f32.mxu0 0.0
      %2140 = vmatmul.mubr.f32.gmra.mrb[0].mxu0 %v2062
      %v2141 = vpop.f32.mrb[0].mxu0
      %v2142 = vadd.f32 0.0, %v2141
      %v2143 = vpop.f32.mrb[0].mxu0
      %2144 = vmatprep.mubr.f32.mxu0 0.0
      %2145 = vmatmul.mubr.f32.gmra.mrb[0].mxu0 %v2065
      %v2146 = vpop.f32.mrb[0].mxu0
      %v2147 = vadd.f32 0.0, %v2146
      %v2148 = vpop.f32.mrb[0].mxu0
      %2149 = vmatprep.mubr.f32.mxu0 0.0
      %2150 = vmatmul.mubr.f32.gmra.mrb[0].mxu0 %v2068
      %v2151 = vpop.f32.mrb[0].mxu0
      %v2152 = vadd.f32 0.0, %v2151
      %v2153 = vpop.f32.mrb[0].mxu0
      %2154 = vdwg.mxu0
      %v2155 = vmul.f32 %v1846, -0.5
      %v2156 = vmul.f32 %v1851, -0.5
      %v2157 = vmul.f32 %v1856, -0.5
      %v2158 = vmul.f32 %v1861, -0.5
      %v2159 = vmul.f32 %v1943, -0.5
      %v2160 = vmul.f32 %v1948, -0.5
      %v2161 = vmul.f32 %v1953, -0.5
      %v2162 = vmul.f32 %v1958, -0.5
      %v2163 = vmul.f32 %v2040, -0.5
      %v2164 = vmul.f32 %v2045, -0.5
      %v2165 = vmul.f32 %v2050, -0.5
      %v2166 = vmul.f32 %v2055, -0.5
      %v2167 = vmul.f32 %v2137, -0.5
      %v2168 = vmul.f32 %v2142, -0.5
      %v2169 = vmul.f32 %v2147, -0.5
      %v2170 = vmul.f32 %v2152, -0.5
      %v2171 = vadd.f32 %v1751, %v2155
      %v2172 = vadd.f32 %v1752, %v2156
      %v2173 = vadd.f32 %v1753, %v2157
      %v2174 = vadd.f32 %v1754, %v2158
      %v2175 = vadd.f32 %v1755, %v2159
      %v2176 = vadd.f32 %v1756, %v2160
      %v2177 = vadd.f32 %v1757, %v2161
      %v2178 = vadd.f32 %v1758, %v2162
      %v2179 = vadd.f32 %v1759, %v2163
      %v2180 = vadd.f32 %v1760, %v2164
      %v2181 = vadd.f32 %v1761, %v2165
      %v2182 = vadd.f32 %v1762, %v2166
      %v2183 = vadd.f32 %v1763, %v2167
      %v2184 = vadd.f32 %v1764, %v2168
      %v2185 = vadd.f32 %v1765, %v2169
      %v2186 = vadd.f32 %v1766, %v2170
      %v2188 = vsel %vm340, %v1846, 0
      %v2191 = vsel %vm340, %v1851, 0
      %v2194 = vsel %vm340, %v1856, 0
      %v2197 = vsel %vm340, %v1861, 0
      %2199 = vmatprep.subr.mxu0 0.0
      %2200 = vmatpush1.msra.mxu0 %v1735
      %2201 = vmatprep.subr.mxu0 0.0
      %2202 = vmatpush1.msra.mxu0 %v1736
      %2203 = vmatprep.subr.mxu0 0.0
      %2204 = vmatpush1.msra.mxu0 %v1737
      %2205 = vmatprep.subr.mxu0 0.0
      %2206 = vmatpush1.msra.mxu0 %v1738
      %2207 = vmatprep.subr.mxu0 0.0
      %2208 = vmatpush1.msra.mxu0 0.0
      %2209 = vmatprep.subr.mxu0 0.0
      %2210 = vmatpush1.msra.mxu0 0.0
      %2211 = vmatprep.subr.mxu0 0.0
      %2212 = vmatpush1.msra.mxu0 0.0
      %2213 = vmatprep.subr.mxu0 0.0
      %2214 = vmatpush1.msra.mxu0 0.0
      %2215 = vmatprep.subr.mxu0 0.0
      %2216 = vmatpush1.msra.mxu0 0.0
      %2217 = vmatprep.subr.mxu0 0.0
      %2218 = vmatpush1.msra.mxu0 0.0
      %2219 = vmatprep.subr.mxu0 0.0
      %2220 = vmatpush1.msra.mxu0 0.0
      %2221 = vmatprep.subr.mxu0 0.0
      %2222 = vmatpush1.msra.mxu0 0.0
      %2223 = vmatprep.subr.mxu0 0.0
      %2224 = vmatpush1.msra.mxu0 0.0
      %2225 = vmatprep.subr.mxu0 0.0
      %2226 = vmatpush1.msra.mxu0 0.0
      %2227 = vmatprep.subr.mxu0 0.0
      %2228 = vmatpush1.msra.mxu0 0.0
      %2229 = vmatprep.subr.mxu0 0.0
      %2230 = vmatpush1.msra.mxu0 0.0
      %2231 = vmatprep.subr.mxu0 0.0
      %2232 = vmatpush1.msra.mxu0 0.0
      %2233 = vmatprep.subr.mxu0 0.0
      %2234 = vmatpush1.msra.mxu0 0.0
      %2235 = vmatprep.subr.mxu0 0.0
      %2236 = vmatpush1.msra.mxu0 0.0
      %2237 = vmatprep.subr.mxu0 0.0
      %2238 = vmatpush1.msra.mxu0 0.0
      %2239 = vmatprep.subr.mxu0 0.0
      %2240 = vmatpush1.msra.mxu0 0.0
      %2241 = vmatprep.subr.mxu0 0.0
      %2242 = vmatpush1.msra.mxu0 0.0
      %2243 = vmatprep.subr.mxu0 0.0
      %2244 = vmatpush1.msra.mxu0 0.0
      %2245 = vmatprep.subr.mxu0 0.0
      %2246 = vmatpush1.msra.mxu0 0.0
      %2247 = vmatprep.subr.mxu0 0.0
      %2248 = vmatpush1.msra.mxu0 0.0
      %2249 = vmatprep.subr.mxu0 0.0
      %2250 = vmatpush1.msra.mxu0 0.0
      %2251 = vmatprep.subr.mxu0 0.0
      %2252 = vmatpush1.msra.mxu0 0.0
      %2253 = vmatprep.subr.mxu0 0.0
      %2254 = vmatpush1.msra.mxu0 0.0
      %2255 = vmatprep.subr.mxu0 0.0
      %2256 = vmatpush1.msra.mxu0 0.0
      %2257 = vmatprep.subr.mxu0 0.0
      %2258 = vmatpush1.msra.mxu0 0.0
      %2259 = vmatprep.subr.mxu0 0.0
      %2260 = vmatpush1.msra.mxu0 0.0
      %2261 = vmatprep.subr.mxu0 0.0
      %2262 = vmatpush1.msra.mxu0 0.0
      %2263 = vmatprep.mubr.f32.mxu0 0.0
      %2264 = vmatmul.mubr.f32.gmra.mrb[0].mxu0 %v2188
      %v2265 = vpop.f32.mrb[0].mxu0
      %v2266 = vadd.f32 0.0, %v2265
      %v2267 = vpop.f32.mrb[0].mxu0
      %2268 = vmatprep.mubr.f32.mxu0 0.0
      %2269 = vmatmul.mubr.f32.gmra.mrb[0].mxu0 %v2191
      %v2270 = vpop.f32.mrb[0].mxu0
      %v2271 = vadd.f32 0.0, %v2270
      %v2272 = vpop.f32.mrb[0].mxu0
      %2273 = vmatprep.mubr.f32.mxu0 0.0
      %2274 = vmatmul.mubr.f32.gmra.mrb[0].mxu0 %v2194
      %v2275 = vpop.f32.mrb[0].mxu0
      %v2276 = vadd.f32 0.0, %v2275
      %v2277 = vpop.f32.mrb[0].mxu0
      %2278 = vmatprep.mubr.f32.mxu0 0.0
      %2279 = vmatmul.mubr.f32.gmra.mrb[0].mxu0 %v2197
      %v2280 = vpop.f32.mrb[0].mxu0
      %v2281 = vadd.f32 0.0, %v2280
      %v2282 = vpop.f32.mrb[0].mxu0
      %2283 = vdwg.mxu0
      %v2285 = vsel %vm340, %v1943, 0
      %v2288 = vsel %vm340, %v1948, 0
      %v2291 = vsel %vm340, %v1953, 0
      %v2294 = vsel %vm340, %v1958, 0
      %2296 = vmatprep.subr.mxu0 0.0
      %2297 = vmatpush1.msra.mxu0 %v1739
      %2298 = vmatprep.subr.mxu0 0.0
      %2299 = vmatpush1.msra.mxu0 %v1740
      %2300 = vmatprep.subr.mxu0 0.0
      %2301 = vmatpush1.msra.mxu0 %v1741
      %2302 = vmatprep.subr.mxu0 0.0
      %2303 = vmatpush1.msra.mxu0 %v1742
      %2304 = vmatprep.subr.mxu0 0.0
      %2305 = vmatpush1.msra.mxu0 0.0
      %2306 = vmatprep.subr.mxu0 0.0
      %2307 = vmatpush1.msra.mxu0 0.0
      %2308 = vmatprep.subr.mxu0 0.0
      %2309 = vmatpush1.msra.mxu0 0.0
      %2310 = vmatprep.subr.mxu0 0.0
      %2311 = vmatpush1.msra.mxu0 0.0
      %2312 = vmatprep.subr.mxu0 0.0
      %2313 = vmatpush1.msra.mxu0 0.0
      %2314 = vmatprep.subr.mxu0 0.0
      %2315 = vmatpush1.msra.mxu0 0.0
      %2316 = vmatprep.subr.mxu0 0.0
      %2317 = vmatpush1.msra.mxu0 0.0
      %2318 = vmatprep.subr.mxu0 0.0
      %2319 = vmatpush1.msra.mxu0 0.0
      %2320 = vmatprep.subr.mxu0 0.0
      %2321 = vmatpush1.msra.mxu0 0.0
      %2322 = vmatprep.subr.mxu0 0.0
      %2323 = vmatpush1.msra.mxu0 0.0
      %2324 = vmatprep.subr.mxu0 0.0
      %2325 = vmatpush1.msra.mxu0 0.0
      %2326 = vmatprep.subr.mxu0 0.0
      %2327 = vmatpush1.msra.mxu0 0.0
      %2328 = vmatprep.subr.mxu0 0.0
      %2329 = vmatpush1.msra.mxu0 0.0
      %2330 = vmatprep.subr.mxu0 0.0
      %2331 = vmatpush1.msra.mxu0 0.0
      %2332 = vmatprep.subr.mxu0 0.0
      %2333 = vmatpush1.msra.mxu0 0.0
      %2334 = vmatprep.subr.mxu0 0.0
      %2335 = vmatpush1.msra.mxu0 0.0
      %2336 = vmatprep.subr.mxu0 0.0
      %2337 = vmatpush1.msra.mxu0 0.0
      %2338 = vmatprep.subr.mxu0 0.0
      %2339 = vmatpush1.msra.mxu0 0.0
      %2340 = vmatprep.subr.mxu0 0.0
      %2341 = vmatpush1.msra.mxu0 0.0
      %2342 = vmatprep.subr.mxu0 0.0
      %2343 = vmatpush1.msra.mxu0 0.0
      %2344 = vmatprep.subr.mxu0 0.0
      %2345 = vmatpush1.msra.mxu0 0.0
      %2346 = vmatprep.subr.mxu0 0.0
      %2347 = vmatpush1.msra.mxu0 0.0
      %2348 = vmatprep.subr.mxu0 0.0
      %2349 = vmatpush1.msra.mxu0 0.0
      %2350 = vmatprep.subr.mxu0 0.0
      %2351 = vmatpush1.msra.mxu0 0.0
      %2352 = vmatprep.subr.mxu0 0.0
      %2353 = vmatpush1.msra.mxu0 0.0
      %2354 = vmatprep.subr.mxu0 0.0
      %2355 = vmatpush1.msra.mxu0 0.0
      %2356 = vmatprep.subr.mxu0 0.0
      %2357 = vmatpush1.msra.mxu0 0.0
      %2358 = vmatprep.subr.mxu0 0.0
      %2359 = vmatpush1.msra.mxu0 0.0
      %2360 = vmatprep.mubr.f32.mxu0 0.0
      %2361 = vmatmul.mubr.f32.gmra.mrb[0].mxu0 %v2285
      %v2362 = vpop.f32.mrb[0].mxu0
      %v2363 = vadd.f32 0.0, %v2362
      %v2364 = vpop.f32.mrb[0].mxu0
      %2365 = vmatprep.mubr.f32.mxu0 0.0
      %2366 = vmatmul.mubr.f32.gmra.mrb[0].mxu0 %v2288
      %v2367 = vpop.f32.mrb[0].mxu0
      %v2368 = vadd.f32 0.0, %v2367
      %v2369 = vpop.f32.mrb[0].mxu0
      %2370 = vmatprep.mubr.f32.mxu0 0.0
      %2371 = vmatmul.mubr.f32.gmra.mrb[0].mxu0 %v2291
      %v2372 = vpop.f32.mrb[0].mxu0
      %v2373 = vadd.f32 0.0, %v2372
      %v2374 = vpop.f32.mrb[0].mxu0
      %2375 = vmatprep.mubr.f32.mxu0 0.0
      %2376 = vmatmul.mubr.f32.gmra.mrb[0].mxu0 %v2294
      %v2377 = vpop.f32.mrb[0].mxu0
      %v2378 = vadd.f32 0.0, %v2377
      %v2379 = vpop.f32.mrb[0].mxu0
      %2380 = vdwg.mxu0
      %v2382 = vsel %vm340, %v2040, 0
      %v2385 = vsel %vm340, %v2045, 0
      %v2388 = vsel %vm340, %v2050, 0
      %v2391 = vsel %vm340, %v2055, 0
      %2393 = vmatprep.subr.mxu0 0.0
      %2394 = vmatpush1.msra.mxu0 %v1743
      %2395 = vmatprep.subr.mxu0 0.0
      %2396 = vmatpush1.msra.mxu0 %v1744
      %2397 = vmatprep.subr.mxu0 0.0
      %2398 = vmatpush1.msra.mxu0 %v1745
      %2399 = vmatprep.subr.mxu0 0.0
      %2400 = vmatpush1.msra.mxu0 %v1746
      %2401 = vmatprep.subr.mxu0 0.0
      %2402 = vmatpush1.msra.mxu0 0.0
      %2403 = vmatprep.subr.mxu0 0.0
      %2404 = vmatpush1.msra.mxu0 0.0
      %2405 = vmatprep.subr.mxu0 0.0
      %2406 = vmatpush1.msra.mxu0 0.0
      %2407 = vmatprep.subr.mxu0 0.0
      %2408 = vmatpush1.msra.mxu0 0.0
      %2409 = vmatprep.subr.mxu0 0.0
      %2410 = vmatpush1.msra.mxu0 0.0
      %2411 = vmatprep.subr.mxu0 0.0
      %2412 = vmatpush1.msra.mxu0 0.0
      %2413 = vmatprep.subr.mxu0 0.0
      %2414 = vmatpush1.msra.mxu0 0.0
      %2415 = vmatprep.subr.mxu0 0.0
      %2416 = vmatpush1.msra.mxu0 0.0
      %2417 = vmatprep.subr.mxu0 0.0
      %2418 = vmatpush1.msra.mxu0 0.0
      %2419 = vmatprep.subr.mxu0 0.0
      %2420 = vmatpush1.msra.mxu0 0.0
      %2421 = vmatprep.subr.mxu0 0.0
      %2422 = vmatpush1.msra.mxu0 0.0
      %2423 = vmatprep.subr.mxu0 0.0
      %2424 = vmatpush1.msra.mxu0 0.0
      %2425 = vmatprep.subr.mxu0 0.0
      %2426 = vmatpush1.msra.mxu0 0.0
      %2427 = vmatprep.subr.mxu0 0.0
      %2428 = vmatpush1.msra.mxu0 0.0
      %2429 = vmatprep.subr.mxu0 0.0
      %2430 = vmatpush1.msra.mxu0 0.0
      %2431 = vmatprep.subr.mxu0 0.0
      %2432 = vmatpush1.msra.mxu0 0.0
      %2433 = vmatprep.subr.mxu0 0.0
      %2434 = vmatpush1.msra.mxu0 0.0
      %2435 = vmatprep.subr.mxu0 0.0
      %2436 = vmatpush1.msra.mxu0 0.0
      %2437 = vmatprep.subr.mxu0 0.0
      %2438 = vmatpush1.msra.mxu0 0.0
      %2439 = vmatprep.subr.mxu0 0.0
      %2440 = vmatpush1.msra.mxu0 0.0
      %2441 = vmatprep.subr.mxu0 0.0
      %2442 = vmatpush1.msra.mxu0 0.0
      %2443 = vmatprep.subr.mxu0 0.0
      %2444 = vmatpush1.msra.mxu0 0.0
      %2445 = vmatprep.subr.mxu0 0.0
      %2446 = vmatpush1.msra.mxu0 0.0
      %2447 = vmatprep.subr.mxu0 0.0
      %2448 = vmatpush1.msra.mxu0 0.0
      %2449 = vmatprep.subr.mxu0 0.0
      %2450 = vmatpush1.msra.mxu0 0.0
      %2451 = vmatprep.subr.mxu0 0.0
      %2452 = vmatpush1.msra.mxu0 0.0
      %2453 = vmatprep.subr.mxu0 0.0
      %2454 = vmatpush1.msra.mxu0 0.0
      %2455 = vmatprep.subr.mxu0 0.0
      %2456 = vmatpush1.msra.mxu0 0.0
      %2457 = vmatprep.mubr.f32.mxu0 0.0
      %2458 = vmatmul.mubr.f32.gmra.mrb[0].mxu0 %v2382
      %v2459 = vpop.f32.mrb[0].mxu0
      %v2460 = vadd.f32 0.0, %v2459
      %v2461 = vpop.f32.mrb[0].mxu0
      %2462 = vmatprep.mubr.f32.mxu0 0.0
      %2463 = vmatmul.mubr.f32.gmra.mrb[0].mxu0 %v2385
      %v2464 = vpop.f32.mrb[0].mxu0
      %v2465 = vadd.f32 0.0, %v2464
      %v2466 = vpop.f32.mrb[0].mxu0
      %2467 = vmatprep.mubr.f32.mxu0 0.0
      %2468 = vmatmul.mubr.f32.gmra.mrb[0].mxu0 %v2388
      %v2469 = vpop.f32.mrb[0].mxu0
      %v2470 = vadd.f32 0.0, %v2469
      %v2471 = vpop.f32.mrb[0].mxu0
      %2472 = vmatprep.mubr.f32.mxu0 0.0
      %2473 = vmatmul.mubr.f32.gmra.mrb[0].mxu0 %v2391
      %v2474 = vpop.f32.mrb[0].mxu0
      %v2475 = vadd.f32 0.0, %v2474
      %v2476 = vpop.f32.mrb[0].mxu0
      %2477 = vdwg.mxu0
      %v2479 = vsel %vm340, %v2137, 0
      %v2482 = vsel %vm340, %v2142, 0
      %v2485 = vsel %vm340, %v2147, 0
      %v2488 = vsel %vm340, %v2152, 0
      %2490 = vmatprep.subr.mxu0 0.0
      %2491 = vmatpush1.msra.mxu0 %v1747
      %2492 = vmatprep.subr.mxu0 0.0
      %2493 = vmatpush1.msra.mxu0 %v1748
      %2494 = vmatprep.subr.mxu0 0.0
      %2495 = vmatpush1.msra.mxu0 %v1749
      %2496 = vmatprep.subr.mxu0 0.0
      %2497 = vmatpush1.msra.mxu0 %v1750
      %2498 = vmatprep.subr.mxu0 0.0
      %2499 = vmatpush1.msra.mxu0 0.0
      %2500 = vmatprep.subr.mxu0 0.0
      %2501 = vmatpush1.msra.mxu0 0.0
      %2502 = vmatprep.subr.mxu0 0.0
      %2503 = vmatpush1.msra.mxu0 0.0
      %2504 = vmatprep.subr.mxu0 0.0
      %2505 = vmatpush1.msra.mxu0 0.0
      %2506 = vmatprep.subr.mxu0 0.0
      %2507 = vmatpush1.msra.mxu0 0.0
      %2508 = vmatprep.subr.mxu0 0.0
      %2509 = vmatpush1.msra.mxu0 0.0
      %2510 = vmatprep.subr.mxu0 0.0
      %2511 = vmatpush1.msra.mxu0 0.0
      %2512 = vmatprep.subr.mxu0 0.0
      %2513 = vmatpush1.msra.mxu0 0.0
      %2514 = vmatprep.subr.mxu0 0.0
      %2515 = vmatpush1.msra.mxu0 0.0
      %2516 = vmatprep.subr.mxu0 0.0
      %2517 = vmatpush1.msra.mxu0 0.0
      %2518 = vmatprep.subr.mxu0 0.0
      %2519 = vmatpush1.msra.mxu0 0.0
      %2520 = vmatprep.subr.mxu0 0.0
      %2521 = vmatpush1.msra.mxu0 0.0
      %2522 = vmatprep.subr.mxu0 0.0
      %2523 = vmatpush1.msra.mxu0 0.0
      %2524 = vmatprep.subr.mxu0 0.0
      %2525 = vmatpush1.msra.mxu0 0.0
      %2526 = vmatprep.subr.mxu0 0.0
      %2527 = vmatpush1.msra.mxu0 0.0
      %2528 = vmatprep.subr.mxu0 0.0
      %2529 = vmatpush1.msra.mxu0 0.0
      %2530 = vmatprep.subr.mxu0 0.0
      %2531 = vmatpush1.msra.mxu0 0.0
      %2532 = vmatprep.subr.mxu0 0.0
      %2533 = vmatpush1.msra.mxu0 0.0
      %2534 = vmatprep.subr.mxu0 0.0
      %2535 = vmatpush1.msra.mxu0 0.0
      %2536 = vmatprep.subr.mxu0 0.0
      %2537 = vmatpush1.msra.mxu0 0.0
      %2538 = vmatprep.subr.mxu0 0.0
      %2539 = vmatpush1.msra.mxu0 0.0
      %2540 = vmatprep.subr.mxu0 0.0
      %2541 = vmatpush1.msra.mxu0 0.0
      %2542 = vmatprep.subr.mxu0 0.0
      %2543 = vmatpush1.msra.mxu0 0.0
      %2544 = vmatprep.subr.mxu0 0.0
      %2545 = vmatpush1.msra.mxu0 0.0
      %2546 = vmatprep.subr.mxu0 0.0
      %2547 = vmatpush1.msra.mxu0 0.0
      %2548 = vmatprep.subr.mxu0 0.0
      %2549 = vmatpush1.msra.mxu0 0.0
      %2550 = vmatprep.subr.mxu0 0.0
      %2551 = vmatpush1.msra.mxu0 0.0
      %2552 = vmatprep.subr.mxu0 0.0
      %2553 = vmatpush1.msra.mxu0 0.0
      %2554 = vmatprep.mubr.f32.mxu0 0.0
      %2555 = vmatmul.mubr.f32.gmra.mrb[0].mxu0 %v2479
      %v2556 = vpop.f32.mrb[0].mxu0
      %v2557 = vadd.f32 0.0, %v2556
      %v2558 = vpop.f32.mrb[0].mxu0
      %2559 = vmatprep.mubr.f32.mxu0 0.0
      %2560 = vmatmul.mubr.f32.gmra.mrb[0].mxu0 %v2482
      %v2561 = vpop.f32.mrb[0].mxu0
      %v2562 = vadd.f32 0.0, %v2561
      %v2563 = vpop.f32.mrb[0].mxu0
      %2564 = vmatprep.mubr.f32.mxu0 0.0
      %2565 = vmatmul.mubr.f32.gmra.mrb[0].mxu0 %v2485
      %v2566 = vpop.f32.mrb[0].mxu0
      %v2567 = vadd.f32 0.0, %v2566
      %v2568 = vpop.f32.mrb[0].mxu0
      %2569 = vmatprep.mubr.f32.mxu0 0.0
      %2570 = vmatmul.mubr.f32.gmra.mrb[0].mxu0 %v2488
      %v2571 = vpop.f32.mrb[0].mxu0
      %v2572 = vadd.f32 0.0, %v2571
      %v2573 = vpop.f32.mrb[0].mxu0
      %2574 = vdwg.mxu0
      %v2575 = vmul.f32 %v2266, 0.33333334
      %v2576 = vmul.f32 %v2271, 0.33333334
      %v2577 = vmul.f32 %v2276, 0.33333334
      %v2578 = vmul.f32 %v2281, 0.33333334
      %v2579 = vmul.f32 %v2363, 0.33333334
      %v2580 = vmul.f32 %v2368, 0.33333334
      %v2581 = vmul.f32 %v2373, 0.33333334
      %v2582 = vmul.f32 %v2378, 0.33333334
      %v2583 = vmul.f32 %v2460, 0.33333334
      %v2584 = vmul.f32 %v2465, 0.33333334
      %v2585 = vmul.f32 %v2470, 0.33333334
      %v2586 = vmul.f32 %v2475, 0.33333334
      %v2587 = vmul.f32 %v2557, 0.33333334
      %v2588 = vmul.f32 %v2562, 0.33333334
      %v2589 = vmul.f32 %v2567, 0.33333334
      %v2590 = vmul.f32 %v2572, 0.33333334
      %v2591 = vadd.f32 %v2171, %v2575
      %v2592 = vadd.f32 %v2172, %v2576
      %v2593 = vadd.f32 %v2173, %v2577
      %v2594 = vadd.f32 %v2174, %v2578
      %v2595 = vadd.f32 %v2175, %v2579
      %v2596 = vadd.f32 %v2176, %v2580
      %v2597 = vadd.f32 %v2177, %v2581
      %v2598 = vadd.f32 %v2178, %v2582
      %v2599 = vadd.f32 %v2179, %v2583
      %v2600 = vadd.f32 %v2180, %v2584
      %v2601 = vadd.f32 %v2181, %v2585
      %v2602 = vadd.f32 %v2182, %v2586
      %v2603 = vadd.f32 %v2183, %v2587
      %v2604 = vadd.f32 %v2184, %v2588
      %v2605 = vadd.f32 %v2185, %v2589
      %v2606 = vadd.f32 %v2186, %v2590
      %v2608 = vsel %vm340, %v2266, 0
      %v2611 = vsel %vm340, %v2271, 0
      %v2614 = vsel %vm340, %v2276, 0
      %v2617 = vsel %vm340, %v2281, 0
      %2619 = vmatprep.subr.mxu0 0.0
      %2620 = vmatpush1.msra.mxu0 %v1735
      %2621 = vmatprep.subr.mxu0 0.0
      %2622 = vmatpush1.msra.mxu0 %v1736
      %2623 = vmatprep.subr.mxu0 0.0
      %2624 = vmatpush1.msra.mxu0 %v1737
      %2625 = vmatprep.subr.mxu0 0.0
      %2626 = vmatpush1.msra.mxu0 %v1738
      %2627 = vmatprep.subr.mxu0 0.0
      %2628 = vmatpush1.msra.mxu0 0.0
      %2629 = vmatprep.subr.mxu0 0.0
      %2630 = vmatpush1.msra.mxu0 0.0
      %2631 = vmatprep.subr.mxu0 0.0
      %2632 = vmatpush1.msra.mxu0 0.0
      %2633 = vmatprep.subr.mxu0 0.0
      %2634 = vmatpush1.msra.mxu0 0.0
      %2635 = vmatprep.subr.mxu0 0.0
      %2636 = vmatpush1.msra.mxu0 0.0
      %2637 = vmatprep.subr.mxu0 0.0
      %2638 = vmatpush1.msra.mxu0 0.0
      %2639 = vmatprep.subr.mxu0 0.0
      %2640 = vmatpush1.msra.mxu0 0.0
      %2641 = vmatprep.subr.mxu0 0.0
      %2642 = vmatpush1.msra.mxu0 0.0
      %2643 = vmatprep.subr.mxu0 0.0
      %2644 = vmatpush1.msra.mxu0 0.0
      %2645 = vmatprep.subr.mxu0 0.0
      %2646 = vmatpush1.msra.mxu0 0.0
      %2647 = vmatprep.subr.mxu0 0.0
      %2648 = vmatpush1.msra.mxu0 0.0
      %2649 = vmatprep.subr.mxu0 0.0
      %2650 = vmatpush1.msra.mxu0 0.0
      %2651 = vmatprep.subr.mxu0 0.0
      %2652 = vmatpush1.msra.mxu0 0.0
      %2653 = vmatprep.subr.mxu0 0.0
      %2654 = vmatpush1.msra.mxu0 0.0
      %2655 = vmatprep.subr.mxu0 0.0
      %2656 = vmatpush1.msra.mxu0 0.0
      %2657 = vmatprep.subr.mxu0 0.0
      %2658 = vmatpush1.msra.mxu0 0.0
      %2659 = vmatprep.subr.mxu0 0.0
      %2660 = vmatpush1.msra.mxu0 0.0
      %2661 = vmatprep.subr.mxu0 0.0
      %2662 = vmatpush1.msra.mxu0 0.0
      %2663 = vmatprep.subr.mxu0 0.0
      %2664 = vmatpush1.msra.mxu0 0.0
      %2665 = vmatprep.subr.mxu0 0.0
      %2666 = vmatpush1.msra.mxu0 0.0
      %2667 = vmatprep.subr.mxu0 0.0
      %2668 = vmatpush1.msra.mxu0 0.0
      %2669 = vmatprep.subr.mxu0 0.0
      %2670 = vmatpush1.msra.mxu0 0.0
      %2671 = vmatprep.subr.mxu0 0.0
      %2672 = vmatpush1.msra.mxu0 0.0
      %2673 = vmatprep.subr.mxu0 0.0
      %2674 = vmatpush1.msra.mxu0 0.0
      %2675 = vmatprep.subr.mxu0 0.0
      %2676 = vmatpush1.msra.mxu0 0.0
      %2677 = vmatprep.subr.mxu0 0.0
      %2678 = vmatpush1.msra.mxu0 0.0
      %2679 = vmatprep.subr.mxu0 0.0
      %2680 = vmatpush1.msra.mxu0 0.0
      %2681 = vmatprep.subr.mxu0 0.0
      %2682 = vmatpush1.msra.mxu0 0.0
      %2683 = vmatprep.mubr.f32.mxu0 0.0
      %2684 = vmatmul.mubr.f32.gmra.mrb[0].mxu0 %v2608
      %v2685 = vpop.f32.mrb[0].mxu0
      %v2686 = vadd.f32 0.0, %v2685
      %v2687 = vpop.f32.mrb[0].mxu0
      %2688 = vmatprep.mubr.f32.mxu0 0.0
      %2689 = vmatmul.mubr.f32.gmra.mrb[0].mxu0 %v2611
      %v2690 = vpop.f32.mrb[0].mxu0
      %v2691 = vadd.f32 0.0, %v2690
      %v2692 = vpop.f32.mrb[0].mxu0
      %2693 = vmatprep.mubr.f32.mxu0 0.0
      %2694 = vmatmul.mubr.f32.gmra.mrb[0].mxu0 %v2614
      %v2695 = vpop.f32.mrb[0].mxu0
      %v2696 = vadd.f32 0.0, %v2695
      %v2697 = vpop.f32.mrb[0].mxu0
      %2698 = vmatprep.mubr.f32.mxu0 0.0
      %2699 = vmatmul.mubr.f32.gmra.mrb[0].mxu0 %v2617
      %v2700 = vpop.f32.mrb[0].mxu0
      %v2701 = vadd.f32 0.0, %v2700
      %v2702 = vpop.f32.mrb[0].mxu0
      %2703 = vdwg.mxu0
      %v2705 = vsel %vm340, %v2363, 0
      %v2708 = vsel %vm340, %v2368, 0
      %v2711 = vsel %vm340, %v2373, 0
      %v2714 = vsel %vm340, %v2378, 0
      %2716 = vmatprep.subr.mxu0 0.0
      %2717 = vmatpush1.msra.mxu0 %v1739
      %2718 = vmatprep.subr.mxu0 0.0
      %2719 = vmatpush1.msra.mxu0 %v1740
      %2720 = vmatprep.subr.mxu0 0.0
      %2721 = vmatpush1.msra.mxu0 %v1741
      %2722 = vmatprep.subr.mxu0 0.0
      %2723 = vmatpush1.msra.mxu0 %v1742
      %2724 = vmatprep.subr.mxu0 0.0
      %2725 = vmatpush1.msra.mxu0 0.0
      %2726 = vmatprep.subr.mxu0 0.0
      %2727 = vmatpush1.msra.mxu0 0.0
      %2728 = vmatprep.subr.mxu0 0.0
      %2729 = vmatpush1.msra.mxu0 0.0
      %2730 = vmatprep.subr.mxu0 0.0
      %2731 = vmatpush1.msra.mxu0 0.0
      %2732 = vmatprep.subr.mxu0 0.0
      %2733 = vmatpush1.msra.mxu0 0.0
      %2734 = vmatprep.subr.mxu0 0.0
      %2735 = vmatpush1.msra.mxu0 0.0
      %2736 = vmatprep.subr.mxu0 0.0
      %2737 = vmatpush1.msra.mxu0 0.0
      %2738 = vmatprep.subr.mxu0 0.0
      %2739 = vmatpush1.msra.mxu0 0.0
      %2740 = vmatprep.subr.mxu0 0.0
      %2741 = vmatpush1.msra.mxu0 0.0
      %2742 = vmatprep.subr.mxu0 0.0
      %2743 = vmatpush1.msra.mxu0 0.0
      %2744 = vmatprep.subr.mxu0 0.0
      %2745 = vmatpush1.msra.mxu0 0.0
      %2746 = vmatprep.subr.mxu0 0.0
      %2747 = vmatpush1.msra.mxu0 0.0
      %2748 = vmatprep.subr.mxu0 0.0
      %2749 = vmatpush1.msra.mxu0 0.0
      %2750 = vmatprep.subr.mxu0 0.0
      %2751 = vmatpush1.msra.mxu0 0.0
      %2752 = vmatprep.subr.mxu0 0.0
      %2753 = vmatpush1.msra.mxu0 0.0
      %2754 = vmatprep.subr.mxu0 0.0
      %2755 = vmatpush1.msra.mxu0 0.0
      %2756 = vmatprep.subr.mxu0 0.0
      %2757 = vmatpush1.msra.mxu0 0.0
      %2758 = vmatprep.subr.mxu0 0.0
      %2759 = vmatpush1.msra.mxu0 0.0
      %2760 = vmatprep.subr.mxu0 0.0
      %2761 = vmatpush1.msra.mxu0 0.0
      %2762 = vmatprep.subr.mxu0 0.0
      %2763 = vmatpush1.msra.mxu0 0.0
      %2764 = vmatprep.subr.mxu0 0.0
      %2765 = vmatpush1.msra.mxu0 0.0
      %2766 = vmatprep.subr.mxu0 0.0
      %2767 = vmatpush1.msra.mxu0 0.0
      %2768 = vmatprep.subr.mxu0 0.0
      %2769 = vmatpush1.msra.mxu0 0.0
      %2770 = vmatprep.subr.mxu0 0.0
      %2771 = vmatpush1.msra.mxu0 0.0
      %2772 = vmatprep.subr.mxu0 0.0
      %2773 = vmatpush1.msra.mxu0 0.0
      %2774 = vmatprep.subr.mxu0 0.0
      %2775 = vmatpush1.msra.mxu0 0.0
      %2776 = vmatprep.subr.mxu0 0.0
      %2777 = vmatpush1.msra.mxu0 0.0
      %2778 = vmatprep.subr.mxu0 0.0
      %2779 = vmatpush1.msra.mxu0 0.0
      %2780 = vmatprep.mubr.f32.mxu0 0.0
      %2781 = vmatmul.mubr.f32.gmra.mrb[0].mxu0 %v2705
      %v2782 = vpop.f32.mrb[0].mxu0
      %v2783 = vadd.f32 0.0, %v2782
      %v2784 = vpop.f32.mrb[0].mxu0
      %2785 = vmatprep.mubr.f32.mxu0 0.0
      %2786 = vmatmul.mubr.f32.gmra.mrb[0].mxu0 %v2708
      %v2787 = vpop.f32.mrb[0].mxu0
      %v2788 = vadd.f32 0.0, %v2787
      %v2789 = vpop.f32.mrb[0].mxu0
      %2790 = vmatprep.mubr.f32.mxu0 0.0
      %2791 = vmatmul.mubr.f32.gmra.mrb[0].mxu0 %v2711
      %v2792 = vpop.f32.mrb[0].mxu0
      %v2793 = vadd.f32 0.0, %v2792
      %v2794 = vpop.f32.mrb[0].mxu0
      %2795 = vmatprep.mubr.f32.mxu0 0.0
      %2796 = vmatmul.mubr.f32.gmra.mrb[0].mxu0 %v2714
      %v2797 = vpop.f32.mrb[0].mxu0
      %v2798 = vadd.f32 0.0, %v2797
      %v2799 = vpop.f32.mrb[0].mxu0
      %2800 = vdwg.mxu0
      %v2802 = vsel %vm340, %v2460, 0
      %v2805 = vsel %vm340, %v2465, 0
      %v2808 = vsel %vm340, %v2470, 0
      %v2811 = vsel %vm340, %v2475, 0
      %2813 = vmatprep.subr.mxu0 0.0
      %2814 = vmatpush1.msra.mxu0 %v1743
      %2815 = vmatprep.subr.mxu0 0.0
      %2816 = vmatpush1.msra.mxu0 %v1744
      %2817 = vmatprep.subr.mxu0 0.0
      %2818 = vmatpush1.msra.mxu0 %v1745
      %2819 = vmatprep.subr.mxu0 0.0
      %2820 = vmatpush1.msra.mxu0 %v1746
      %2821 = vmatprep.subr.mxu0 0.0
      %2822 = vmatpush1.msra.mxu0 0.0
      %2823 = vmatprep.subr.mxu0 0.0
      %2824 = vmatpush1.msra.mxu0 0.0
      %2825 = vmatprep.subr.mxu0 0.0
      %2826 = vmatpush1.msra.mxu0 0.0
      %2827 = vmatprep.subr.mxu0 0.0
      %2828 = vmatpush1.msra.mxu0 0.0
      %2829 = vmatprep.subr.mxu0 0.0
      %2830 = vmatpush1.msra.mxu0 0.0
      %2831 = vmatprep.subr.mxu0 0.0
      %2832 = vmatpush1.msra.mxu0 0.0
      %2833 = vmatprep.subr.mxu0 0.0
      %2834 = vmatpush1.msra.mxu0 0.0
      %2835 = vmatprep.subr.mxu0 0.0
      %2836 = vmatpush1.msra.mxu0 0.0
      %2837 = vmatprep.subr.mxu0 0.0
      %2838 = vmatpush1.msra.mxu0 0.0
      %2839 = vmatprep.subr.mxu0 0.0
      %2840 = vmatpush1.msra.mxu0 0.0
      %2841 = vmatprep.subr.mxu0 0.0
      %2842 = vmatpush1.msra.mxu0 0.0
      %2843 = vmatprep.subr.mxu0 0.0
      %2844 = vmatpush1.msra.mxu0 0.0
      %2845 = vmatprep.subr.mxu0 0.0
      %2846 = vmatpush1.msra.mxu0 0.0
      %2847 = vmatprep.subr.mxu0 0.0
      %2848 = vmatpush1.msra.mxu0 0.0
      %2849 = vmatprep.subr.mxu0 0.0
      %2850 = vmatpush1.msra.mxu0 0.0
      %2851 = vmatprep.subr.mxu0 0.0
      %2852 = vmatpush1.msra.mxu0 0.0
      %2853 = vmatprep.subr.mxu0 0.0
      %2854 = vmatpush1.msra.mxu0 0.0
      %2855 = vmatprep.subr.mxu0 0.0
      %2856 = vmatpush1.msra.mxu0 0.0
      %2857 = vmatprep.subr.mxu0 0.0
      %2858 = vmatpush1.msra.mxu0 0.0
      %2859 = vmatprep.subr.mxu0 0.0
      %2860 = vmatpush1.msra.mxu0 0.0
      %2861 = vmatprep.subr.mxu0 0.0
      %2862 = vmatpush1.msra.mxu0 0.0
      %2863 = vmatprep.subr.mxu0 0.0
      %2864 = vmatpush1.msra.mxu0 0.0
      %2865 = vmatprep.subr.mxu0 0.0
      %2866 = vmatpush1.msra.mxu0 0.0
      %2867 = vmatprep.subr.mxu0 0.0
      %2868 = vmatpush1.msra.mxu0 0.0
      %2869 = vmatprep.subr.mxu0 0.0
      %2870 = vmatpush1.msra.mxu0 0.0
      %2871 = vmatprep.subr.mxu0 0.0
      %2872 = vmatpush1.msra.mxu0 0.0
      %2873 = vmatprep.subr.mxu0 0.0
      %2874 = vmatpush1.msra.mxu0 0.0
      %2875 = vmatprep.subr.mxu0 0.0
      %2876 = vmatpush1.msra.mxu0 0.0
      %2877 = vmatprep.mubr.f32.mxu0 0.0
      %2878 = vmatmul.mubr.f32.gmra.mrb[0].mxu0 %v2802
      %v2879 = vpop.f32.mrb[0].mxu0
      %v2880 = vadd.f32 0.0, %v2879
      %v2881 = vpop.f32.mrb[0].mxu0
      %2882 = vmatprep.mubr.f32.mxu0 0.0
      %2883 = vmatmul.mubr.f32.gmra.mrb[0].mxu0 %v2805
      %v2884 = vpop.f32.mrb[0].mxu0
      %v2885 = vadd.f32 0.0, %v2884
      %v2886 = vpop.f32.mrb[0].mxu0
      %2887 = vmatprep.mubr.f32.mxu0 0.0
      %2888 = vmatmul.mubr.f32.gmra.mrb[0].mxu0 %v2808
      %v2889 = vpop.f32.mrb[0].mxu0
      %v2890 = vadd.f32 0.0, %v2889
      %v2891 = vpop.f32.mrb[0].mxu0
      %2892 = vmatprep.mubr.f32.mxu0 0.0
      %2893 = vmatmul.mubr.f32.gmra.mrb[0].mxu0 %v2811
      %v2894 = vpop.f32.mrb[0].mxu0
      %v2895 = vadd.f32 0.0, %v2894
      %v2896 = vpop.f32.mrb[0].mxu0
      %2897 = vdwg.mxu0
      %v2899 = vsel %vm340, %v2557, 0
      %v2902 = vsel %vm340, %v2562, 0
      %v2905 = vsel %vm340, %v2567, 0
      %v2908 = vsel %vm340, %v2572, 0
      %2910 = vmatprep.subr.mxu0 0.0
      %2911 = vmatpush1.msra.mxu0 %v1747
      %2912 = vmatprep.subr.mxu0 0.0
      %2913 = vmatpush1.msra.mxu0 %v1748
      %2914 = vmatprep.subr.mxu0 0.0
      %2915 = vmatpush1.msra.mxu0 %v1749
      %2916 = vmatprep.subr.mxu0 0.0
      %2917 = vmatpush1.msra.mxu0 %v1750
      %2918 = vmatprep.subr.mxu0 0.0
      %2919 = vmatpush1.msra.mxu0 0.0
      %2920 = vmatprep.subr.mxu0 0.0
      %2921 = vmatpush1.msra.mxu0 0.0
      %2922 = vmatprep.subr.mxu0 0.0
      %2923 = vmatpush1.msra.mxu0 0.0
      %2924 = vmatprep.subr.mxu0 0.0
      %2925 = vmatpush1.msra.mxu0 0.0
      %2926 = vmatprep.subr.mxu0 0.0
      %2927 = vmatpush1.msra.mxu0 0.0
      %2928 = vmatprep.subr.mxu0 0.0
      %2929 = vmatpush1.msra.mxu0 0.0
      %2930 = vmatprep.subr.mxu0 0.0
      %2931 = vmatpush1.msra.mxu0 0.0
      %2932 = vmatprep.subr.mxu0 0.0
      %2933 = vmatpush1.msra.mxu0 0.0
      %2934 = vmatprep.subr.mxu0 0.0
      %2935 = vmatpush1.msra.mxu0 0.0
      %2936 = vmatprep.subr.mxu0 0.0
      %2937 = vmatpush1.msra.mxu0 0.0
      %2938 = vmatprep.subr.mxu0 0.0
      %2939 = vmatpush1.msra.mxu0 0.0
      %2940 = vmatprep.subr.mxu0 0.0
      %2941 = vmatpush1.msra.mxu0 0.0
      %2942 = vmatprep.subr.mxu0 0.0
      %2943 = vmatpush1.msra.mxu0 0.0
      %2944 = vmatprep.subr.mxu0 0.0
      %2945 = vmatpush1.msra.mxu0 0.0
      %2946 = vmatprep.subr.mxu0 0.0
      %2947 = vmatpush1.msra.mxu0 0.0
      %2948 = vmatprep.subr.mxu0 0.0
      %2949 = vmatpush1.msra.mxu0 0.0
      %2950 = vmatprep.subr.mxu0 0.0
      %2951 = vmatpush1.msra.mxu0 0.0
      %2952 = vmatprep.subr.mxu0 0.0
      %2953 = vmatpush1.msra.mxu0 0.0
      %2954 = vmatprep.subr.mxu0 0.0
      %2955 = vmatpush1.msra.mxu0 0.0
      %2956 = vmatprep.subr.mxu0 0.0
      %2957 = vmatpush1.msra.mxu0 0.0
      %2958 = vmatprep.subr.mxu0 0.0
      %2959 = vmatpush1.msra.mxu0 0.0
      %2960 = vmatprep.subr.mxu0 0.0
      %2961 = vmatpush1.msra.mxu0 0.0
      %2962 = vmatprep.subr.mxu0 0.0
      %2963 = vmatpush1.msra.mxu0 0.0
      %2964 = vmatprep.subr.mxu0 0.0
      %2965 = vmatpush1.msra.mxu0 0.0
      %2966 = vmatprep.subr.mxu0 0.0
      %2967 = vmatpush1.msra.mxu0 0.0
      %2968 = vmatprep.subr.mxu0 0.0
      %2969 = vmatpush1.msra.mxu0 0.0
      %2970 = vmatprep.subr.mxu0 0.0
      %2971 = vmatpush1.msra.mxu0 0.0
      %2972 = vmatprep.subr.mxu0 0.0
      %2973 = vmatpush1.msra.mxu0 0.0
      %2974 = vmatprep.mubr.f32.mxu0 0.0
      %2975 = vmatmul.mubr.f32.gmra.mrb[0].mxu0 %v2899
      %v2976 = vpop.f32.mrb[0].mxu0
      %v2977 = vadd.f32 0.0, %v2976
      %v2978 = vpop.f32.mrb[0].mxu0
      %2979 = vmatprep.mubr.f32.mxu0 0.0
      %2980 = vmatmul.mubr.f32.gmra.mrb[0].mxu0 %v2902
      %v2981 = vpop.f32.mrb[0].mxu0
      %v2982 = vadd.f32 0.0, %v2981
      %v2983 = vpop.f32.mrb[0].mxu0
      %2984 = vmatprep.mubr.f32.mxu0 0.0
      %2985 = vmatmul.mubr.f32.gmra.mrb[0].mxu0 %v2905
      %v2986 = vpop.f32.mrb[0].mxu0
      %v2987 = vadd.f32 0.0, %v2986
      %v2988 = vpop.f32.mrb[0].mxu0
      %2989 = vmatprep.mubr.f32.mxu0 0.0
      %2990 = vmatmul.mubr.f32.gmra.mrb[0].mxu0 %v2908
      %v2991 = vpop.f32.mrb[0].mxu0
      %v2992 = vadd.f32 0.0, %v2991
      %v2993 = vpop.f32.mrb[0].mxu0
      %2994 = vdwg.mxu0
      %v2995 = vmul.f32 %v2686, -0.25
      %v2996 = vmul.f32 %v2691, -0.25
      %v2997 = vmul.f32 %v2696, -0.25
      %v2998 = vmul.f32 %v2701, -0.25
      %v2999 = vmul.f32 %v2783, -0.25
      %v3000 = vmul.f32 %v2788, -0.25
      %v3001 = vmul.f32 %v2793, -0.25
      %v3002 = vmul.f32 %v2798, -0.25
      %v3003 = vmul.f32 %v2880, -0.25
      %v3004 = vmul.f32 %v2885, -0.25
      %v3005 = vmul.f32 %v2890, -0.25
      %v3006 = vmul.f32 %v2895, -0.25
      %v3007 = vmul.f32 %v2977, -0.25
      %v3008 = vmul.f32 %v2982, -0.25
      %v3009 = vmul.f32 %v2987, -0.25
      %v3010 = vmul.f32 %v2992, -0.25
      %v3011 = vadd.f32 %v2591, %v2995
      %v3012 = vadd.f32 %v2592, %v2996
      %v3013 = vadd.f32 %v2593, %v2997
      %v3014 = vadd.f32 %v2594, %v2998
      %v3015 = vadd.f32 %v2595, %v2999
      %v3016 = vadd.f32 %v2596, %v3000
      %v3017 = vadd.f32 %v2597, %v3001
      %v3018 = vadd.f32 %v2598, %v3002
      %v3019 = vadd.f32 %v2599, %v3003
      %v3020 = vadd.f32 %v2600, %v3004
      %v3021 = vadd.f32 %v2601, %v3005
      %v3022 = vadd.f32 %v2602, %v3006
      %v3023 = vadd.f32 %v2603, %v3007
      %v3024 = vadd.f32 %v2604, %v3008
      %v3025 = vadd.f32 %v2605, %v3009
      %v3026 = vadd.f32 %v2606, %v3010
      %v3027 = vmul.f32 %v3011, %v932
      %v3028 = vmul.f32 %v3012, %v933
      %v3029 = vmul.f32 %v3013, %v934
      %v3030 = vmul.f32 %v3014, %v935
      %v3031 = vsel %vm340, %v3027, 0.0
      %v3032 = vsel %vm340, %v3028, 0.0
      %v3033 = vadd.f32 %v3031, %v3032
      %v3034 = vsel %vm340, %v3029, 0.0
      %v3035 = vadd.f32 %v3033, %v3034
      %v3036 = vsel %vm340, %v3030, 0.0
      %v3037 = vadd.f32 %v3035, %v3036
      %3038 = vadd.xlane.f32.xlu0 %v3037
      %v3039 = vpop.xlane.xlu0 %3038
      %v3040 = vrot.slane %v3039, 4
      %v3041 = vadd.f32 %v3039, %v3040
      %v3042 = vrot.slane %v3041, 2
      %v3043 = vadd.f32 %v3041, %v3042
      %v3044 = vrot.slane %v3043, 1
      %v3045 = vadd.f32 %v3043, %v3044
      %s3046 = vtos %v3045
      %v3047 = vmul.f32 %v3015, %v932
      %v3048 = vmul.f32 %v3016, %v933
      %v3049 = vmul.f32 %v3017, %v934
      %v3050 = vmul.f32 %v3018, %v935
      %v3051 = vsel %vm340, %v3047, 0.0
      %v3052 = vsel %vm340, %v3048, 0.0
      %v3053 = vadd.f32 %v3051, %v3052
      %v3054 = vsel %vm340, %v3049, 0.0
      %v3055 = vadd.f32 %v3053, %v3054
      %v3056 = vsel %vm340, %v3050, 0.0
      %v3057 = vadd.f32 %v3055, %v3056
      %3058 = vadd.xlane.f32.xlu0 %v3057
      %v3059 = vpop.xlane.xlu0 %3058
      %v3060 = vrot.slane %v3059, 4
      %v3061 = vadd.f32 %v3059, %v3060
      %v3062 = vrot.slane %v3061, 2
      %v3063 = vadd.f32 %v3061, %v3062
      %v3064 = vrot.slane %v3063, 1
      %v3065 = vadd.f32 %v3063, %v3064
      %s3066 = vtos %v3065
      %s3067 = sadd.f32 %s3046, %s3066
      %s3068 = smul.f32 %s3067, -1.0
      %v3069 = vmul.f32 %v1428, %v3019
      %v3070 = vmul.f32 %v1429, %v3020
      %v3071 = vmul.f32 %v1430, %v3021
      %v3072 = vmul.f32 %v1431, %v3022
      %v3073 = vsel %vm340, %v3069, 0.0
      %v3074 = vsel %vm340, %v3070, 0.0
      %v3075 = vadd.f32 %v3073, %v3074
      %v3076 = vsel %vm340, %v3071, 0.0
      %v3077 = vadd.f32 %v3075, %v3076
      %v3078 = vsel %vm340, %v3072, 0.0
      %v3079 = vadd.f32 %v3077, %v3078
      %3080 = vadd.xlane.f32.xlu0 %v3079
      %v3081 = vpop.xlane.xlu0 %3080
      %v3082 = vrot.slane %v3081, 4
      %v3083 = vadd.f32 %v3081, %v3082
      %v3084 = vrot.slane %v3083, 2
      %v3085 = vadd.f32 %v3083, %v3084
      %v3086 = vrot.slane %v3085, 1
      %v3087 = vadd.f32 %v3085, %v3086
      %s3088 = vtos %v3087
      %v3089 = vmul.f32 %v1626, %v3023
      %v3090 = vmul.f32 %v1627, %v3024
      %v3091 = vmul.f32 %v1628, %v3025
      %v3092 = vmul.f32 %v1629, %v3026
      %v3093 = vsel %vm340, %v3089, 0.0
      %v3094 = vsel %vm340, %v3090, 0.0
      %v3095 = vadd.f32 %v3093, %v3094
      %v3096 = vsel %vm340, %v3091, 0.0
      %v3097 = vadd.f32 %v3095, %v3096
      %v3098 = vsel %vm340, %v3092, 0.0
      %v3099 = vadd.f32 %v3097, %v3098
      %3100 = vadd.xlane.f32.xlu0 %v3099
      %v3101 = vpop.xlane.xlu0 %3100
      %v3102 = vrot.slane %v3101, 4
      %v3103 = vadd.f32 %v3101, %v3102
      %v3104 = vrot.slane %v3103, 2
      %v3105 = vadd.f32 %v3103, %v3104
      %v3106 = vrot.slane %v3105, 1
      %v3107 = vadd.f32 %v3105, %v3106
      %s3108 = vtos %v3107
      %s3109 = sadd.f32 %s3088, %s3108
      %s3110 = ssub.f32 0.0, %s3109
      %s3111 = sadd.f32 %s3068, %s3110
      %s3112 = smul.f32 %s3111, 0.5
      %s3113 = scalar_lea.smem [#allocation9], 0
      %3114 = sst [smem:[%s3113]] %s3112
    $region41: #{tpu_custom_call.1} parent=1 // pred_fallthru
      _
    // Predicated region
    $region42: #{tpu_custom_call.1} parent=1 // pred_check
      _
    $region43: #{tpu_custom_call.1} parent=1 // pred_check_branch
      %3116 = sbr.rel (0) target = $region45
    $region44: #{tpu_custom_call.1} parent=1 // pred_region
      %s3118 = ssub.s32 16, 16
      %3119 = vsyncadd [#allocation6], %s3118
      %3122 = dma.smem_to_hbm [#allocation9], 16, %s6, [#allocation6]
    $region45: #{tpu_custom_call.1} parent=1 // pred_fallthru
      _
    // Predicated region
    $region46: #{tpu_custom_call.1} parent=1 // pred_check
      _
    $region47: #{tpu_custom_call.1} parent=1 // pred_check_branch
      %3124 = sbr.rel (0) target = $region49
    $region48: #{tpu_custom_call.1} parent=1 // pred_region
      %3125 = dma.done [#allocation6], 16
    $region49: #{tpu_custom_call.1} parent=1 // pred_fallthru
      _
    %3126 = sfence
    %3127 = vsyncpa [#allocation5], 1
    %3128 = vsyncpa [#allocation8], 1
    %3129 = vsyncpa [#allocation6], 1

</llo_original>
